<compile_context>
chip_gen: v7x
topology: tpu7x:2x2x1
jax: 0.10.0
libtpu: 0.0.40
codegen_flags: <defaults>
</compile_context>

<pallas_src>
import jax
import jax.numpy as jnp
from jax.experimental import pallas as pl
from jax.experimental.pallas import tpu as pltpu


def _fc_kernel(x_ref, w_ref, b_ref, o_ref):
    """1x1 conv block: (C_out, C_in) @ (C_in, T_tile) + bias -> (C_out, T_tile)."""
    o_ref[...] = (
        jnp.dot(w_ref[...], x_ref[...], preferred_element_type=jnp.float32)
        + b_ref[...]
    ).astype(o_ref.dtype)


def conv1d_1x1_pallas(x_ncw, weight, bias, *, tt=256):
    """Conv1d(kernel_size=1) matching PyTorch semantics, native NCW layout.

    x_ncw:  (N, C_in, T)        -- PyTorch NCW layout (consumed as-is)
    weight: (C_out, C_in, 1)    -- PyTorch Conv1d weight
    bias:   (C_out,)
    returns (N, C_out, T)
    """
    N, C_in, T = x_ncw.shape
    C_out = weight.shape[0]

    # Weight / bias views for the kernel (tiny: 48 KiB / 8 B for 6144->2).
    w2d = weight[:, :, 0]            # (C_out, C_in)
    b2d = bias.reshape(C_out, 1)     # (C_out, 1) -- broadcast over lanes

    # Lane-dense T tiling; pad T only if it is not a multiple of the tile
    # (padding is a fallback for odd lengths, sliced off below).
    T_pad = ((T + tt - 1) // tt) * tt
    if T_pad != T:
        x_ncw = jnp.pad(x_ncw, ((0, 0), (0, 0), (0, T_pad - T)))

    grid = (N, T_pad // tt)

    out = pl.pallas_call(
        _fc_kernel,
        out_shape=jax.ShapeDtypeStruct((N, C_out, T_pad), x_ncw.dtype),
        grid=grid,
        in_specs=[
            # x block: one batch, full C_in, one T tile  -> kernel sees (C_in, tt)
            pl.BlockSpec((pl.Squeezed(), C_in, tt), lambda n, t: (n, 0, t)),
            # full weight, resident across the grid
            pl.BlockSpec((C_out, C_in), lambda n, t: (0, 0)),
            # bias (C_out, 1)
            pl.BlockSpec((C_out, 1), lambda n, t: (0, 0)),
        ],
        out_specs=pl.BlockSpec((pl.Squeezed(), C_out, tt), lambda n, t: (n, 0, t)),
        compiler_params=pltpu.CompilerParams(
            dimension_semantics=("parallel", "parallel"),
        ),
    )(x_ncw, w2d, b2d)

    if T_pad != T:
        out = out[:, :, :T]
    return out  # already NCW (N, C_out, T)


def last_liner_forward(encoder_features_ncw, fc_weight, fc_bias):
    """forward() of LastLiner, given the (untranslated) encoder's output.

    Dropout is identity in eval mode (and self.dropout is undefined in the
    original module anyway), so the compute is just the 1x1 conv.
    """
    return conv1d_1x1_pallas(encoder_features_ncw, fc_weight, fc_bias)


if __name__ == "__main__":
    key = jax.random.PRNGKey(0)
    k_x, k_w, k_b = jax.random.split(key, 3)

    # The replaced fc is Conv1d(6144 -> 2, k=1), so the encoder feature map
    # must have 6144 channels.  Small batch / time: N=2, T=512 (2 T-tiles).
    N, C_in, C_out, T = 2, 6144, 2, 512

    x = jax.random.normal(k_x, (N, C_in, T), dtype=jnp.float32)
    fc_weight = jax.random.normal(k_w, (C_out, C_in, 1), dtype=jnp.float32) * 0.01
    fc_bias = jax.random.normal(k_b, (C_out,), dtype=jnp.float32) * 0.01

    out = last_liner_forward(x, fc_weight, fc_bias)
    out = jax.block_until_ready(out)
    assert out.shape == (N, C_out, T), out.shape

    # Reference check (plain JAX) for the 1x1 conv semantics.
    ref = jnp.einsum("nct,oc->not", x, fc_weight[:, :, 0]) + fc_bias[None, :, None]
    assert jnp.allclose(out, ref, atol=1e-4, rtol=1e-4)

    print("KERNEL_OK")
</pallas_src>

<mosaic_0001>
module attributes {stable_mosaic.version = 11 : i64} {
  func.func @_fc_kernel(%arg0: i32, %arg1: i32, %arg2: memref<1x6144x256xf32, #tpu.memory_space<vmem>>, %arg3: memref<2x6144xf32, #tpu.memory_space<vmem>>, %arg4: memref<2x1xf32, #tpu.memory_space<vmem>>, %arg5: memref<1x2x256xf32, #tpu.memory_space<vmem>>) attributes {dimension_semantics = [#tpu.dimension_semantics<parallel>, #tpu.dimension_semantics<parallel>], iteration_bounds = array<i64: 2, 2>, scalar_prefetch = 0 : i64, scratch_operands = 0 : i64, tpu.core_type = #tpu.core_type<tc>, window_params = [{transform_indices = @transform_0, window_bounds = array<i64: 1, 6144, 256>}, {pipeline_mode = #tpu.pipeline_mode<synchronous>, transform_indices = @transform_1, window_bounds = array<i64: 2, 6144>}, {pipeline_mode = #tpu.pipeline_mode<synchronous>, transform_indices = @transform_2, window_bounds = array<i64: 2, 1>}, {transform_indices = @transform_3, window_bounds = array<i64: 1, 2, 256>}]} {
    %c0 = arith.constant 0 : index
    %c0_0 = arith.constant 0 : index
    %0 = vector.load %arg3[%c0, %c0_0] : memref<2x6144xf32, #tpu.memory_space<vmem>>, vector<2x6144xf32>
    %c0_1 = arith.constant 0 : index
    %c0_2 = arith.constant 0 : index
    %c0_3 = arith.constant 0 : index
    %1 = vector.load %arg2[%c0_1, %c0_2, %c0_3] : memref<1x6144x256xf32, #tpu.memory_space<vmem>>, vector<1x6144x256xf32>
    %2 = vector.shape_cast %1 : vector<1x6144x256xf32> to vector<6144x256xf32>
    %cst = arith.constant dense<0.000000e+00> : vector<2x256xf32>
    %3 = tpu.matmul %0, %2, %cst {dimension_numbers = #tpu.dot_dimension_numbers<[1], [0], [0], [1], [0, 0, 1, 1], [], []>} : vector<2x6144xf32>, vector<6144x256xf32>, vector<2x256xf32> -> vector<2x256xf32>
    %c0_4 = arith.constant 0 : index
    %c0_5 = arith.constant 0 : index
    %4 = vector.load %arg4[%c0_4, %c0_5] : memref<2x1xf32, #tpu.memory_space<vmem>>, vector<2x1xf32>
    %5 = vector.broadcast %4 : vector<2x1xf32> to vector<2x256xf32>
    %6 = arith.addf %3, %5 : vector<2x256xf32>
    %c0_6 = arith.constant 0 : index
    %c0_7 = arith.constant 0 : index
    %c0_8 = arith.constant 0 : index
    %7 = vector.load %arg5[%c0_6, %c0_7, %c0_8] : memref<1x2x256xf32, #tpu.memory_space<vmem>>, vector<1x2x256xf32>
    %8 = vector.shape_cast %7 : vector<1x2x256xf32> to vector<2x256xf32>
    %9 = vector.shape_cast %6 : vector<2x256xf32> to vector<1x2x256xf32>
    tpu.vector_store %arg5[%c0_6, %c0_7, %c0_8], %9 {strides = array<i32>} : memref<1x2x256xf32, #tpu.memory_space<vmem>>, vector<1x2x256xf32>,
    return
  }
  func.func @transform_0(%arg0: i32, %arg1: i32) -> (i32, i32, i32) {
    %c0_i32 = arith.constant 0 : i32
    %c0_i32_0 = arith.constant 0 : i32
    return %arg0, %c0_i32, %arg1 : i32, i32, i32
  }
  func.func @transform_1(%arg0: i32, %arg1: i32) -> (i32, i32) {
    %c0_i32 = arith.constant 0 : i32
    %c0_i32_0 = arith.constant 0 : i32
    %c0_i32_1 = arith.constant 0 : i32
    return %c0_i32, %c0_i32_0 : i32, i32
  }
  func.func @transform_2(%arg0: i32, %arg1: i32) -> (i32, i32) {
    %c0_i32 = arith.constant 0 : i32
    %c0_i32_0 = arith.constant 0 : i32
    %c0_i32_1 = arith.constant 0 : i32
    return %c0_i32, %c0_i32_0 : i32, i32
  }
  func.func @transform_3(%arg0: i32, %arg1: i32) -> (i32, i32, i32) {
    %c0_i32 = arith.constant 0 : i32
    %c0_i32_0 = arith.constant 0 : i32
    return %arg0, %c0_i32, %arg1 : i32, i32, i32
  }
}

</mosaic_0001>

<llo_original>
// kernel: tpu_custom_call.1
$region0: #{tpu_custom_call.1}
  #allocation0 [shape = 'u32[]', space=smem, size = 0x4, offset = 0x4, fixed_abs, tag = 'smem constant byte address 0x4 - core index']
  #allocation1 [shape = 'u32[144,128]{1,0:T(1,128)}', space=vmem, size = 0x12000, scoped, tag = 'internal scratch']
  %s0 = inlined_call_operand.hbm [shape: f32[2,6144,512], index: 0, kind: input, shape index: {}]
  %s1 = inlined_call_operand.hbm [shape: f32[2,6144], index: 1, kind: input, shape index: {}]
  %s2 = inlined_call_operand.vmem [shape: f32[2,1], index: 2, kind: input, shape index: {}]
  %s3 = inlined_call_operand.hbm [shape: f32[2,2,512], index: 3, kind: output, shape index: {}]
  %s4 = sld [smem:[#allocation0]]
  $region53: #{tpu_custom_call.1} parent=0
    _
  %s6 = ssub.s32 1, %s4
  %s7 = scalar_select 0, %s6, %s4
  $region1: #{tpu_custom_call.1} parent=0
    #allocation2 [shape = 'u8[12582912]{0}', space=vmem, size = 0xc00000, scoped, tag = 'input window, operand 0']
    #allocation3 [shape = 's32[2]{0}', space=sflag, size = 0x8, scoped, tag = 'scoped memory for tpu_custom_call.1']
    #allocation4 [shape = 's32[2]{0}', space=sflag, size = 0x8, scoped, tag = 'scoped memory for tpu_custom_call.1']
    #allocation5 [shape = 'u8[49152]{0}', space=vmem, size = 0xc000, scoped, tag = 'input window, operand 1, single buffered']
    #allocation6 [shape = 's32[1]{0}', space=sflag, size = 0x4, scoped, tag = 'scoped memory for tpu_custom_call.1']
    #allocation7 [shape = 'u8[4096]{0}', space=vmem, size = 0x1000, scoped, tag = 'output window, operand 0']
    %8 = vsyncpa [#allocation3], 0
    %s9 = scalar_lea.sflag [#allocation3], 1
    %10 = vsyncpa %s9, 0
    %11 = vsyncpa [#allocation6], 0
    %12 = vsyncpa [#allocation4], 0
    %s13 = scalar_lea.sflag [#allocation4], 1
    %14 = vsyncpa %s13, 0
    loop: start=0, step=1, limit=6
    $region2: #{tpu_custom_call.1} parent=1 // loop_pre_header
      _
    $region3: #{tpu_custom_call.1} parent=1 // loop_header
      %s16 = sphi 0, %s20
      %p17 = scmp.ge.s32.totalorder %s16, 6
      %s23 = sphi 0, %s35
      %s24 = sphi 0, %s31
      %s25 = sphi 0, %s23
      %s26 = sphi 0, %s24
      %s27 = sphi 0, %s25
      %s28 = sphi 0, %s26
      %s40 = sphi 0, %s42
      %s43 = sphi 0, %s40
      %s44 = sphi 0, %s43
      %s60 = sphi 0, %s44
      %s64 = sphi 0, %s64
      %s66 = sphi 0, %s64
      %s67 = sphi 0, %s66
      %s81 = sphi 0, %s67
      %s85 = sphi 0, %s85
      %s87 = sphi 0, %s85
      %s88 = sphi 0, %s87
      %s102 = sphi 0, %s88
      %s110 = sphi 0, %s112
      %s113 = sphi 0, %s110
      %s114 = sphi 0, %s113
      %s130 = sphi 0, %s114
    $region4: #{tpu_custom_call.1} parent=1 // loop_header_branch
      %19 = sbr.rel (%p17) target = $region8
    $region5: #{tpu_custom_call.1} parent=1 // loop_body
      %s21 = ssub.s32 %s16, 1
      %s22 = ssub.s32 %s16, 2
      %s29 = sadd.s32 1, %s24
      %p30 = scmp.ge.s32.totalorder %s29, 2
      %s31 = scalar_select %p30, 0, %s29
      %s32 = sadd.s32 1, %s23
      %s33 = scalar_select %p30, %s32, %s23
      %p34 = scmp.ge.s32.totalorder %s33, 2
      %s35 = scalar_select %p34, 0, %s33
      %s36 = ssub.s32 %s23, %s35
      %s37 = ssub.s32 %s24, %s31
      %s38 = sor.u32 %s36, %s37
      %p39 = scmp.eq.s32.totalorder %s38, 0
      %s41 = sadd.s32 %s40, 1
      %s42 = scalar_select %p39, %s40, %s41
      %p45 = pneg %p39
      %p46 = scmp.eq.s32.totalorder %s16, 3
      %p47 = por %p45, %p46
      %p48 = scmp.ne.s32.totalorder %s40, %s43
      %p49 = scmp.eq.s32.totalorder %s16, 0
      %p50 = por %p48, %p49
      %p51 = scmp.ne.s32.totalorder %s40, %s43
      %p52 = scmp.eq.s32.totalorder %s21, 3
      %p53 = por %p51, %p52
      %p54 = scmp.ne.s32.totalorder %s43, %s44
      %p55 = scmp.eq.s32.totalorder %s21, 0
      %p56 = por %p54, %p55
      %p57 = scmp.ne.s32.totalorder %s43, %s44
      %p58 = scmp.eq.s32.totalorder %s22, 3
      %p59 = por %p57, %p58
      %p61 = scmp.ne.s32.totalorder %s44, %s60
      %p62 = scmp.eq.s32.totalorder %s22, 0
      %p63 = por %p61, %p62
      %s65 = sadd.s32 %s64, 1
      %p68 = scmp.eq.s32.totalorder %s16, 3
      %p69 = scmp.ne.s32.totalorder %s64, %s66
      %p70 = scmp.eq.s32.totalorder %s16, 0
      %p71 = por %p69, %p70
      %p72 = scmp.ne.s32.totalorder %s64, %s66
      %p73 = scmp.eq.s32.totalorder %s21, 3
      %p74 = por %p72, %p73
      %p75 = scmp.ne.s32.totalorder %s66, %s67
      %p76 = scmp.eq.s32.totalorder %s21, 0
      %p77 = por %p75, %p76
      %p78 = scmp.ne.s32.totalorder %s66, %s67
      %p79 = scmp.eq.s32.totalorder %s22, 3
      %p80 = por %p78, %p79
      %p82 = scmp.ne.s32.totalorder %s67, %s81
      %p83 = scmp.eq.s32.totalorder %s22, 0
      %p84 = por %p82, %p83
      %s86 = sadd.s32 %s85, 1
      %p89 = scmp.eq.s32.totalorder %s16, 3
      %p90 = scmp.ne.s32.totalorder %s85, %s87
      %p91 = scmp.eq.s32.totalorder %s16, 0
      %p92 = por %p90, %p91
      %p93 = scmp.ne.s32.totalorder %s85, %s87
      %p94 = scmp.eq.s32.totalorder %s21, 3
      %p95 = por %p93, %p94
      %p96 = scmp.ne.s32.totalorder %s87, %s88
      %p97 = scmp.eq.s32.totalorder %s21, 0
      %p98 = por %p96, %p97
      %p99 = scmp.ne.s32.totalorder %s87, %s88
      %p100 = scmp.eq.s32.totalorder %s22, 3
      %p101 = por %p99, %p100
      %p103 = scmp.ne.s32.totalorder %s88, %s102
      %p104 = scmp.eq.s32.totalorder %s22, 0
      %p105 = por %p103, %p104
      %s106 = ssub.s32 %s23, %s35
      %s107 = ssub.s32 %s24, %s31
      %s108 = sor.u32 %s106, %s107
      %p109 = scmp.eq.s32.totalorder %s108, 0
      %s111 = sadd.s32 %s110, 1
      %s112 = scalar_select %p109, %s110, %s111
      %p115 = pneg %p109
      %p116 = scmp.eq.s32.totalorder %s16, 3
      %p117 = por %p115, %p116
      %p118 = scmp.ne.s32.totalorder %s110, %s113
      %p119 = scmp.eq.s32.totalorder %s16, 0
      %p120 = por %p118, %p119
      %p121 = scmp.ne.s32.totalorder %s110, %s113
      %p122 = scmp.eq.s32.totalorder %s21, 3
      %p123 = por %p121, %p122
      %p124 = scmp.ne.s32.totalorder %s113, %s114
      %p125 = scmp.eq.s32.totalorder %s21, 0
      %p126 = por %p124, %p125
      %p127 = scmp.ne.s32.totalorder %s113, %s114
      %p128 = scmp.eq.s32.totalorder %s22, 3
      %p129 = por %p127, %p128
      %p131 = scmp.ne.s32.totalorder %s114, %s130
      %p132 = scmp.eq.s32.totalorder %s22, 0
      %p133 = por %p131, %p132
      %p134 = scmp.le.s32.totalorder 1, %s16
      %p135 = scmp.lt.s32.totalorder %s16, 5
      %p136 = pnand %p134, %p135
      %p137 = pneg %p136
      // Predicated region
      $region9: #{tpu_custom_call.1} parent=5 // pred_check
        _
      $region10: #{tpu_custom_call.1} parent=5 // pred_check_branch
        %139 = sbr.rel (%p136) target = $region12
      $region11: #{tpu_custom_call.1} parent=5 // pred_region
        %s140 = ssub.s32 %s16, 1
        // Predicated region
        $region13: #{tpu_custom_call.1} parent=11 // pred_check
          %p141 = pneg %p77
        $region14: #{tpu_custom_call.1} parent=11 // pred_check_branch
          %143 = sbr.rel (%p141) target = $region16
        $region15: #{tpu_custom_call.1} parent=11 // pred_region
          %s145 = ssub.s32 1536, 1536
          %146 = vsyncadd [#allocation6], %s145
          %s148 = sshll.u32 [#allocation5], 4
          %s149 = int_to_ptr.vmem [resolvable:$true] %s148
          %151 = dma.hbm_to_vmem [thread:$0]  %s1, 1536, %s149, [#allocation6]
        $region16: #{tpu_custom_call.1} parent=11 // pred_fallthru
          _
        // Predicated region
        $region17: #{tpu_custom_call.1} parent=11 // pred_check
          %p152 = pneg %p98
        $region18: #{tpu_custom_call.1} parent=11 // pred_check_branch
          %154 = sbr.rel (%p152) target = $region20
        $region19: #{tpu_custom_call.1} parent=11 // pred_region
          _
        $region20: #{tpu_custom_call.1} parent=11 // pred_fallthru
          _
      $region12: #{tpu_custom_call.1} parent=5 // pred_fallthru
        _
      %p155 = scmp.lt.s32.totalorder %s16, 4
      // Predicated region
      $region21: #{tpu_custom_call.1} parent=5 // pred_check
        %p156 = pneg %p155
      $region22: #{tpu_custom_call.1} parent=5 // pred_check_branch
        %158 = sbr.rel (%p156) target = $region24
      $region23: #{tpu_custom_call.1} parent=5 // pred_region
        // Predicated region
        $region25: #{tpu_custom_call.1} parent=23 // pred_check
          %p159 = pneg %p50
        $region26: #{tpu_custom_call.1} parent=23 // pred_check_branch
          %161 = sbr.rel (%p159) target = $region28
        $region27: #{tpu_custom_call.1} parent=23 // pred_region
          %s162 = sand.u32 %s40, 1
          %s163 = scalar_lea.sflag [#allocation3], %s162
          %s164 = sand.u32 %s40, 1
          %s165 = smul.addr %s164, 12288
          %s166 = scalar_lea.vmem [#allocation2], %s165
          %s167 = smul.u32 2, %s24
          %s169 = ssub.s32 196608, 196608
          %170 = vsyncadd %s163, %s169
          %s171 = smul.addr %s23, 3072
          %s172 = sadd.s32 %s167, %s171
          %s173 = smul.addr %s172, 128
          %s174 = scalar_lea.hbm %s0, %s173
          %s175 = sshll.u32 %s166, 4
          %s176 = int_to_ptr.vmem [resolvable:$true] %s175
          %181 = dma.hbm_to_vmem [thread:$0]  %s174, 196608, %s176, %s163, 512, 256, 16
        $region28: #{tpu_custom_call.1} parent=23 // pred_fallthru
          _
      $region24: #{tpu_custom_call.1} parent=5 // pred_fallthru
        _
      %p182 = scmp.le.s32.totalorder 1, %s16
      %p183 = scmp.lt.s32.totalorder %s16, 5
      %p184 = pnand %p182, %p183
      %p185 = pneg %p184
      // Predicated region
      $region29: #{tpu_custom_call.1} parent=5 // pred_check
        _
      $region30: #{tpu_custom_call.1} parent=5 // pred_check_branch
        %187 = sbr.rel (%p184) target = $region32
      $region31: #{tpu_custom_call.1} parent=5 // pred_region
        %s188 = ssub.s32 %s16, 1
        %s189 = sand.u32 %s43, 1
        %s190 = scalar_lea.sflag [#allocation3], %s189
        %s191 = sand.u32 %s43, 1
        %s192 = smul.addr %s191, 12288
        %s193 = scalar_lea.vmem [#allocation2], %s192
        // Predicated region
        $region33: #{tpu_custom_call.1} parent=31 // pred_check
          %p194 = pneg %p56
        $region34: #{tpu_custom_call.1} parent=31 // pred_check_branch
          %196 = sbr.rel (%p194) target = $region36
        $region35: #{tpu_custom_call.1} parent=31 // pred_region
          %197 = dma.done %s190, 196608
        $region36: #{tpu_custom_call.1} parent=31 // pred_fallthru
          _
        // Predicated region
        $region37: #{tpu_custom_call.1} parent=31 // pred_check
          %p198 = pneg %p77
        $region38: #{tpu_custom_call.1} parent=31 // pred_check_branch
          %200 = sbr.rel (%p198) target = $region40
        $region39: #{tpu_custom_call.1} parent=31 // pred_region
          %201 = dma.done [#allocation6], 1536
        $region40: #{tpu_custom_call.1} parent=31 // pred_fallthru
          _
        %s202 = sand.u32 %s43, 1
        %s203 = scalar_lea.sflag [#allocation3], %s202
        %s204 = sand.u32 %s43, 1
        %s205 = smul.addr %s204, 12288
        %s206 = scalar_lea.vmem [#allocation2], %s205
        %p207 = pneg %p56
        %p208 = pneg %p53
        %p209 = pneg %p77
        %p210 = pneg %p74
        %p211 = pneg %p98
        %p212 = pneg %p95
        %p213 = pneg %p126
        %p214 = pneg %p123
        %s215 = sand.u32 %s113, 1
        %s216 = scalar_lea.sflag [#allocation4], %s215
        %s217 = sand.u32 %s113, 1
        %s218 = smul.addr %s217, 4
        %s219 = scalar_lea.vmem [#allocation7], %s218
        %s220 = smul.u32 2, %s26
        %s221 = smul.u32 2, %s26
        %v222 = vld [vmem:[#allocation5] sm:$0xff]
        %v223 = vld [vmem:[#allocation5 + $0x8] sm:$0xff]
        %v224 = vld [vmem:[#allocation5 + $0x10] sm:$0xff]
        %v225 = vld [vmem:[#allocation5 + $0x18] sm:$0xff]
        %v226 = vld [vmem:[#allocation5 + $0x20] sm:$0xff]
        %v227 = vld [vmem:[#allocation5 + $0x28] sm:$0xff]
        %v228 = vld [vmem:[#allocation5 + $0x30] sm:$0xff]
        %v229 = vld [vmem:[#allocation5 + $0x38] sm:$0xff]
        %v230 = vld [vmem:[#allocation5 + $0x40] sm:$0xff]
        %v231 = vld [vmem:[#allocation5 + $0x48] sm:$0xff]
        %v232 = vld [vmem:[#allocation5 + $0x50] sm:$0xff]
        %v233 = vld [vmem:[#allocation5 + $0x58] sm:$0xff]
        %v234 = vld [vmem:[%s193] sm:$0xff]
        %v235 = vld [vmem:[%s193 + $0x8] sm:$0xff]
        %v236 = vld [vmem:[%s193 + $0x10] sm:$0xff]
        %v237 = vld [vmem:[%s193 + $0x18] sm:$0xff]
        %v238 = vld [vmem:[%s193 + $0x20] sm:$0xff]
        %v239 = vld [vmem:[%s193 + $0x28] sm:$0xff]
        %v240 = vld [vmem:[%s193 + $0x30] sm:$0xff]
        %v241 = vld [vmem:[%s193 + $0x38] sm:$0xff]
        %v242 = vld [vmem:[%s193 + $0x40] sm:$0xff]
        %v243 = vld [vmem:[%s193 + $0x48] sm:$0xff]
        %v244 = vld [vmem:[%s193 + $0x50] sm:$0xff]
        %v245 = vld [vmem:[%s193 + $0x58] sm:$0xff]
        %v246 = vld [vmem:[%s193 + $0x60] sm:$0xff]
        %v247 = vld [vmem:[%s193 + $0x68] sm:$0xff]
        %v248 = vld [vmem:[%s193 + $0x70] sm:$0xff]
        %v249 = vld [vmem:[%s193 + $0x78] sm:$0xff]
        %v250 = vld [vmem:[%s193 + $0x80] sm:$0xff]
        %v251 = vld [vmem:[%s193 + $0x88] sm:$0xff]
        %v252 = vld [vmem:[%s193 + $0x90] sm:$0xff]
        %v253 = vld [vmem:[%s193 + $0x98] sm:$0xff]
        %v254 = vld [vmem:[%s193 + $0xa0] sm:$0xff]
        %v255 = vld [vmem:[%s193 + $0xa8] sm:$0xff]
        %v256 = vld [vmem:[%s193 + $0xb0] sm:$0xff]
        %v257 = vld [vmem:[%s193 + $0xb8] sm:$0xff]
        %v258 = vld [vmem:[%s193 + $0xc0] sm:$0xff]
        %v259 = vld [vmem:[%s193 + $0xc8] sm:$0xff]
        %v260 = vld [vmem:[%s193 + $0xd0] sm:$0xff]
        %v261 = vld [vmem:[%s193 + $0xd8] sm:$0xff]
        %v262 = vld [vmem:[%s193 + $0xe0] sm:$0xff]
        %v263 = vld [vmem:[%s193 + $0xe8] sm:$0xff]
        %v264 = vld [vmem:[%s193 + $0xf0] sm:$0xff]
        %v265 = vld [vmem:[%s193 + $0xf8] sm:$0xff]
        %v266 = vld [vmem:[%s193 + $0x100] sm:$0xff]
        %v267 = vld [vmem:[%s193 + $0x108] sm:$0xff]
        %v268 = vld [vmem:[%s193 + $0x110] sm:$0xff]
        %v269 = vld [vmem:[%s193 + $0x118] sm:$0xff]
        %v270 = vld [vmem:[%s193 + $0x120] sm:$0xff]
        %v271 = vld [vmem:[%s193 + $0x128] sm:$0xff]
        %v272 = vld [vmem:[%s193 + $0x130] sm:$0xff]
        %v273 = vld [vmem:[%s193 + $0x138] sm:$0xff]
        %v274 = vld [vmem:[%s193 + $0x140] sm:$0xff]
        %v275 = vld [vmem:[%s193 + $0x148] sm:$0xff]
        %v276 = vld [vmem:[%s193 + $0x150] sm:$0xff]
        %v277 = vld [vmem:[%s193 + $0x158] sm:$0xff]
        %v278 = vld [vmem:[%s193 + $0x160] sm:$0xff]
        %v279 = vld [vmem:[%s193 + $0x168] sm:$0xff]
        %v280 = vld [vmem:[%s193 + $0x170] sm:$0xff]
        %v281 = vld [vmem:[%s193 + $0x178] sm:$0xff]
        %v282 = vld [vmem:[%s193 + $0x180] sm:$0xff]
        %v283 = vld [vmem:[%s193 + $0x188] sm:$0xff]
        %v284 = vld [vmem:[%s193 + $0x190] sm:$0xff]
        %v285 = vld [vmem:[%s193 + $0x198] sm:$0xff]
        %v286 = vld [vmem:[%s193 + $0x1a0] sm:$0xff]
        %v287 = vld [vmem:[%s193 + $0x1a8] sm:$0xff]
        %v288 = vld [vmem:[%s193 + $0x1b0] sm:$0xff]
        %v289 = vld [vmem:[%s193 + $0x1b8] sm:$0xff]
        %v290 = vld [vmem:[%s193 + $0x1c0] sm:$0xff]
        %v291 = vld [vmem:[%s193 + $0x1c8] sm:$0xff]
        %v292 = vld [vmem:[%s193 + $0x1d0] sm:$0xff]
        %v293 = vld [vmem:[%s193 + $0x1d8] sm:$0xff]
        %v294 = vld [vmem:[%s193 + $0x1e0] sm:$0xff]
        %v295 = vld [vmem:[%s193 + $0x1e8] sm:$0xff]
        %v296 = vld [vmem:[%s193 + $0x1f0] sm:$0xff]
        %v297 = vld [vmem:[%s193 + $0x1f8] sm:$0xff]
        %v298 = vld [vmem:[%s193 + $0x200] sm:$0xff]
        %v299 = vld [vmem:[%s193 + $0x208] sm:$0xff]
        %v300 = vld [vmem:[%s193 + $0x210] sm:$0xff]
        %v301 = vld [vmem:[%s193 + $0x218] sm:$0xff]
        %v302 = vld [vmem:[%s193 + $0x220] sm:$0xff]
        %v303 = vld [vmem:[%s193 + $0x228] sm:$0xff]
        %v304 = vld [vmem:[%s193 + $0x230] sm:$0xff]
        %v305 = vld [vmem:[%s193 + $0x238] sm:$0xff]
        %v306 = vld [vmem:[%s193 + $0x240] sm:$0xff]
        %v307 = vld [vmem:[%s193 + $0x248] sm:$0xff]
        %v308 = vld [vmem:[%s193 + $0x250] sm:$0xff]
        %v309 = vld [vmem:[%s193 + $0x258] sm:$0xff]
        %v310 = vld [vmem:[%s193 + $0x260] sm:$0xff]
        %v311 = vld [vmem:[%s193 + $0x268] sm:$0xff]
        %v312 = vld [vmem:[%s193 + $0x270] sm:$0xff]
        %v313 = vld [vmem:[%s193 + $0x278] sm:$0xff]
        %v314 = vld [vmem:[%s193 + $0x280] sm:$0xff]
        %v315 = vld [vmem:[%s193 + $0x288] sm:$0xff]
        %v316 = vld [vmem:[%s193 + $0x290] sm:$0xff]
        %v317 = vld [vmem:[%s193 + $0x298] sm:$0xff]
        %v318 = vld [vmem:[%s193 + $0x2a0] sm:$0xff]
        %v319 = vld [vmem:[%s193 + $0x2a8] sm:$0xff]
        %v320 = vld [vmem:[%s193 + $0x2b0] sm:$0xff]
        %v321 = vld [vmem:[%s193 + $0x2b8] sm:$0xff]
        %v322 = vld [vmem:[%s193 + $0x2c0] sm:$0xff]
        %v323 = vld [vmem:[%s193 + $0x2c8] sm:$0xff]
        %v324 = vld [vmem:[%s193 + $0x2d0] sm:$0xff]
        %v325 = vld [vmem:[%s193 + $0x2d8] sm:$0xff]
        %v326 = vld [vmem:[%s193 + $0x2e0] sm:$0xff]
        %v327 = vld [vmem:[%s193 + $0x2e8] sm:$0xff]
        %v328 = vld [vmem:[%s193 + $0x2f0] sm:$0xff]
        %v329 = vld [vmem:[%s193 + $0x2f8] sm:$0xff]
        %v330 = vld [vmem:[%s193 + $0x300] sm:$0xff]
        %v331 = vld [vmem:[%s193 + $0x308] sm:$0xff]
        %v332 = vld [vmem:[%s193 + $0x310] sm:$0xff]
        %v333 = vld [vmem:[%s193 + $0x318] sm:$0xff]
        %v334 = vld [vmem:[%s193 + $0x320] sm:$0xff]
        %v335 = vld [vmem:[%s193 + $0x328] sm:$0xff]
        %v336 = vld [vmem:[%s193 + $0x330] sm:$0xff]
        %v337 = vld [vmem:[%s193 + $0x338] sm:$0xff]
        %v338 = vld [vmem:[%s193 + $0x340] sm:$0xff]
        %v339 = vld [vmem:[%s193 + $0x348] sm:$0xff]
        %v340 = vld [vmem:[%s193 + $0x350] sm:$0xff]
        %v341 = vld [vmem:[%s193 + $0x358] sm:$0xff]
        %v342 = vld [vmem:[%s193 + $0x360] sm:$0xff]
        %v343 = vld [vmem:[%s193 + $0x368] sm:$0xff]
        %v344 = vld [vmem:[%s193 + $0x370] sm:$0xff]
        %v345 = vld [vmem:[%s193 + $0x378] sm:$0xff]
        %v346 = vld [vmem:[%s193 + $0x380] sm:$0xff]
        %v347 = vld [vmem:[%s193 + $0x388] sm:$0xff]
        %v348 = vld [vmem:[%s193 + $0x390] sm:$0xff]
        %v349 = vld [vmem:[%s193 + $0x398] sm:$0xff]
        %v350 = vld [vmem:[%s193 + $0x3a0] sm:$0xff]
        %v351 = vld [vmem:[%s193 + $0x3a8] sm:$0xff]
        %v352 = vld [vmem:[%s193 + $0x3b0] sm:$0xff]
        %v353 = vld [vmem:[%s193 + $0x3b8] sm:$0xff]
        %v354 = vld [vmem:[%s193 + $0x3c0] sm:$0xff]
        %v355 = vld [vmem:[%s193 + $0x3c8] sm:$0xff]
        %v356 = vld [vmem:[%s193 + $0x3d0] sm:$0xff]
        %v357 = vld [vmem:[%s193 + $0x3d8] sm:$0xff]
        %v358 = vld [vmem:[%s193 + $0x3e0] sm:$0xff]
        %v359 = vld [vmem:[%s193 + $0x3e8] sm:$0xff]
        %v360 = vld [vmem:[%s193 + $0x3f0] sm:$0xff]
        %v361 = vld [vmem:[%s193 + $0x3f8] sm:$0xff]
        %v362 = vld [vmem:[%s193 + $0x400] sm:$0xff]
        %v363 = vld [vmem:[%s193 + $0x408] sm:$0xff]
        %v364 = vld [vmem:[%s193 + $0x410] sm:$0xff]
        %v365 = vld [vmem:[%s193 + $0x418] sm:$0xff]
        %v366 = vld [vmem:[%s193 + $0x420] sm:$0xff]
        %v367 = vld [vmem:[%s193 + $0x428] sm:$0xff]
        %v368 = vld [vmem:[%s193 + $0x430] sm:$0xff]
        %v369 = vld [vmem:[%s193 + $0x438] sm:$0xff]
        %v370 = vld [vmem:[%s193 + $0x440] sm:$0xff]
        %v371 = vld [vmem:[%s193 + $0x448] sm:$0xff]
        %v372 = vld [vmem:[%s193 + $0x450] sm:$0xff]
        %v373 = vld [vmem:[%s193 + $0x458] sm:$0xff]
        %v374 = vld [vmem:[%s193 + $0x460] sm:$0xff]
        %v375 = vld [vmem:[%s193 + $0x468] sm:$0xff]
        %v376 = vld [vmem:[%s193 + $0x470] sm:$0xff]
        %v377 = vld [vmem:[%s193 + $0x478] sm:$0xff]
        %v378 = vld [vmem:[%s193 + $0x480] sm:$0xff]
        %v379 = vld [vmem:[%s193 + $0x488] sm:$0xff]
        %v380 = vld [vmem:[%s193 + $0x490] sm:$0xff]
        %v381 = vld [vmem:[%s193 + $0x498] sm:$0xff]
        %v382 = vld [vmem:[%s193 + $0x4a0] sm:$0xff]
        %v383 = vld [vmem:[%s193 + $0x4a8] sm:$0xff]
        %v384 = vld [vmem:[%s193 + $0x4b0] sm:$0xff]
        %v385 = vld [vmem:[%s193 + $0x4b8] sm:$0xff]
        %v386 = vld [vmem:[%s193 + $0x4c0] sm:$0xff]
        %v387 = vld [vmem:[%s193 + $0x4c8] sm:$0xff]
        %v388 = vld [vmem:[%s193 + $0x4d0] sm:$0xff]
        %v389 = vld [vmem:[%s193 + $0x4d8] sm:$0xff]
        %v390 = vld [vmem:[%s193 + $0x4e0] sm:$0xff]
        %v391 = vld [vmem:[%s193 + $0x4e8] sm:$0xff]
        %v392 = vld [vmem:[%s193 + $0x4f0] sm:$0xff]
        %v393 = vld [vmem:[%s193 + $0x4f8] sm:$0xff]
        %v394 = vld [vmem:[%s193 + $0x500] sm:$0xff]
        %v395 = vld [vmem:[%s193 + $0x508] sm:$0xff]
        %v396 = vld [vmem:[%s193 + $0x510] sm:$0xff]
        %v397 = vld [vmem:[%s193 + $0x518] sm:$0xff]
        %v398 = vld [vmem:[%s193 + $0x520] sm:$0xff]
        %v399 = vld [vmem:[%s193 + $0x528] sm:$0xff]
        %v400 = vld [vmem:[%s193 + $0x530] sm:$0xff]
        %v401 = vld [vmem:[%s193 + $0x538] sm:$0xff]
        %v402 = vld [vmem:[%s193 + $0x540] sm:$0xff]
        %v403 = vld [vmem:[%s193 + $0x548] sm:$0xff]
        %v404 = vld [vmem:[%s193 + $0x550] sm:$0xff]
        %v405 = vld [vmem:[%s193 + $0x558] sm:$0xff]
        %v406 = vld [vmem:[%s193 + $0x560] sm:$0xff]
        %v407 = vld [vmem:[%s193 + $0x568] sm:$0xff]
        %v408 = vld [vmem:[%s193 + $0x570] sm:$0xff]
        %v409 = vld [vmem:[%s193 + $0x578] sm:$0xff]
        %v410 = vld [vmem:[%s193 + $0x580] sm:$0xff]
        %v411 = vld [vmem:[%s193 + $0x588] sm:$0xff]
        %v412 = vld [vmem:[%s193 + $0x590] sm:$0xff]
        %v413 = vld [vmem:[%s193 + $0x598] sm:$0xff]
        %v414 = vld [vmem:[%s193 + $0x5a0] sm:$0xff]
        %v415 = vld [vmem:[%s193 + $0x5a8] sm:$0xff]
        %v416 = vld [vmem:[%s193 + $0x5b0] sm:$0xff]
        %v417 = vld [vmem:[%s193 + $0x5b8] sm:$0xff]
        %v418 = vld [vmem:[%s193 + $0x5c0] sm:$0xff]
        %v419 = vld [vmem:[%s193 + $0x5c8] sm:$0xff]
        %v420 = vld [vmem:[%s193 + $0x5d0] sm:$0xff]
        %v421 = vld [vmem:[%s193 + $0x5d8] sm:$0xff]
        %v422 = vld [vmem:[%s193 + $0x5e0] sm:$0xff]
        %v423 = vld [vmem:[%s193 + $0x5e8] sm:$0xff]
        %v424 = vld [vmem:[%s193 + $0x5f0] sm:$0xff]
        %v425 = vld [vmem:[%s193 + $0x5f8] sm:$0xff]
        %v426 = vld [vmem:[%s193 + $0x600] sm:$0xff]
        %v427 = vld [vmem:[%s193 + $0x608] sm:$0xff]
        %v428 = vld [vmem:[%s193 + $0x610] sm:$0xff]
        %v429 = vld [vmem:[%s193 + $0x618] sm:$0xff]
        %v430 = vld [vmem:[%s193 + $0x620] sm:$0xff]
        %v431 = vld [vmem:[%s193 + $0x628] sm:$0xff]
        %v432 = vld [vmem:[%s193 + $0x630] sm:$0xff]
        %v433 = vld [vmem:[%s193 + $0x638] sm:$0xff]
        %v434 = vld [vmem:[%s193 + $0x640] sm:$0xff]
        %v435 = vld [vmem:[%s193 + $0x648] sm:$0xff]
        %v436 = vld [vmem:[%s193 + $0x650] sm:$0xff]
        %v437 = vld [vmem:[%s193 + $0x658] sm:$0xff]
        %v438 = vld [vmem:[%s193 + $0x660] sm:$0xff]
        %v439 = vld [vmem:[%s193 + $0x668] sm:$0xff]
        %v440 = vld [vmem:[%s193 + $0x670] sm:$0xff]
        %v441 = vld [vmem:[%s193 + $0x678] sm:$0xff]
        %v442 = vld [vmem:[%s193 + $0x680] sm:$0xff]
        %v443 = vld [vmem:[%s193 + $0x688] sm:$0xff]
        %v444 = vld [vmem:[%s193 + $0x690] sm:$0xff]
        %v445 = vld [vmem:[%s193 + $0x698] sm:$0xff]
        %v446 = vld [vmem:[%s193 + $0x6a0] sm:$0xff]
        %v447 = vld [vmem:[%s193 + $0x6a8] sm:$0xff]
        %v448 = vld [vmem:[%s193 + $0x6b0] sm:$0xff]
        %v449 = vld [vmem:[%s193 + $0x6b8] sm:$0xff]
        %v450 = vld [vmem:[%s193 + $0x6c0] sm:$0xff]
        %v451 = vld [vmem:[%s193 + $0x6c8] sm:$0xff]
        %v452 = vld [vmem:[%s193 + $0x6d0] sm:$0xff]
        %v453 = vld [vmem:[%s193 + $0x6d8] sm:$0xff]
        %v454 = vld [vmem:[%s193 + $0x6e0] sm:$0xff]
        %v455 = vld [vmem:[%s193 + $0x6e8] sm:$0xff]
        %v456 = vld [vmem:[%s193 + $0x6f0] sm:$0xff]
        %v457 = vld [vmem:[%s193 + $0x6f8] sm:$0xff]
        %v458 = vld [vmem:[%s193 + $0x700] sm:$0xff]
        %v459 = vld [vmem:[%s193 + $0x708] sm:$0xff]
        %v460 = vld [vmem:[%s193 + $0x710] sm:$0xff]
        %v461 = vld [vmem:[%s193 + $0x718] sm:$0xff]
        %v462 = vld [vmem:[%s193 + $0x720] sm:$0xff]
        %v463 = vld [vmem:[%s193 + $0x728] sm:$0xff]
        %v464 = vld [vmem:[%s193 + $0x730] sm:$0xff]
        %v465 = vld [vmem:[%s193 + $0x738] sm:$0xff]
        %v466 = vld [vmem:[%s193 + $0x740] sm:$0xff]
        %v467 = vld [vmem:[%s193 + $0x748] sm:$0xff]
        %v468 = vld [vmem:[%s193 + $0x750] sm:$0xff]
        %v469 = vld [vmem:[%s193 + $0x758] sm:$0xff]
        %v470 = vld [vmem:[%s193 + $0x760] sm:$0xff]
        %v471 = vld [vmem:[%s193 + $0x768] sm:$0xff]
        %v472 = vld [vmem:[%s193 + $0x770] sm:$0xff]
        %v473 = vld [vmem:[%s193 + $0x778] sm:$0xff]
        %v474 = vld [vmem:[%s193 + $0x780] sm:$0xff]
        %v475 = vld [vmem:[%s193 + $0x788] sm:$0xff]
        %v476 = vld [vmem:[%s193 + $0x790] sm:$0xff]
        %v477 = vld [vmem:[%s193 + $0x798] sm:$0xff]
        %v478 = vld [vmem:[%s193 + $0x7a0] sm:$0xff]
        %v479 = vld [vmem:[%s193 + $0x7a8] sm:$0xff]
        %v480 = vld [vmem:[%s193 + $0x7b0] sm:$0xff]
        %v481 = vld [vmem:[%s193 + $0x7b8] sm:$0xff]
        %v482 = vld [vmem:[%s193 + $0x7c0] sm:$0xff]
        %v483 = vld [vmem:[%s193 + $0x7c8] sm:$0xff]
        %v484 = vld [vmem:[%s193 + $0x7d0] sm:$0xff]
        %v485 = vld [vmem:[%s193 + $0x7d8] sm:$0xff]
        %v486 = vld [vmem:[%s193 + $0x7e0] sm:$0xff]
        %v487 = vld [vmem:[%s193 + $0x7e8] sm:$0xff]
        %v488 = vld [vmem:[%s193 + $0x7f0] sm:$0xff]
        %v489 = vld [vmem:[%s193 + $0x7f8] sm:$0xff]
        %v490 = vld [vmem:[%s193 + $0x800] sm:$0xff]
        %v491 = vld [vmem:[%s193 + $0x808] sm:$0xff]
        %v492 = vld [vmem:[%s193 + $0x810] sm:$0xff]
        %v493 = vld [vmem:[%s193 + $0x818] sm:$0xff]
        %v494 = vld [vmem:[%s193 + $0x820] sm:$0xff]
        %v495 = vld [vmem:[%s193 + $0x828] sm:$0xff]
        %v496 = vld [vmem:[%s193 + $0x830] sm:$0xff]
        %v497 = vld [vmem:[%s193 + $0x838] sm:$0xff]
        %v498 = vld [vmem:[%s193 + $0x840] sm:$0xff]
        %v499 = vld [vmem:[%s193 + $0x848] sm:$0xff]
        %v500 = vld [vmem:[%s193 + $0x850] sm:$0xff]
        %v501 = vld [vmem:[%s193 + $0x858] sm:$0xff]
        %v502 = vld [vmem:[%s193 + $0x860] sm:$0xff]
        %v503 = vld [vmem:[%s193 + $0x868] sm:$0xff]
        %v504 = vld [vmem:[%s193 + $0x870] sm:$0xff]
        %v505 = vld [vmem:[%s193 + $0x878] sm:$0xff]
        %v506 = vld [vmem:[%s193 + $0x880] sm:$0xff]
        %v507 = vld [vmem:[%s193 + $0x888] sm:$0xff]
        %v508 = vld [vmem:[%s193 + $0x890] sm:$0xff]
        %v509 = vld [vmem:[%s193 + $0x898] sm:$0xff]
        %v510 = vld [vmem:[%s193 + $0x8a0] sm:$0xff]
        %v511 = vld [vmem:[%s193 + $0x8a8] sm:$0xff]
        %v512 = vld [vmem:[%s193 + $0x8b0] sm:$0xff]
        %v513 = vld [vmem:[%s193 + $0x8b8] sm:$0xff]
        %v514 = vld [vmem:[%s193 + $0x8c0] sm:$0xff]
        %v515 = vld [vmem:[%s193 + $0x8c8] sm:$0xff]
        %v516 = vld [vmem:[%s193 + $0x8d0] sm:$0xff]
        %v517 = vld [vmem:[%s193 + $0x8d8] sm:$0xff]
        %v518 = vld [vmem:[%s193 + $0x8e0] sm:$0xff]
        %v519 = vld [vmem:[%s193 + $0x8e8] sm:$0xff]
        %v520 = vld [vmem:[%s193 + $0x8f0] sm:$0xff]
        %v521 = vld [vmem:[%s193 + $0x8f8] sm:$0xff]
        %v522 = vld [vmem:[%s193 + $0x900] sm:$0xff]
        %v523 = vld [vmem:[%s193 + $0x908] sm:$0xff]
        %v524 = vld [vmem:[%s193 + $0x910] sm:$0xff]
        %v525 = vld [vmem:[%s193 + $0x918] sm:$0xff]
        %v526 = vld [vmem:[%s193 + $0x920] sm:$0xff]
        %v527 = vld [vmem:[%s193 + $0x928] sm:$0xff]
        %v528 = vld [vmem:[%s193 + $0x930] sm:$0xff]
        %v529 = vld [vmem:[%s193 + $0x938] sm:$0xff]
        %v530 = vld [vmem:[%s193 + $0x940] sm:$0xff]
        %v531 = vld [vmem:[%s193 + $0x948] sm:$0xff]
        %v532 = vld [vmem:[%s193 + $0x950] sm:$0xff]
        %v533 = vld [vmem:[%s193 + $0x958] sm:$0xff]
        %v534 = vld [vmem:[%s193 + $0x960] sm:$0xff]
        %v535 = vld [vmem:[%s193 + $0x968] sm:$0xff]
        %v536 = vld [vmem:[%s193 + $0x970] sm:$0xff]
        %v537 = vld [vmem:[%s193 + $0x978] sm:$0xff]
        %v538 = vld [vmem:[%s193 + $0x980] sm:$0xff]
        %v539 = vld [vmem:[%s193 + $0x988] sm:$0xff]
        %v540 = vld [vmem:[%s193 + $0x990] sm:$0xff]
        %v541 = vld [vmem:[%s193 + $0x998] sm:$0xff]
        %v542 = vld [vmem:[%s193 + $0x9a0] sm:$0xff]
        %v543 = vld [vmem:[%s193 + $0x9a8] sm:$0xff]
        %v544 = vld [vmem:[%s193 + $0x9b0] sm:$0xff]
        %v545 = vld [vmem:[%s193 + $0x9b8] sm:$0xff]
        %v546 = vld [vmem:[%s193 + $0x9c0] sm:$0xff]
        %v547 = vld [vmem:[%s193 + $0x9c8] sm:$0xff]
        %v548 = vld [vmem:[%s193 + $0x9d0] sm:$0xff]
        %v549 = vld [vmem:[%s193 + $0x9d8] sm:$0xff]
        %v550 = vld [vmem:[%s193 + $0x9e0] sm:$0xff]
        %v551 = vld [vmem:[%s193 + $0x9e8] sm:$0xff]
        %v552 = vld [vmem:[%s193 + $0x9f0] sm:$0xff]
        %v553 = vld [vmem:[%s193 + $0x9f8] sm:$0xff]
        %v554 = vld [vmem:[%s193 + $0xa00] sm:$0xff]
        %v555 = vld [vmem:[%s193 + $0xa08] sm:$0xff]
        %v556 = vld [vmem:[%s193 + $0xa10] sm:$0xff]
        %v557 = vld [vmem:[%s193 + $0xa18] sm:$0xff]
        %v558 = vld [vmem:[%s193 + $0xa20] sm:$0xff]
        %v559 = vld [vmem:[%s193 + $0xa28] sm:$0xff]
        %v560 = vld [vmem:[%s193 + $0xa30] sm:$0xff]
        %v561 = vld [vmem:[%s193 + $0xa38] sm:$0xff]
        %v562 = vld [vmem:[%s193 + $0xa40] sm:$0xff]
        %v563 = vld [vmem:[%s193 + $0xa48] sm:$0xff]
        %v564 = vld [vmem:[%s193 + $0xa50] sm:$0xff]
        %v565 = vld [vmem:[%s193 + $0xa58] sm:$0xff]
        %v566 = vld [vmem:[%s193 + $0xa60] sm:$0xff]
        %v567 = vld [vmem:[%s193 + $0xa68] sm:$0xff]
        %v568 = vld [vmem:[%s193 + $0xa70] sm:$0xff]
        %v569 = vld [vmem:[%s193 + $0xa78] sm:$0xff]
        %v570 = vld [vmem:[%s193 + $0xa80] sm:$0xff]
        %v571 = vld [vmem:[%s193 + $0xa88] sm:$0xff]
        %v572 = vld [vmem:[%s193 + $0xa90] sm:$0xff]
        %v573 = vld [vmem:[%s193 + $0xa98] sm:$0xff]
        %v574 = vld [vmem:[%s193 + $0xaa0] sm:$0xff]
        %v575 = vld [vmem:[%s193 + $0xaa8] sm:$0xff]
        %v576 = vld [vmem:[%s193 + $0xab0] sm:$0xff]
        %v577 = vld [vmem:[%s193 + $0xab8] sm:$0xff]
        %v578 = vld [vmem:[%s193 + $0xac0] sm:$0xff]
        %v579 = vld [vmem:[%s193 + $0xac8] sm:$0xff]
        %v580 = vld [vmem:[%s193 + $0xad0] sm:$0xff]
        %v581 = vld [vmem:[%s193 + $0xad8] sm:$0xff]
        %v582 = vld [vmem:[%s193 + $0xae0] sm:$0xff]
        %v583 = vld [vmem:[%s193 + $0xae8] sm:$0xff]
        %v584 = vld [vmem:[%s193 + $0xaf0] sm:$0xff]
        %v585 = vld [vmem:[%s193 + $0xaf8] sm:$0xff]
        %v586 = vld [vmem:[%s193 + $0xb00] sm:$0xff]
        %v587 = vld [vmem:[%s193 + $0xb08] sm:$0xff]
        %v588 = vld [vmem:[%s193 + $0xb10] sm:$0xff]
        %v589 = vld [vmem:[%s193 + $0xb18] sm:$0xff]
        %v590 = vld [vmem:[%s193 + $0xb20] sm:$0xff]
        %v591 = vld [vmem:[%s193 + $0xb28] sm:$0xff]
        %v592 = vld [vmem:[%s193 + $0xb30] sm:$0xff]
        %v593 = vld [vmem:[%s193 + $0xb38] sm:$0xff]
        %v594 = vld [vmem:[%s193 + $0xb40] sm:$0xff]
        %v595 = vld [vmem:[%s193 + $0xb48] sm:$0xff]
        %v596 = vld [vmem:[%s193 + $0xb50] sm:$0xff]
        %v597 = vld [vmem:[%s193 + $0xb58] sm:$0xff]
        %v598 = vld [vmem:[%s193 + $0xb60] sm:$0xff]
        %v599 = vld [vmem:[%s193 + $0xb68] sm:$0xff]
        %v600 = vld [vmem:[%s193 + $0xb70] sm:$0xff]
        %v601 = vld [vmem:[%s193 + $0xb78] sm:$0xff]
        %v602 = vld [vmem:[%s193 + $0xb80] sm:$0xff]
        %v603 = vld [vmem:[%s193 + $0xb88] sm:$0xff]
        %v604 = vld [vmem:[%s193 + $0xb90] sm:$0xff]
        %v605 = vld [vmem:[%s193 + $0xb98] sm:$0xff]
        %v606 = vld [vmem:[%s193 + $0xba0] sm:$0xff]
        %v607 = vld [vmem:[%s193 + $0xba8] sm:$0xff]
        %v608 = vld [vmem:[%s193 + $0xbb0] sm:$0xff]
        %v609 = vld [vmem:[%s193 + $0xbb8] sm:$0xff]
        %v610 = vld [vmem:[%s193 + $0xbc0] sm:$0xff]
        %v611 = vld [vmem:[%s193 + $0xbc8] sm:$0xff]
        %v612 = vld [vmem:[%s193 + $0xbd0] sm:$0xff]
        %v613 = vld [vmem:[%s193 + $0xbd8] sm:$0xff]
        %v614 = vld [vmem:[%s193 + $0xbe0] sm:$0xff]
        %v615 = vld [vmem:[%s193 + $0xbe8] sm:$0xff]
        %v616 = vld [vmem:[%s193 + $0xbf0] sm:$0xff]
        %v617 = vld [vmem:[%s193 + $0xbf8] sm:$0xff]
        %v618 = vld [vmem:[%s193 + $0xc00] sm:$0xff]
        %v619 = vld [vmem:[%s193 + $0xc08] sm:$0xff]
        %v620 = vld [vmem:[%s193 + $0xc10] sm:$0xff]
        %v621 = vld [vmem:[%s193 + $0xc18] sm:$0xff]
        %v622 = vld [vmem:[%s193 + $0xc20] sm:$0xff]
        %v623 = vld [vmem:[%s193 + $0xc28] sm:$0xff]
        %v624 = vld [vmem:[%s193 + $0xc30] sm:$0xff]
        %v625 = vld [vmem:[%s193 + $0xc38] sm:$0xff]
        %v626 = vld [vmem:[%s193 + $0xc40] sm:$0xff]
        %v627 = vld [vmem:[%s193 + $0xc48] sm:$0xff]
        %v628 = vld [vmem:[%s193 + $0xc50] sm:$0xff]
        %v629 = vld [vmem:[%s193 + $0xc58] sm:$0xff]
        %v630 = vld [vmem:[%s193 + $0xc60] sm:$0xff]
        %v631 = vld [vmem:[%s193 + $0xc68] sm:$0xff]
        %v632 = vld [vmem:[%s193 + $0xc70] sm:$0xff]
        %v633 = vld [vmem:[%s193 + $0xc78] sm:$0xff]
        %v634 = vld [vmem:[%s193 + $0xc80] sm:$0xff]
        %v635 = vld [vmem:[%s193 + $0xc88] sm:$0xff]
        %v636 = vld [vmem:[%s193 + $0xc90] sm:$0xff]
        %v637 = vld [vmem:[%s193 + $0xc98] sm:$0xff]
        %v638 = vld [vmem:[%s193 + $0xca0] sm:$0xff]
        %v639 = vld [vmem:[%s193 + $0xca8] sm:$0xff]
        %v640 = vld [vmem:[%s193 + $0xcb0] sm:$0xff]
        %v641 = vld [vmem:[%s193 + $0xcb8] sm:$0xff]
        %v642 = vld [vmem:[%s193 + $0xcc0] sm:$0xff]
        %v643 = vld [vmem:[%s193 + $0xcc8] sm:$0xff]
        %v644 = vld [vmem:[%s193 + $0xcd0] sm:$0xff]
        %v645 = vld [vmem:[%s193 + $0xcd8] sm:$0xff]
        %v646 = vld [vmem:[%s193 + $0xce0] sm:$0xff]
        %v647 = vld [vmem:[%s193 + $0xce8] sm:$0xff]
        %v648 = vld [vmem:[%s193 + $0xcf0] sm:$0xff]
        %v649 = vld [vmem:[%s193 + $0xcf8] sm:$0xff]
        %v650 = vld [vmem:[%s193 + $0xd00] sm:$0xff]
        %v651 = vld [vmem:[%s193 + $0xd08] sm:$0xff]
        %v652 = vld [vmem:[%s193 + $0xd10] sm:$0xff]
        %v653 = vld [vmem:[%s193 + $0xd18] sm:$0xff]
        %v654 = vld [vmem:[%s193 + $0xd20] sm:$0xff]
        %v655 = vld [vmem:[%s193 + $0xd28] sm:$0xff]
        %v656 = vld [vmem:[%s193 + $0xd30] sm:$0xff]
        %v657 = vld [vmem:[%s193 + $0xd38] sm:$0xff]
        %v658 = vld [vmem:[%s193 + $0xd40] sm:$0xff]
        %v659 = vld [vmem:[%s193 + $0xd48] sm:$0xff]
        %v660 = vld [vmem:[%s193 + $0xd50] sm:$0xff]
        %v661 = vld [vmem:[%s193 + $0xd58] sm:$0xff]
        %v662 = vld [vmem:[%s193 + $0xd60] sm:$0xff]
        %v663 = vld [vmem:[%s193 + $0xd68] sm:$0xff]
        %v664 = vld [vmem:[%s193 + $0xd70] sm:$0xff]
        %v665 = vld [vmem:[%s193 + $0xd78] sm:$0xff]
        %v666 = vld [vmem:[%s193 + $0xd80] sm:$0xff]
        %v667 = vld [vmem:[%s193 + $0xd88] sm:$0xff]
        %v668 = vld [vmem:[%s193 + $0xd90] sm:$0xff]
        %v669 = vld [vmem:[%s193 + $0xd98] sm:$0xff]
        %v670 = vld [vmem:[%s193 + $0xda0] sm:$0xff]
        %v671 = vld [vmem:[%s193 + $0xda8] sm:$0xff]
        %v672 = vld [vmem:[%s193 + $0xdb0] sm:$0xff]
        %v673 = vld [vmem:[%s193 + $0xdb8] sm:$0xff]
        %v674 = vld [vmem:[%s193 + $0xdc0] sm:$0xff]
        %v675 = vld [vmem:[%s193 + $0xdc8] sm:$0xff]
        %v676 = vld [vmem:[%s193 + $0xdd0] sm:$0xff]
        %v677 = vld [vmem:[%s193 + $0xdd8] sm:$0xff]
        %v678 = vld [vmem:[%s193 + $0xde0] sm:$0xff]
        %v679 = vld [vmem:[%s193 + $0xde8] sm:$0xff]
        %v680 = vld [vmem:[%s193 + $0xdf0] sm:$0xff]
        %v681 = vld [vmem:[%s193 + $0xdf8] sm:$0xff]
        %v682 = vld [vmem:[%s193 + $0xe00] sm:$0xff]
        %v683 = vld [vmem:[%s193 + $0xe08] sm:$0xff]
        %v684 = vld [vmem:[%s193 + $0xe10] sm:$0xff]
        %v685 = vld [vmem:[%s193 + $0xe18] sm:$0xff]
        %v686 = vld [vmem:[%s193 + $0xe20] sm:$0xff]
        %v687 = vld [vmem:[%s193 + $0xe28] sm:$0xff]
        %v688 = vld [vmem:[%s193 + $0xe30] sm:$0xff]
        %v689 = vld [vmem:[%s193 + $0xe38] sm:$0xff]
        %v690 = vld [vmem:[%s193 + $0xe40] sm:$0xff]
        %v691 = vld [vmem:[%s193 + $0xe48] sm:$0xff]
        %v692 = vld [vmem:[%s193 + $0xe50] sm:$0xff]
        %v693 = vld [vmem:[%s193 + $0xe58] sm:$0xff]
        %v694 = vld [vmem:[%s193 + $0xe60] sm:$0xff]
        %v695 = vld [vmem:[%s193 + $0xe68] sm:$0xff]
        %v696 = vld [vmem:[%s193 + $0xe70] sm:$0xff]
        %v697 = vld [vmem:[%s193 + $0xe78] sm:$0xff]
        %v698 = vld [vmem:[%s193 + $0xe80] sm:$0xff]
        %v699 = vld [vmem:[%s193 + $0xe88] sm:$0xff]
        %v700 = vld [vmem:[%s193 + $0xe90] sm:$0xff]
        %v701 = vld [vmem:[%s193 + $0xe98] sm:$0xff]
        %v702 = vld [vmem:[%s193 + $0xea0] sm:$0xff]
        %v703 = vld [vmem:[%s193 + $0xea8] sm:$0xff]
        %v704 = vld [vmem:[%s193 + $0xeb0] sm:$0xff]
        %v705 = vld [vmem:[%s193 + $0xeb8] sm:$0xff]
        %v706 = vld [vmem:[%s193 + $0xec0] sm:$0xff]
        %v707 = vld [vmem:[%s193 + $0xec8] sm:$0xff]
        %v708 = vld [vmem:[%s193 + $0xed0] sm:$0xff]
        %v709 = vld [vmem:[%s193 + $0xed8] sm:$0xff]
        %v710 = vld [vmem:[%s193 + $0xee0] sm:$0xff]
        %v711 = vld [vmem:[%s193 + $0xee8] sm:$0xff]
        %v712 = vld [vmem:[%s193 + $0xef0] sm:$0xff]
        %v713 = vld [vmem:[%s193 + $0xef8] sm:$0xff]
        %v714 = vld [vmem:[%s193 + $0xf00] sm:$0xff]
        %v715 = vld [vmem:[%s193 + $0xf08] sm:$0xff]
        %v716 = vld [vmem:[%s193 + $0xf10] sm:$0xff]
        %v717 = vld [vmem:[%s193 + $0xf18] sm:$0xff]
        %v718 = vld [vmem:[%s193 + $0xf20] sm:$0xff]
        %v719 = vld [vmem:[%s193 + $0xf28] sm:$0xff]
        %v720 = vld [vmem:[%s193 + $0xf30] sm:$0xff]
        %v721 = vld [vmem:[%s193 + $0xf38] sm:$0xff]
        %v722 = vld [vmem:[%s193 + $0xf40] sm:$0xff]
        %v723 = vld [vmem:[%s193 + $0xf48] sm:$0xff]
        %v724 = vld [vmem:[%s193 + $0xf50] sm:$0xff]
        %v725 = vld [vmem:[%s193 + $0xf58] sm:$0xff]
        %v726 = vld [vmem:[%s193 + $0xf60] sm:$0xff]
        %v727 = vld [vmem:[%s193 + $0xf68] sm:$0xff]
        %v728 = vld [vmem:[%s193 + $0xf70] sm:$0xff]
        %v729 = vld [vmem:[%s193 + $0xf78] sm:$0xff]
        %v730 = vld [vmem:[%s193 + $0xf80] sm:$0xff]
        %v731 = vld [vmem:[%s193 + $0xf88] sm:$0xff]
        %v732 = vld [vmem:[%s193 + $0xf90] sm:$0xff]
        %v733 = vld [vmem:[%s193 + $0xf98] sm:$0xff]
        %v734 = vld [vmem:[%s193 + $0xfa0] sm:$0xff]
        %v735 = vld [vmem:[%s193 + $0xfa8] sm:$0xff]
        %v736 = vld [vmem:[%s193 + $0xfb0] sm:$0xff]
        %v737 = vld [vmem:[%s193 + $0xfb8] sm:$0xff]
        %v738 = vld [vmem:[%s193 + $0xfc0] sm:$0xff]
        %v739 = vld [vmem:[%s193 + $0xfc8] sm:$0xff]
        %v740 = vld [vmem:[%s193 + $0xfd0] sm:$0xff]
        %v741 = vld [vmem:[%s193 + $0xfd8] sm:$0xff]
        %v742 = vld [vmem:[%s193 + $0xfe0] sm:$0xff]
        %v743 = vld [vmem:[%s193 + $0xfe8] sm:$0xff]
        %v744 = vld [vmem:[%s193 + $0xff0] sm:$0xff]
        %v745 = vld [vmem:[%s193 + $0xff8] sm:$0xff]
        %v746 = vld [vmem:[%s193 + $0x1000] sm:$0xff]
        %v747 = vld [vmem:[%s193 + $0x1008] sm:$0xff]
        %v748 = vld [vmem:[%s193 + $0x1010] sm:$0xff]
        %v749 = vld [vmem:[%s193 + $0x1018] sm:$0xff]
        %v750 = vld [vmem:[%s193 + $0x1020] sm:$0xff]
        %v751 = vld [vmem:[%s193 + $0x1028] sm:$0xff]
        %v752 = vld [vmem:[%s193 + $0x1030] sm:$0xff]
        %v753 = vld [vmem:[%s193 + $0x1038] sm:$0xff]
        %v754 = vld [vmem:[%s193 + $0x1040] sm:$0xff]
        %v755 = vld [vmem:[%s193 + $0x1048] sm:$0xff]
        %v756 = vld [vmem:[%s193 + $0x1050] sm:$0xff]
        %v757 = vld [vmem:[%s193 + $0x1058] sm:$0xff]
        %v758 = vld [vmem:[%s193 + $0x1060] sm:$0xff]
        %v759 = vld [vmem:[%s193 + $0x1068] sm:$0xff]
        %v760 = vld [vmem:[%s193 + $0x1070] sm:$0xff]
        %v761 = vld [vmem:[%s193 + $0x1078] sm:$0xff]
        %v762 = vld [vmem:[%s193 + $0x1080] sm:$0xff]
        %v763 = vld [vmem:[%s193 + $0x1088] sm:$0xff]
        %v764 = vld [vmem:[%s193 + $0x1090] sm:$0xff]
        %v765 = vld [vmem:[%s193 + $0x1098] sm:$0xff]
        %v766 = vld [vmem:[%s193 + $0x10a0] sm:$0xff]
        %v767 = vld [vmem:[%s193 + $0x10a8] sm:$0xff]
        %v768 = vld [vmem:[%s193 + $0x10b0] sm:$0xff]
        %v769 = vld [vmem:[%s193 + $0x10b8] sm:$0xff]
        %v770 = vld [vmem:[%s193 + $0x10c0] sm:$0xff]
        %v771 = vld [vmem:[%s193 + $0x10c8] sm:$0xff]
        %v772 = vld [vmem:[%s193 + $0x10d0] sm:$0xff]
        %v773 = vld [vmem:[%s193 + $0x10d8] sm:$0xff]
        %v774 = vld [vmem:[%s193 + $0x10e0] sm:$0xff]
        %v775 = vld [vmem:[%s193 + $0x10e8] sm:$0xff]
        %v776 = vld [vmem:[%s193 + $0x10f0] sm:$0xff]
        %v777 = vld [vmem:[%s193 + $0x10f8] sm:$0xff]
        %v778 = vld [vmem:[%s193 + $0x1100] sm:$0xff]
        %v779 = vld [vmem:[%s193 + $0x1108] sm:$0xff]
        %v780 = vld [vmem:[%s193 + $0x1110] sm:$0xff]
        %v781 = vld [vmem:[%s193 + $0x1118] sm:$0xff]
        %v782 = vld [vmem:[%s193 + $0x1120] sm:$0xff]
        %v783 = vld [vmem:[%s193 + $0x1128] sm:$0xff]
        %v784 = vld [vmem:[%s193 + $0x1130] sm:$0xff]
        %v785 = vld [vmem:[%s193 + $0x1138] sm:$0xff]
        %v786 = vld [vmem:[%s193 + $0x1140] sm:$0xff]
        %v787 = vld [vmem:[%s193 + $0x1148] sm:$0xff]
        %v788 = vld [vmem:[%s193 + $0x1150] sm:$0xff]
        %v789 = vld [vmem:[%s193 + $0x1158] sm:$0xff]
        %v790 = vld [vmem:[%s193 + $0x1160] sm:$0xff]
        %v791 = vld [vmem:[%s193 + $0x1168] sm:$0xff]
        %v792 = vld [vmem:[%s193 + $0x1170] sm:$0xff]
        %v793 = vld [vmem:[%s193 + $0x1178] sm:$0xff]
        %v794 = vld [vmem:[%s193 + $0x1180] sm:$0xff]
        %v795 = vld [vmem:[%s193 + $0x1188] sm:$0xff]
        %v796 = vld [vmem:[%s193 + $0x1190] sm:$0xff]
        %v797 = vld [vmem:[%s193 + $0x1198] sm:$0xff]
        %v798 = vld [vmem:[%s193 + $0x11a0] sm:$0xff]
        %v799 = vld [vmem:[%s193 + $0x11a8] sm:$0xff]
        %v800 = vld [vmem:[%s193 + $0x11b0] sm:$0xff]
        %v801 = vld [vmem:[%s193 + $0x11b8] sm:$0xff]
        %v802 = vld [vmem:[%s193 + $0x11c0] sm:$0xff]
        %v803 = vld [vmem:[%s193 + $0x11c8] sm:$0xff]
        %v804 = vld [vmem:[%s193 + $0x11d0] sm:$0xff]
        %v805 = vld [vmem:[%s193 + $0x11d8] sm:$0xff]
        %v806 = vld [vmem:[%s193 + $0x11e0] sm:$0xff]
        %v807 = vld [vmem:[%s193 + $0x11e8] sm:$0xff]
        %v808 = vld [vmem:[%s193 + $0x11f0] sm:$0xff]
        %v809 = vld [vmem:[%s193 + $0x11f8] sm:$0xff]
        %v810 = vld [vmem:[%s193 + $0x1200] sm:$0xff]
        %v811 = vld [vmem:[%s193 + $0x1208] sm:$0xff]
        %v812 = vld [vmem:[%s193 + $0x1210] sm:$0xff]
        %v813 = vld [vmem:[%s193 + $0x1218] sm:$0xff]
        %v814 = vld [vmem:[%s193 + $0x1220] sm:$0xff]
        %v815 = vld [vmem:[%s193 + $0x1228] sm:$0xff]
        %v816 = vld [vmem:[%s193 + $0x1230] sm:$0xff]
        %v817 = vld [vmem:[%s193 + $0x1238] sm:$0xff]
        %v818 = vld [vmem:[%s193 + $0x1240] sm:$0xff]
        %v819 = vld [vmem:[%s193 + $0x1248] sm:$0xff]
        %v820 = vld [vmem:[%s193 + $0x1250] sm:$0xff]
        %v821 = vld [vmem:[%s193 + $0x1258] sm:$0xff]
        %v822 = vld [vmem:[%s193 + $0x1260] sm:$0xff]
        %v823 = vld [vmem:[%s193 + $0x1268] sm:$0xff]
        %v824 = vld [vmem:[%s193 + $0x1270] sm:$0xff]
        %v825 = vld [vmem:[%s193 + $0x1278] sm:$0xff]
        %v826 = vld [vmem:[%s193 + $0x1280] sm:$0xff]
        %v827 = vld [vmem:[%s193 + $0x1288] sm:$0xff]
        %v828 = vld [vmem:[%s193 + $0x1290] sm:$0xff]
        %v829 = vld [vmem:[%s193 + $0x1298] sm:$0xff]
        %v830 = vld [vmem:[%s193 + $0x12a0] sm:$0xff]
        %v831 = vld [vmem:[%s193 + $0x12a8] sm:$0xff]
        %v832 = vld [vmem:[%s193 + $0x12b0] sm:$0xff]
        %v833 = vld [vmem:[%s193 + $0x12b8] sm:$0xff]
        %v834 = vld [vmem:[%s193 + $0x12c0] sm:$0xff]
        %v835 = vld [vmem:[%s193 + $0x12c8] sm:$0xff]
        %v836 = vld [vmem:[%s193 + $0x12d0] sm:$0xff]
        %v837 = vld [vmem:[%s193 + $0x12d8] sm:$0xff]
        %v838 = vld [vmem:[%s193 + $0x12e0] sm:$0xff]
        %v839 = vld [vmem:[%s193 + $0x12e8] sm:$0xff]
        %v840 = vld [vmem:[%s193 + $0x12f0] sm:$0xff]
        %v841 = vld [vmem:[%s193 + $0x12f8] sm:$0xff]
        %v842 = vld [vmem:[%s193 + $0x1300] sm:$0xff]
        %v843 = vld [vmem:[%s193 + $0x1308] sm:$0xff]
        %v844 = vld [vmem:[%s193 + $0x1310] sm:$0xff]
        %v845 = vld [vmem:[%s193 + $0x1318] sm:$0xff]
        %v846 = vld [vmem:[%s193 + $0x1320] sm:$0xff]
        %v847 = vld [vmem:[%s193 + $0x1328] sm:$0xff]
        %v848 = vld [vmem:[%s193 + $0x1330] sm:$0xff]
        %v849 = vld [vmem:[%s193 + $0x1338] sm:$0xff]
        %v850 = vld [vmem:[%s193 + $0x1340] sm:$0xff]
        %v851 = vld [vmem:[%s193 + $0x1348] sm:$0xff]
        %v852 = vld [vmem:[%s193 + $0x1350] sm:$0xff]
        %v853 = vld [vmem:[%s193 + $0x1358] sm:$0xff]
        %v854 = vld [vmem:[%s193 + $0x1360] sm:$0xff]
        %v855 = vld [vmem:[%s193 + $0x1368] sm:$0xff]
        %v856 = vld [vmem:[%s193 + $0x1370] sm:$0xff]
        %v857 = vld [vmem:[%s193 + $0x1378] sm:$0xff]
        %v858 = vld [vmem:[%s193 + $0x1380] sm:$0xff]
        %v859 = vld [vmem:[%s193 + $0x1388] sm:$0xff]
        %v860 = vld [vmem:[%s193 + $0x1390] sm:$0xff]
        %v861 = vld [vmem:[%s193 + $0x1398] sm:$0xff]
        %v862 = vld [vmem:[%s193 + $0x13a0] sm:$0xff]
        %v863 = vld [vmem:[%s193 + $0x13a8] sm:$0xff]
        %v864 = vld [vmem:[%s193 + $0x13b0] sm:$0xff]
        %v865 = vld [vmem:[%s193 + $0x13b8] sm:$0xff]
        %v866 = vld [vmem:[%s193 + $0x13c0] sm:$0xff]
        %v867 = vld [vmem:[%s193 + $0x13c8] sm:$0xff]
        %v868 = vld [vmem:[%s193 + $0x13d0] sm:$0xff]
        %v869 = vld [vmem:[%s193 + $0x13d8] sm:$0xff]
        %v870 = vld [vmem:[%s193 + $0x13e0] sm:$0xff]
        %v871 = vld [vmem:[%s193 + $0x13e8] sm:$0xff]
        %v872 = vld [vmem:[%s193 + $0x13f0] sm:$0xff]
        %v873 = vld [vmem:[%s193 + $0x13f8] sm:$0xff]
        %v874 = vld [vmem:[%s193 + $0x1400] sm:$0xff]
        %v875 = vld [vmem:[%s193 + $0x1408] sm:$0xff]
        %v876 = vld [vmem:[%s193 + $0x1410] sm:$0xff]
        %v877 = vld [vmem:[%s193 + $0x1418] sm:$0xff]
        %v878 = vld [vmem:[%s193 + $0x1420] sm:$0xff]
        %v879 = vld [vmem:[%s193 + $0x1428] sm:$0xff]
        %v880 = vld [vmem:[%s193 + $0x1430] sm:$0xff]
        %v881 = vld [vmem:[%s193 + $0x1438] sm:$0xff]
        %v882 = vld [vmem:[%s193 + $0x1440] sm:$0xff]
        %v883 = vld [vmem:[%s193 + $0x1448] sm:$0xff]
        %v884 = vld [vmem:[%s193 + $0x1450] sm:$0xff]
        %v885 = vld [vmem:[%s193 + $0x1458] sm:$0xff]
        %v886 = vld [vmem:[%s193 + $0x1460] sm:$0xff]
        %v887 = vld [vmem:[%s193 + $0x1468] sm:$0xff]
        %v888 = vld [vmem:[%s193 + $0x1470] sm:$0xff]
        %v889 = vld [vmem:[%s193 + $0x1478] sm:$0xff]
        %v890 = vld [vmem:[%s193 + $0x1480] sm:$0xff]
        %v891 = vld [vmem:[%s193 + $0x1488] sm:$0xff]
        %v892 = vld [vmem:[%s193 + $0x1490] sm:$0xff]
        %v893 = vld [vmem:[%s193 + $0x1498] sm:$0xff]
        %v894 = vld [vmem:[%s193 + $0x14a0] sm:$0xff]
        %v895 = vld [vmem:[%s193 + $0x14a8] sm:$0xff]
        %v896 = vld [vmem:[%s193 + $0x14b0] sm:$0xff]
        %v897 = vld [vmem:[%s193 + $0x14b8] sm:$0xff]
        %v898 = vld [vmem:[%s193 + $0x14c0] sm:$0xff]
        %v899 = vld [vmem:[%s193 + $0x14c8] sm:$0xff]
        %v900 = vld [vmem:[%s193 + $0x14d0] sm:$0xff]
        %v901 = vld [vmem:[%s193 + $0x14d8] sm:$0xff]
        %v902 = vld [vmem:[%s193 + $0x14e0] sm:$0xff]
        %v903 = vld [vmem:[%s193 + $0x14e8] sm:$0xff]
        %v904 = vld [vmem:[%s193 + $0x14f0] sm:$0xff]
        %v905 = vld [vmem:[%s193 + $0x14f8] sm:$0xff]
        %v906 = vld [vmem:[%s193 + $0x1500] sm:$0xff]
        %v907 = vld [vmem:[%s193 + $0x1508] sm:$0xff]
        %v908 = vld [vmem:[%s193 + $0x1510] sm:$0xff]
        %v909 = vld [vmem:[%s193 + $0x1518] sm:$0xff]
        %v910 = vld [vmem:[%s193 + $0x1520] sm:$0xff]
        %v911 = vld [vmem:[%s193 + $0x1528] sm:$0xff]
        %v912 = vld [vmem:[%s193 + $0x1530] sm:$0xff]
        %v913 = vld [vmem:[%s193 + $0x1538] sm:$0xff]
        %v914 = vld [vmem:[%s193 + $0x1540] sm:$0xff]
        %v915 = vld [vmem:[%s193 + $0x1548] sm:$0xff]
        %v916 = vld [vmem:[%s193 + $0x1550] sm:$0xff]
        %v917 = vld [vmem:[%s193 + $0x1558] sm:$0xff]
        %v918 = vld [vmem:[%s193 + $0x1560] sm:$0xff]
        %v919 = vld [vmem:[%s193 + $0x1568] sm:$0xff]
        %v920 = vld [vmem:[%s193 + $0x1570] sm:$0xff]
        %v921 = vld [vmem:[%s193 + $0x1578] sm:$0xff]
        %v922 = vld [vmem:[%s193 + $0x1580] sm:$0xff]
        %v923 = vld [vmem:[%s193 + $0x1588] sm:$0xff]
        %v924 = vld [vmem:[%s193 + $0x1590] sm:$0xff]
        %v925 = vld [vmem:[%s193 + $0x1598] sm:$0xff]
        %v926 = vld [vmem:[%s193 + $0x15a0] sm:$0xff]
        %v927 = vld [vmem:[%s193 + $0x15a8] sm:$0xff]
        %v928 = vld [vmem:[%s193 + $0x15b0] sm:$0xff]
        %v929 = vld [vmem:[%s193 + $0x15b8] sm:$0xff]
        %v930 = vld [vmem:[%s193 + $0x15c0] sm:$0xff]
        %v931 = vld [vmem:[%s193 + $0x15c8] sm:$0xff]
        %v932 = vld [vmem:[%s193 + $0x15d0] sm:$0xff]
        %v933 = vld [vmem:[%s193 + $0x15d8] sm:$0xff]
        %v934 = vld [vmem:[%s193 + $0x15e0] sm:$0xff]
        %v935 = vld [vmem:[%s193 + $0x15e8] sm:$0xff]
        %v936 = vld [vmem:[%s193 + $0x15f0] sm:$0xff]
        %v937 = vld [vmem:[%s193 + $0x15f8] sm:$0xff]
        %v938 = vld [vmem:[%s193 + $0x1600] sm:$0xff]
        %v939 = vld [vmem:[%s193 + $0x1608] sm:$0xff]
        %v940 = vld [vmem:[%s193 + $0x1610] sm:$0xff]
        %v941 = vld [vmem:[%s193 + $0x1618] sm:$0xff]
        %v942 = vld [vmem:[%s193 + $0x1620] sm:$0xff]
        %v943 = vld [vmem:[%s193 + $0x1628] sm:$0xff]
        %v944 = vld [vmem:[%s193 + $0x1630] sm:$0xff]
        %v945 = vld [vmem:[%s193 + $0x1638] sm:$0xff]
        %v946 = vld [vmem:[%s193 + $0x1640] sm:$0xff]
        %v947 = vld [vmem:[%s193 + $0x1648] sm:$0xff]
        %v948 = vld [vmem:[%s193 + $0x1650] sm:$0xff]
        %v949 = vld [vmem:[%s193 + $0x1658] sm:$0xff]
        %v950 = vld [vmem:[%s193 + $0x1660] sm:$0xff]
        %v951 = vld [vmem:[%s193 + $0x1668] sm:$0xff]
        %v952 = vld [vmem:[%s193 + $0x1670] sm:$0xff]
        %v953 = vld [vmem:[%s193 + $0x1678] sm:$0xff]
        %v954 = vld [vmem:[%s193 + $0x1680] sm:$0xff]
        %v955 = vld [vmem:[%s193 + $0x1688] sm:$0xff]
        %v956 = vld [vmem:[%s193 + $0x1690] sm:$0xff]
        %v957 = vld [vmem:[%s193 + $0x1698] sm:$0xff]
        %v958 = vld [vmem:[%s193 + $0x16a0] sm:$0xff]
        %v959 = vld [vmem:[%s193 + $0x16a8] sm:$0xff]
        %v960 = vld [vmem:[%s193 + $0x16b0] sm:$0xff]
        %v961 = vld [vmem:[%s193 + $0x16b8] sm:$0xff]
        %v962 = vld [vmem:[%s193 + $0x16c0] sm:$0xff]
        %v963 = vld [vmem:[%s193 + $0x16c8] sm:$0xff]
        %v964 = vld [vmem:[%s193 + $0x16d0] sm:$0xff]
        %v965 = vld [vmem:[%s193 + $0x16d8] sm:$0xff]
        %v966 = vld [vmem:[%s193 + $0x16e0] sm:$0xff]
        %v967 = vld [vmem:[%s193 + $0x16e8] sm:$0xff]
        %v968 = vld [vmem:[%s193 + $0x16f0] sm:$0xff]
        %v969 = vld [vmem:[%s193 + $0x16f8] sm:$0xff]
        %v970 = vld [vmem:[%s193 + $0x1700] sm:$0xff]
        %v971 = vld [vmem:[%s193 + $0x1708] sm:$0xff]
        %v972 = vld [vmem:[%s193 + $0x1710] sm:$0xff]
        %v973 = vld [vmem:[%s193 + $0x1718] sm:$0xff]
        %v974 = vld [vmem:[%s193 + $0x1720] sm:$0xff]
        %v975 = vld [vmem:[%s193 + $0x1728] sm:$0xff]
        %v976 = vld [vmem:[%s193 + $0x1730] sm:$0xff]
        %v977 = vld [vmem:[%s193 + $0x1738] sm:$0xff]
        %v978 = vld [vmem:[%s193 + $0x1740] sm:$0xff]
        %v979 = vld [vmem:[%s193 + $0x1748] sm:$0xff]
        %v980 = vld [vmem:[%s193 + $0x1750] sm:$0xff]
        %v981 = vld [vmem:[%s193 + $0x1758] sm:$0xff]
        %v982 = vld [vmem:[%s193 + $0x1760] sm:$0xff]
        %v983 = vld [vmem:[%s193 + $0x1768] sm:$0xff]
        %v984 = vld [vmem:[%s193 + $0x1770] sm:$0xff]
        %v985 = vld [vmem:[%s193 + $0x1778] sm:$0xff]
        %v986 = vld [vmem:[%s193 + $0x1780] sm:$0xff]
        %v987 = vld [vmem:[%s193 + $0x1788] sm:$0xff]
        %v988 = vld [vmem:[%s193 + $0x1790] sm:$0xff]
        %v989 = vld [vmem:[%s193 + $0x1798] sm:$0xff]
        %v990 = vld [vmem:[%s193 + $0x17a0] sm:$0xff]
        %v991 = vld [vmem:[%s193 + $0x17a8] sm:$0xff]
        %v992 = vld [vmem:[%s193 + $0x17b0] sm:$0xff]
        %v993 = vld [vmem:[%s193 + $0x17b8] sm:$0xff]
        %v994 = vld [vmem:[%s193 + $0x17c0] sm:$0xff]
        %v995 = vld [vmem:[%s193 + $0x17c8] sm:$0xff]
        %v996 = vld [vmem:[%s193 + $0x17d0] sm:$0xff]
        %v997 = vld [vmem:[%s193 + $0x17d8] sm:$0xff]
        %v998 = vld [vmem:[%s193 + $0x17e0] sm:$0xff]
        %v999 = vld [vmem:[%s193 + $0x17e8] sm:$0xff]
        %v1000 = vld [vmem:[%s193 + $0x17f0] sm:$0xff]
        %v1001 = vld [vmem:[%s193 + $0x17f8] sm:$0xff]
        %v1002 = vld [vmem:[%s193 + $0x1800] sm:$0xff]
        %v1003 = vld [vmem:[%s193 + $0x1808] sm:$0xff]
        %v1004 = vld [vmem:[%s193 + $0x1810] sm:$0xff]
        %v1005 = vld [vmem:[%s193 + $0x1818] sm:$0xff]
        %v1006 = vld [vmem:[%s193 + $0x1820] sm:$0xff]
        %v1007 = vld [vmem:[%s193 + $0x1828] sm:$0xff]
        %v1008 = vld [vmem:[%s193 + $0x1830] sm:$0xff]
        %v1009 = vld [vmem:[%s193 + $0x1838] sm:$0xff]
        %v1010 = vld [vmem:[%s193 + $0x1840] sm:$0xff]
        %v1011 = vld [vmem:[%s193 + $0x1848] sm:$0xff]
        %v1012 = vld [vmem:[%s193 + $0x1850] sm:$0xff]
        %v1013 = vld [vmem:[%s193 + $0x1858] sm:$0xff]
        %v1014 = vld [vmem:[%s193 + $0x1860] sm:$0xff]
        %v1015 = vld [vmem:[%s193 + $0x1868] sm:$0xff]
        %v1016 = vld [vmem:[%s193 + $0x1870] sm:$0xff]
        %v1017 = vld [vmem:[%s193 + $0x1878] sm:$0xff]
        %v1018 = vld [vmem:[%s193 + $0x1880] sm:$0xff]
        %v1019 = vld [vmem:[%s193 + $0x1888] sm:$0xff]
        %v1020 = vld [vmem:[%s193 + $0x1890] sm:$0xff]
        %v1021 = vld [vmem:[%s193 + $0x1898] sm:$0xff]
        %v1022 = vld [vmem:[%s193 + $0x18a0] sm:$0xff]
        %v1023 = vld [vmem:[%s193 + $0x18a8] sm:$0xff]
        %v1024 = vld [vmem:[%s193 + $0x18b0] sm:$0xff]
        %v1025 = vld [vmem:[%s193 + $0x18b8] sm:$0xff]
        %v1026 = vld [vmem:[%s193 + $0x18c0] sm:$0xff]
        %v1027 = vld [vmem:[%s193 + $0x18c8] sm:$0xff]
        %v1028 = vld [vmem:[%s193 + $0x18d0] sm:$0xff]
        %v1029 = vld [vmem:[%s193 + $0x18d8] sm:$0xff]
        %v1030 = vld [vmem:[%s193 + $0x18e0] sm:$0xff]
        %v1031 = vld [vmem:[%s193 + $0x18e8] sm:$0xff]
        %v1032 = vld [vmem:[%s193 + $0x18f0] sm:$0xff]
        %v1033 = vld [vmem:[%s193 + $0x18f8] sm:$0xff]
        %v1034 = vld [vmem:[%s193 + $0x1900] sm:$0xff]
        %v1035 = vld [vmem:[%s193 + $0x1908] sm:$0xff]
        %v1036 = vld [vmem:[%s193 + $0x1910] sm:$0xff]
        %v1037 = vld [vmem:[%s193 + $0x1918] sm:$0xff]
        %v1038 = vld [vmem:[%s193 + $0x1920] sm:$0xff]
        %v1039 = vld [vmem:[%s193 + $0x1928] sm:$0xff]
        %v1040 = vld [vmem:[%s193 + $0x1930] sm:$0xff]
        %v1041 = vld [vmem:[%s193 + $0x1938] sm:$0xff]
        %v1042 = vld [vmem:[%s193 + $0x1940] sm:$0xff]
        %v1043 = vld [vmem:[%s193 + $0x1948] sm:$0xff]
        %v1044 = vld [vmem:[%s193 + $0x1950] sm:$0xff]
        %v1045 = vld [vmem:[%s193 + $0x1958] sm:$0xff]
        %v1046 = vld [vmem:[%s193 + $0x1960] sm:$0xff]
        %v1047 = vld [vmem:[%s193 + $0x1968] sm:$0xff]
        %v1048 = vld [vmem:[%s193 + $0x1970] sm:$0xff]
        %v1049 = vld [vmem:[%s193 + $0x1978] sm:$0xff]
        %v1050 = vld [vmem:[%s193 + $0x1980] sm:$0xff]
        %v1051 = vld [vmem:[%s193 + $0x1988] sm:$0xff]
        %v1052 = vld [vmem:[%s193 + $0x1990] sm:$0xff]
        %v1053 = vld [vmem:[%s193 + $0x1998] sm:$0xff]
        %v1054 = vld [vmem:[%s193 + $0x19a0] sm:$0xff]
        %v1055 = vld [vmem:[%s193 + $0x19a8] sm:$0xff]
        %v1056 = vld [vmem:[%s193 + $0x19b0] sm:$0xff]
        %v1057 = vld [vmem:[%s193 + $0x19b8] sm:$0xff]
        %v1058 = vld [vmem:[%s193 + $0x19c0] sm:$0xff]
        %v1059 = vld [vmem:[%s193 + $0x19c8] sm:$0xff]
        %v1060 = vld [vmem:[%s193 + $0x19d0] sm:$0xff]
        %v1061 = vld [vmem:[%s193 + $0x19d8] sm:$0xff]
        %v1062 = vld [vmem:[%s193 + $0x19e0] sm:$0xff]
        %v1063 = vld [vmem:[%s193 + $0x19e8] sm:$0xff]
        %v1064 = vld [vmem:[%s193 + $0x19f0] sm:$0xff]
        %v1065 = vld [vmem:[%s193 + $0x19f8] sm:$0xff]
        %v1066 = vld [vmem:[%s193 + $0x1a00] sm:$0xff]
        %v1067 = vld [vmem:[%s193 + $0x1a08] sm:$0xff]
        %v1068 = vld [vmem:[%s193 + $0x1a10] sm:$0xff]
        %v1069 = vld [vmem:[%s193 + $0x1a18] sm:$0xff]
        %v1070 = vld [vmem:[%s193 + $0x1a20] sm:$0xff]
        %v1071 = vld [vmem:[%s193 + $0x1a28] sm:$0xff]
        %v1072 = vld [vmem:[%s193 + $0x1a30] sm:$0xff]
        %v1073 = vld [vmem:[%s193 + $0x1a38] sm:$0xff]
        %v1074 = vld [vmem:[%s193 + $0x1a40] sm:$0xff]
        %v1075 = vld [vmem:[%s193 + $0x1a48] sm:$0xff]
        %v1076 = vld [vmem:[%s193 + $0x1a50] sm:$0xff]
        %v1077 = vld [vmem:[%s193 + $0x1a58] sm:$0xff]
        %v1078 = vld [vmem:[%s193 + $0x1a60] sm:$0xff]
        %v1079 = vld [vmem:[%s193 + $0x1a68] sm:$0xff]
        %v1080 = vld [vmem:[%s193 + $0x1a70] sm:$0xff]
        %v1081 = vld [vmem:[%s193 + $0x1a78] sm:$0xff]
        %v1082 = vld [vmem:[%s193 + $0x1a80] sm:$0xff]
        %v1083 = vld [vmem:[%s193 + $0x1a88] sm:$0xff]
        %v1084 = vld [vmem:[%s193 + $0x1a90] sm:$0xff]
        %v1085 = vld [vmem:[%s193 + $0x1a98] sm:$0xff]
        %v1086 = vld [vmem:[%s193 + $0x1aa0] sm:$0xff]
        %v1087 = vld [vmem:[%s193 + $0x1aa8] sm:$0xff]
        %v1088 = vld [vmem:[%s193 + $0x1ab0] sm:$0xff]
        %v1089 = vld [vmem:[%s193 + $0x1ab8] sm:$0xff]
        %v1090 = vld [vmem:[%s193 + $0x1ac0] sm:$0xff]
        %v1091 = vld [vmem:[%s193 + $0x1ac8] sm:$0xff]
        %v1092 = vld [vmem:[%s193 + $0x1ad0] sm:$0xff]
        %v1093 = vld [vmem:[%s193 + $0x1ad8] sm:$0xff]
        %v1094 = vld [vmem:[%s193 + $0x1ae0] sm:$0xff]
        %v1095 = vld [vmem:[%s193 + $0x1ae8] sm:$0xff]
        %v1096 = vld [vmem:[%s193 + $0x1af0] sm:$0xff]
        %v1097 = vld [vmem:[%s193 + $0x1af8] sm:$0xff]
        %v1098 = vld [vmem:[%s193 + $0x1b00] sm:$0xff]
        %v1099 = vld [vmem:[%s193 + $0x1b08] sm:$0xff]
        %v1100 = vld [vmem:[%s193 + $0x1b10] sm:$0xff]
        %v1101 = vld [vmem:[%s193 + $0x1b18] sm:$0xff]
        %v1102 = vld [vmem:[%s193 + $0x1b20] sm:$0xff]
        %v1103 = vld [vmem:[%s193 + $0x1b28] sm:$0xff]
        %v1104 = vld [vmem:[%s193 + $0x1b30] sm:$0xff]
        %v1105 = vld [vmem:[%s193 + $0x1b38] sm:$0xff]
        %v1106 = vld [vmem:[%s193 + $0x1b40] sm:$0xff]
        %v1107 = vld [vmem:[%s193 + $0x1b48] sm:$0xff]
        %v1108 = vld [vmem:[%s193 + $0x1b50] sm:$0xff]
        %v1109 = vld [vmem:[%s193 + $0x1b58] sm:$0xff]
        %v1110 = vld [vmem:[%s193 + $0x1b60] sm:$0xff]
        %v1111 = vld [vmem:[%s193 + $0x1b68] sm:$0xff]
        %v1112 = vld [vmem:[%s193 + $0x1b70] sm:$0xff]
        %v1113 = vld [vmem:[%s193 + $0x1b78] sm:$0xff]
        %v1114 = vld [vmem:[%s193 + $0x1b80] sm:$0xff]
        %v1115 = vld [vmem:[%s193 + $0x1b88] sm:$0xff]
        %v1116 = vld [vmem:[%s193 + $0x1b90] sm:$0xff]
        %v1117 = vld [vmem:[%s193 + $0x1b98] sm:$0xff]
        %v1118 = vld [vmem:[%s193 + $0x1ba0] sm:$0xff]
        %v1119 = vld [vmem:[%s193 + $0x1ba8] sm:$0xff]
        %v1120 = vld [vmem:[%s193 + $0x1bb0] sm:$0xff]
        %v1121 = vld [vmem:[%s193 + $0x1bb8] sm:$0xff]
        %v1122 = vld [vmem:[%s193 + $0x1bc0] sm:$0xff]
        %v1123 = vld [vmem:[%s193 + $0x1bc8] sm:$0xff]
        %v1124 = vld [vmem:[%s193 + $0x1bd0] sm:$0xff]
        %v1125 = vld [vmem:[%s193 + $0x1bd8] sm:$0xff]
        %v1126 = vld [vmem:[%s193 + $0x1be0] sm:$0xff]
        %v1127 = vld [vmem:[%s193 + $0x1be8] sm:$0xff]
        %v1128 = vld [vmem:[%s193 + $0x1bf0] sm:$0xff]
        %v1129 = vld [vmem:[%s193 + $0x1bf8] sm:$0xff]
        %v1130 = vld [vmem:[%s193 + $0x1c00] sm:$0xff]
        %v1131 = vld [vmem:[%s193 + $0x1c08] sm:$0xff]
        %v1132 = vld [vmem:[%s193 + $0x1c10] sm:$0xff]
        %v1133 = vld [vmem:[%s193 + $0x1c18] sm:$0xff]
        %v1134 = vld [vmem:[%s193 + $0x1c20] sm:$0xff]
        %v1135 = vld [vmem:[%s193 + $0x1c28] sm:$0xff]
        %v1136 = vld [vmem:[%s193 + $0x1c30] sm:$0xff]
        %v1137 = vld [vmem:[%s193 + $0x1c38] sm:$0xff]
        %v1138 = vld [vmem:[%s193 + $0x1c40] sm:$0xff]
        %v1139 = vld [vmem:[%s193 + $0x1c48] sm:$0xff]
        %v1140 = vld [vmem:[%s193 + $0x1c50] sm:$0xff]
        %v1141 = vld [vmem:[%s193 + $0x1c58] sm:$0xff]
        %v1142 = vld [vmem:[%s193 + $0x1c60] sm:$0xff]
        %v1143 = vld [vmem:[%s193 + $0x1c68] sm:$0xff]
        %v1144 = vld [vmem:[%s193 + $0x1c70] sm:$0xff]
        %v1145 = vld [vmem:[%s193 + $0x1c78] sm:$0xff]
        %v1146 = vld [vmem:[%s193 + $0x1c80] sm:$0xff]
        %v1147 = vld [vmem:[%s193 + $0x1c88] sm:$0xff]
        %v1148 = vld [vmem:[%s193 + $0x1c90] sm:$0xff]
        %v1149 = vld [vmem:[%s193 + $0x1c98] sm:$0xff]
        %v1150 = vld [vmem:[%s193 + $0x1ca0] sm:$0xff]
        %v1151 = vld [vmem:[%s193 + $0x1ca8] sm:$0xff]
        %v1152 = vld [vmem:[%s193 + $0x1cb0] sm:$0xff]
        %v1153 = vld [vmem:[%s193 + $0x1cb8] sm:$0xff]
        %v1154 = vld [vmem:[%s193 + $0x1cc0] sm:$0xff]
        %v1155 = vld [vmem:[%s193 + $0x1cc8] sm:$0xff]
        %v1156 = vld [vmem:[%s193 + $0x1cd0] sm:$0xff]
        %v1157 = vld [vmem:[%s193 + $0x1cd8] sm:$0xff]
        %v1158 = vld [vmem:[%s193 + $0x1ce0] sm:$0xff]
        %v1159 = vld [vmem:[%s193 + $0x1ce8] sm:$0xff]
        %v1160 = vld [vmem:[%s193 + $0x1cf0] sm:$0xff]
        %v1161 = vld [vmem:[%s193 + $0x1cf8] sm:$0xff]
        %v1162 = vld [vmem:[%s193 + $0x1d00] sm:$0xff]
        %v1163 = vld [vmem:[%s193 + $0x1d08] sm:$0xff]
        %v1164 = vld [vmem:[%s193 + $0x1d10] sm:$0xff]
        %v1165 = vld [vmem:[%s193 + $0x1d18] sm:$0xff]
        %v1166 = vld [vmem:[%s193 + $0x1d20] sm:$0xff]
        %v1167 = vld [vmem:[%s193 + $0x1d28] sm:$0xff]
        %v1168 = vld [vmem:[%s193 + $0x1d30] sm:$0xff]
        %v1169 = vld [vmem:[%s193 + $0x1d38] sm:$0xff]
        %v1170 = vld [vmem:[%s193 + $0x1d40] sm:$0xff]
        %v1171 = vld [vmem:[%s193 + $0x1d48] sm:$0xff]
        %v1172 = vld [vmem:[%s193 + $0x1d50] sm:$0xff]
        %v1173 = vld [vmem:[%s193 + $0x1d58] sm:$0xff]
        %v1174 = vld [vmem:[%s193 + $0x1d60] sm:$0xff]
        %v1175 = vld [vmem:[%s193 + $0x1d68] sm:$0xff]
        %v1176 = vld [vmem:[%s193 + $0x1d70] sm:$0xff]
        %v1177 = vld [vmem:[%s193 + $0x1d78] sm:$0xff]
        %v1178 = vld [vmem:[%s193 + $0x1d80] sm:$0xff]
        %v1179 = vld [vmem:[%s193 + $0x1d88] sm:$0xff]
        %v1180 = vld [vmem:[%s193 + $0x1d90] sm:$0xff]
        %v1181 = vld [vmem:[%s193 + $0x1d98] sm:$0xff]
        %v1182 = vld [vmem:[%s193 + $0x1da0] sm:$0xff]
        %v1183 = vld [vmem:[%s193 + $0x1da8] sm:$0xff]
        %v1184 = vld [vmem:[%s193 + $0x1db0] sm:$0xff]
        %v1185 = vld [vmem:[%s193 + $0x1db8] sm:$0xff]
        %v1186 = vld [vmem:[%s193 + $0x1dc0] sm:$0xff]
        %v1187 = vld [vmem:[%s193 + $0x1dc8] sm:$0xff]
        %v1188 = vld [vmem:[%s193 + $0x1dd0] sm:$0xff]
        %v1189 = vld [vmem:[%s193 + $0x1dd8] sm:$0xff]
        %v1190 = vld [vmem:[%s193 + $0x1de0] sm:$0xff]
        %v1191 = vld [vmem:[%s193 + $0x1de8] sm:$0xff]
        %v1192 = vld [vmem:[%s193 + $0x1df0] sm:$0xff]
        %v1193 = vld [vmem:[%s193 + $0x1df8] sm:$0xff]
        %v1194 = vld [vmem:[%s193 + $0x1e00] sm:$0xff]
        %v1195 = vld [vmem:[%s193 + $0x1e08] sm:$0xff]
        %v1196 = vld [vmem:[%s193 + $0x1e10] sm:$0xff]
        %v1197 = vld [vmem:[%s193 + $0x1e18] sm:$0xff]
        %v1198 = vld [vmem:[%s193 + $0x1e20] sm:$0xff]
        %v1199 = vld [vmem:[%s193 + $0x1e28] sm:$0xff]
        %v1200 = vld [vmem:[%s193 + $0x1e30] sm:$0xff]
        %v1201 = vld [vmem:[%s193 + $0x1e38] sm:$0xff]
        %v1202 = vld [vmem:[%s193 + $0x1e40] sm:$0xff]
        %v1203 = vld [vmem:[%s193 + $0x1e48] sm:$0xff]
        %v1204 = vld [vmem:[%s193 + $0x1e50] sm:$0xff]
        %v1205 = vld [vmem:[%s193 + $0x1e58] sm:$0xff]
        %v1206 = vld [vmem:[%s193 + $0x1e60] sm:$0xff]
        %v1207 = vld [vmem:[%s193 + $0x1e68] sm:$0xff]
        %v1208 = vld [vmem:[%s193 + $0x1e70] sm:$0xff]
        %v1209 = vld [vmem:[%s193 + $0x1e78] sm:$0xff]
        %v1210 = vld [vmem:[%s193 + $0x1e80] sm:$0xff]
        %v1211 = vld [vmem:[%s193 + $0x1e88] sm:$0xff]
        %v1212 = vld [vmem:[%s193 + $0x1e90] sm:$0xff]
        %v1213 = vld [vmem:[%s193 + $0x1e98] sm:$0xff]
        %v1214 = vld [vmem:[%s193 + $0x1ea0] sm:$0xff]
        %v1215 = vld [vmem:[%s193 + $0x1ea8] sm:$0xff]
        %v1216 = vld [vmem:[%s193 + $0x1eb0] sm:$0xff]
        %v1217 = vld [vmem:[%s193 + $0x1eb8] sm:$0xff]
        %v1218 = vld [vmem:[%s193 + $0x1ec0] sm:$0xff]
        %v1219 = vld [vmem:[%s193 + $0x1ec8] sm:$0xff]
        %v1220 = vld [vmem:[%s193 + $0x1ed0] sm:$0xff]
        %v1221 = vld [vmem:[%s193 + $0x1ed8] sm:$0xff]
        %v1222 = vld [vmem:[%s193 + $0x1ee0] sm:$0xff]
        %v1223 = vld [vmem:[%s193 + $0x1ee8] sm:$0xff]
        %v1224 = vld [vmem:[%s193 + $0x1ef0] sm:$0xff]
        %v1225 = vld [vmem:[%s193 + $0x1ef8] sm:$0xff]
        %v1226 = vld [vmem:[%s193 + $0x1f00] sm:$0xff]
        %v1227 = vld [vmem:[%s193 + $0x1f08] sm:$0xff]
        %v1228 = vld [vmem:[%s193 + $0x1f10] sm:$0xff]
        %v1229 = vld [vmem:[%s193 + $0x1f18] sm:$0xff]
        %v1230 = vld [vmem:[%s193 + $0x1f20] sm:$0xff]
        %v1231 = vld [vmem:[%s193 + $0x1f28] sm:$0xff]
        %v1232 = vld [vmem:[%s193 + $0x1f30] sm:$0xff]
        %v1233 = vld [vmem:[%s193 + $0x1f38] sm:$0xff]
        %v1234 = vld [vmem:[%s193 + $0x1f40] sm:$0xff]
        %v1235 = vld [vmem:[%s193 + $0x1f48] sm:$0xff]
        %v1236 = vld [vmem:[%s193 + $0x1f50] sm:$0xff]
        %v1237 = vld [vmem:[%s193 + $0x1f58] sm:$0xff]
        %v1238 = vld [vmem:[%s193 + $0x1f60] sm:$0xff]
        %v1239 = vld [vmem:[%s193 + $0x1f68] sm:$0xff]
        %v1240 = vld [vmem:[%s193 + $0x1f70] sm:$0xff]
        %v1241 = vld [vmem:[%s193 + $0x1f78] sm:$0xff]
        %v1242 = vld [vmem:[%s193 + $0x1f80] sm:$0xff]
        %v1243 = vld [vmem:[%s193 + $0x1f88] sm:$0xff]
        %v1244 = vld [vmem:[%s193 + $0x1f90] sm:$0xff]
        %v1245 = vld [vmem:[%s193 + $0x1f98] sm:$0xff]
        %v1246 = vld [vmem:[%s193 + $0x1fa0] sm:$0xff]
        %v1247 = vld [vmem:[%s193 + $0x1fa8] sm:$0xff]
        %v1248 = vld [vmem:[%s193 + $0x1fb0] sm:$0xff]
        %v1249 = vld [vmem:[%s193 + $0x1fb8] sm:$0xff]
        %v1250 = vld [vmem:[%s193 + $0x1fc0] sm:$0xff]
        %v1251 = vld [vmem:[%s193 + $0x1fc8] sm:$0xff]
        %v1252 = vld [vmem:[%s193 + $0x1fd0] sm:$0xff]
        %v1253 = vld [vmem:[%s193 + $0x1fd8] sm:$0xff]
        %v1254 = vld [vmem:[%s193 + $0x1fe0] sm:$0xff]
        %v1255 = vld [vmem:[%s193 + $0x1fe8] sm:$0xff]
        %v1256 = vld [vmem:[%s193 + $0x1ff0] sm:$0xff]
        %v1257 = vld [vmem:[%s193 + $0x1ff8] sm:$0xff]
        %v1258 = vld [vmem:[%s193 + $0x2000] sm:$0xff]
        %v1259 = vld [vmem:[%s193 + $0x2008] sm:$0xff]
        %v1260 = vld [vmem:[%s193 + $0x2010] sm:$0xff]
        %v1261 = vld [vmem:[%s193 + $0x2018] sm:$0xff]
        %v1262 = vld [vmem:[%s193 + $0x2020] sm:$0xff]
        %v1263 = vld [vmem:[%s193 + $0x2028] sm:$0xff]
        %v1264 = vld [vmem:[%s193 + $0x2030] sm:$0xff]
        %v1265 = vld [vmem:[%s193 + $0x2038] sm:$0xff]
        %v1266 = vld [vmem:[%s193 + $0x2040] sm:$0xff]
        %v1267 = vld [vmem:[%s193 + $0x2048] sm:$0xff]
        %v1268 = vld [vmem:[%s193 + $0x2050] sm:$0xff]
        %v1269 = vld [vmem:[%s193 + $0x2058] sm:$0xff]
        %v1270 = vld [vmem:[%s193 + $0x2060] sm:$0xff]
        %v1271 = vld [vmem:[%s193 + $0x2068] sm:$0xff]
        %v1272 = vld [vmem:[%s193 + $0x2070] sm:$0xff]
        %v1273 = vld [vmem:[%s193 + $0x2078] sm:$0xff]
        %v1274 = vld [vmem:[%s193 + $0x2080] sm:$0xff]
        %v1275 = vld [vmem:[%s193 + $0x2088] sm:$0xff]
        %v1276 = vld [vmem:[%s193 + $0x2090] sm:$0xff]
        %v1277 = vld [vmem:[%s193 + $0x2098] sm:$0xff]
        %v1278 = vld [vmem:[%s193 + $0x20a0] sm:$0xff]
        %v1279 = vld [vmem:[%s193 + $0x20a8] sm:$0xff]
        %v1280 = vld [vmem:[%s193 + $0x20b0] sm:$0xff]
        %v1281 = vld [vmem:[%s193 + $0x20b8] sm:$0xff]
        %v1282 = vld [vmem:[%s193 + $0x20c0] sm:$0xff]
        %v1283 = vld [vmem:[%s193 + $0x20c8] sm:$0xff]
        %v1284 = vld [vmem:[%s193 + $0x20d0] sm:$0xff]
        %v1285 = vld [vmem:[%s193 + $0x20d8] sm:$0xff]
        %v1286 = vld [vmem:[%s193 + $0x20e0] sm:$0xff]
        %v1287 = vld [vmem:[%s193 + $0x20e8] sm:$0xff]
        %v1288 = vld [vmem:[%s193 + $0x20f0] sm:$0xff]
        %v1289 = vld [vmem:[%s193 + $0x20f8] sm:$0xff]
        %v1290 = vld [vmem:[%s193 + $0x2100] sm:$0xff]
        %v1291 = vld [vmem:[%s193 + $0x2108] sm:$0xff]
        %v1292 = vld [vmem:[%s193 + $0x2110] sm:$0xff]
        %v1293 = vld [vmem:[%s193 + $0x2118] sm:$0xff]
        %v1294 = vld [vmem:[%s193 + $0x2120] sm:$0xff]
        %v1295 = vld [vmem:[%s193 + $0x2128] sm:$0xff]
        %v1296 = vld [vmem:[%s193 + $0x2130] sm:$0xff]
        %v1297 = vld [vmem:[%s193 + $0x2138] sm:$0xff]
        %v1298 = vld [vmem:[%s193 + $0x2140] sm:$0xff]
        %v1299 = vld [vmem:[%s193 + $0x2148] sm:$0xff]
        %v1300 = vld [vmem:[%s193 + $0x2150] sm:$0xff]
        %v1301 = vld [vmem:[%s193 + $0x2158] sm:$0xff]
        %v1302 = vld [vmem:[%s193 + $0x2160] sm:$0xff]
        %v1303 = vld [vmem:[%s193 + $0x2168] sm:$0xff]
        %v1304 = vld [vmem:[%s193 + $0x2170] sm:$0xff]
        %v1305 = vld [vmem:[%s193 + $0x2178] sm:$0xff]
        %v1306 = vld [vmem:[%s193 + $0x2180] sm:$0xff]
        %v1307 = vld [vmem:[%s193 + $0x2188] sm:$0xff]
        %v1308 = vld [vmem:[%s193 + $0x2190] sm:$0xff]
        %v1309 = vld [vmem:[%s193 + $0x2198] sm:$0xff]
        %v1310 = vld [vmem:[%s193 + $0x21a0] sm:$0xff]
        %v1311 = vld [vmem:[%s193 + $0x21a8] sm:$0xff]
        %v1312 = vld [vmem:[%s193 + $0x21b0] sm:$0xff]
        %v1313 = vld [vmem:[%s193 + $0x21b8] sm:$0xff]
        %v1314 = vld [vmem:[%s193 + $0x21c0] sm:$0xff]
        %v1315 = vld [vmem:[%s193 + $0x21c8] sm:$0xff]
        %v1316 = vld [vmem:[%s193 + $0x21d0] sm:$0xff]
        %v1317 = vld [vmem:[%s193 + $0x21d8] sm:$0xff]
        %v1318 = vld [vmem:[%s193 + $0x21e0] sm:$0xff]
        %v1319 = vld [vmem:[%s193 + $0x21e8] sm:$0xff]
        %v1320 = vld [vmem:[%s193 + $0x21f0] sm:$0xff]
        %v1321 = vld [vmem:[%s193 + $0x21f8] sm:$0xff]
        %v1322 = vld [vmem:[%s193 + $0x2200] sm:$0xff]
        %v1323 = vld [vmem:[%s193 + $0x2208] sm:$0xff]
        %v1324 = vld [vmem:[%s193 + $0x2210] sm:$0xff]
        %v1325 = vld [vmem:[%s193 + $0x2218] sm:$0xff]
        %v1326 = vld [vmem:[%s193 + $0x2220] sm:$0xff]
        %v1327 = vld [vmem:[%s193 + $0x2228] sm:$0xff]
        %v1328 = vld [vmem:[%s193 + $0x2230] sm:$0xff]
        %v1329 = vld [vmem:[%s193 + $0x2238] sm:$0xff]
        %v1330 = vld [vmem:[%s193 + $0x2240] sm:$0xff]
        %v1331 = vld [vmem:[%s193 + $0x2248] sm:$0xff]
        %v1332 = vld [vmem:[%s193 + $0x2250] sm:$0xff]
        %v1333 = vld [vmem:[%s193 + $0x2258] sm:$0xff]
        %v1334 = vld [vmem:[%s193 + $0x2260] sm:$0xff]
        %v1335 = vld [vmem:[%s193 + $0x2268] sm:$0xff]
        %v1336 = vld [vmem:[%s193 + $0x2270] sm:$0xff]
        %v1337 = vld [vmem:[%s193 + $0x2278] sm:$0xff]
        %v1338 = vld [vmem:[%s193 + $0x2280] sm:$0xff]
        %v1339 = vld [vmem:[%s193 + $0x2288] sm:$0xff]
        %v1340 = vld [vmem:[%s193 + $0x2290] sm:$0xff]
        %v1341 = vld [vmem:[%s193 + $0x2298] sm:$0xff]
        %v1342 = vld [vmem:[%s193 + $0x22a0] sm:$0xff]
        %v1343 = vld [vmem:[%s193 + $0x22a8] sm:$0xff]
        %v1344 = vld [vmem:[%s193 + $0x22b0] sm:$0xff]
        %v1345 = vld [vmem:[%s193 + $0x22b8] sm:$0xff]
        %v1346 = vld [vmem:[%s193 + $0x22c0] sm:$0xff]
        %v1347 = vld [vmem:[%s193 + $0x22c8] sm:$0xff]
        %v1348 = vld [vmem:[%s193 + $0x22d0] sm:$0xff]
        %v1349 = vld [vmem:[%s193 + $0x22d8] sm:$0xff]
        %v1350 = vld [vmem:[%s193 + $0x22e0] sm:$0xff]
        %v1351 = vld [vmem:[%s193 + $0x22e8] sm:$0xff]
        %v1352 = vld [vmem:[%s193 + $0x22f0] sm:$0xff]
        %v1353 = vld [vmem:[%s193 + $0x22f8] sm:$0xff]
        %v1354 = vld [vmem:[%s193 + $0x2300] sm:$0xff]
        %v1355 = vld [vmem:[%s193 + $0x2308] sm:$0xff]
        %v1356 = vld [vmem:[%s193 + $0x2310] sm:$0xff]
        %v1357 = vld [vmem:[%s193 + $0x2318] sm:$0xff]
        %v1358 = vld [vmem:[%s193 + $0x2320] sm:$0xff]
        %v1359 = vld [vmem:[%s193 + $0x2328] sm:$0xff]
        %v1360 = vld [vmem:[%s193 + $0x2330] sm:$0xff]
        %v1361 = vld [vmem:[%s193 + $0x2338] sm:$0xff]
        %v1362 = vld [vmem:[%s193 + $0x2340] sm:$0xff]
        %v1363 = vld [vmem:[%s193 + $0x2348] sm:$0xff]
        %v1364 = vld [vmem:[%s193 + $0x2350] sm:$0xff]
        %v1365 = vld [vmem:[%s193 + $0x2358] sm:$0xff]
        %v1366 = vld [vmem:[%s193 + $0x2360] sm:$0xff]
        %v1367 = vld [vmem:[%s193 + $0x2368] sm:$0xff]
        %v1368 = vld [vmem:[%s193 + $0x2370] sm:$0xff]
        %v1369 = vld [vmem:[%s193 + $0x2378] sm:$0xff]
        %v1370 = vld [vmem:[%s193 + $0x2380] sm:$0xff]
        %v1371 = vld [vmem:[%s193 + $0x2388] sm:$0xff]
        %v1372 = vld [vmem:[%s193 + $0x2390] sm:$0xff]
        %v1373 = vld [vmem:[%s193 + $0x2398] sm:$0xff]
        %v1374 = vld [vmem:[%s193 + $0x23a0] sm:$0xff]
        %v1375 = vld [vmem:[%s193 + $0x23a8] sm:$0xff]
        %v1376 = vld [vmem:[%s193 + $0x23b0] sm:$0xff]
        %v1377 = vld [vmem:[%s193 + $0x23b8] sm:$0xff]
        %v1378 = vld [vmem:[%s193 + $0x23c0] sm:$0xff]
        %v1379 = vld [vmem:[%s193 + $0x23c8] sm:$0xff]
        %v1380 = vld [vmem:[%s193 + $0x23d0] sm:$0xff]
        %v1381 = vld [vmem:[%s193 + $0x23d8] sm:$0xff]
        %v1382 = vld [vmem:[%s193 + $0x23e0] sm:$0xff]
        %v1383 = vld [vmem:[%s193 + $0x23e8] sm:$0xff]
        %v1384 = vld [vmem:[%s193 + $0x23f0] sm:$0xff]
        %v1385 = vld [vmem:[%s193 + $0x23f8] sm:$0xff]
        %v1386 = vld [vmem:[%s193 + $0x2400] sm:$0xff]
        %v1387 = vld [vmem:[%s193 + $0x2408] sm:$0xff]
        %v1388 = vld [vmem:[%s193 + $0x2410] sm:$0xff]
        %v1389 = vld [vmem:[%s193 + $0x2418] sm:$0xff]
        %v1390 = vld [vmem:[%s193 + $0x2420] sm:$0xff]
        %v1391 = vld [vmem:[%s193 + $0x2428] sm:$0xff]
        %v1392 = vld [vmem:[%s193 + $0x2430] sm:$0xff]
        %v1393 = vld [vmem:[%s193 + $0x2438] sm:$0xff]
        %v1394 = vld [vmem:[%s193 + $0x2440] sm:$0xff]
        %v1395 = vld [vmem:[%s193 + $0x2448] sm:$0xff]
        %v1396 = vld [vmem:[%s193 + $0x2450] sm:$0xff]
        %v1397 = vld [vmem:[%s193 + $0x2458] sm:$0xff]
        %v1398 = vld [vmem:[%s193 + $0x2460] sm:$0xff]
        %v1399 = vld [vmem:[%s193 + $0x2468] sm:$0xff]
        %v1400 = vld [vmem:[%s193 + $0x2470] sm:$0xff]
        %v1401 = vld [vmem:[%s193 + $0x2478] sm:$0xff]
        %v1402 = vld [vmem:[%s193 + $0x2480] sm:$0xff]
        %v1403 = vld [vmem:[%s193 + $0x2488] sm:$0xff]
        %v1404 = vld [vmem:[%s193 + $0x2490] sm:$0xff]
        %v1405 = vld [vmem:[%s193 + $0x2498] sm:$0xff]
        %v1406 = vld [vmem:[%s193 + $0x24a0] sm:$0xff]
        %v1407 = vld [vmem:[%s193 + $0x24a8] sm:$0xff]
        %v1408 = vld [vmem:[%s193 + $0x24b0] sm:$0xff]
        %v1409 = vld [vmem:[%s193 + $0x24b8] sm:$0xff]
        %v1410 = vld [vmem:[%s193 + $0x24c0] sm:$0xff]
        %v1411 = vld [vmem:[%s193 + $0x24c8] sm:$0xff]
        %v1412 = vld [vmem:[%s193 + $0x24d0] sm:$0xff]
        %v1413 = vld [vmem:[%s193 + $0x24d8] sm:$0xff]
        %v1414 = vld [vmem:[%s193 + $0x24e0] sm:$0xff]
        %v1415 = vld [vmem:[%s193 + $0x24e8] sm:$0xff]
        %v1416 = vld [vmem:[%s193 + $0x24f0] sm:$0xff]
        %v1417 = vld [vmem:[%s193 + $0x24f8] sm:$0xff]
        %v1418 = vld [vmem:[%s193 + $0x2500] sm:$0xff]
        %v1419 = vld [vmem:[%s193 + $0x2508] sm:$0xff]
        %v1420 = vld [vmem:[%s193 + $0x2510] sm:$0xff]
        %v1421 = vld [vmem:[%s193 + $0x2518] sm:$0xff]
        %v1422 = vld [vmem:[%s193 + $0x2520] sm:$0xff]
        %v1423 = vld [vmem:[%s193 + $0x2528] sm:$0xff]
        %v1424 = vld [vmem:[%s193 + $0x2530] sm:$0xff]
        %v1425 = vld [vmem:[%s193 + $0x2538] sm:$0xff]
        %v1426 = vld [vmem:[%s193 + $0x2540] sm:$0xff]
        %v1427 = vld [vmem:[%s193 + $0x2548] sm:$0xff]
        %v1428 = vld [vmem:[%s193 + $0x2550] sm:$0xff]
        %v1429 = vld [vmem:[%s193 + $0x2558] sm:$0xff]
        %v1430 = vld [vmem:[%s193 + $0x2560] sm:$0xff]
        %v1431 = vld [vmem:[%s193 + $0x2568] sm:$0xff]
        %v1432 = vld [vmem:[%s193 + $0x2570] sm:$0xff]
        %v1433 = vld [vmem:[%s193 + $0x2578] sm:$0xff]
        %v1434 = vld [vmem:[%s193 + $0x2580] sm:$0xff]
        %v1435 = vld [vmem:[%s193 + $0x2588] sm:$0xff]
        %v1436 = vld [vmem:[%s193 + $0x2590] sm:$0xff]
        %v1437 = vld [vmem:[%s193 + $0x2598] sm:$0xff]
        %v1438 = vld [vmem:[%s193 + $0x25a0] sm:$0xff]
        %v1439 = vld [vmem:[%s193 + $0x25a8] sm:$0xff]
        %v1440 = vld [vmem:[%s193 + $0x25b0] sm:$0xff]
        %v1441 = vld [vmem:[%s193 + $0x25b8] sm:$0xff]
        %v1442 = vld [vmem:[%s193 + $0x25c0] sm:$0xff]
        %v1443 = vld [vmem:[%s193 + $0x25c8] sm:$0xff]
        %v1444 = vld [vmem:[%s193 + $0x25d0] sm:$0xff]
        %v1445 = vld [vmem:[%s193 + $0x25d8] sm:$0xff]
        %v1446 = vld [vmem:[%s193 + $0x25e0] sm:$0xff]
        %v1447 = vld [vmem:[%s193 + $0x25e8] sm:$0xff]
        %v1448 = vld [vmem:[%s193 + $0x25f0] sm:$0xff]
        %v1449 = vld [vmem:[%s193 + $0x25f8] sm:$0xff]
        %v1450 = vld [vmem:[%s193 + $0x2600] sm:$0xff]
        %v1451 = vld [vmem:[%s193 + $0x2608] sm:$0xff]
        %v1452 = vld [vmem:[%s193 + $0x2610] sm:$0xff]
        %v1453 = vld [vmem:[%s193 + $0x2618] sm:$0xff]
        %v1454 = vld [vmem:[%s193 + $0x2620] sm:$0xff]
        %v1455 = vld [vmem:[%s193 + $0x2628] sm:$0xff]
        %v1456 = vld [vmem:[%s193 + $0x2630] sm:$0xff]
        %v1457 = vld [vmem:[%s193 + $0x2638] sm:$0xff]
        %v1458 = vld [vmem:[%s193 + $0x2640] sm:$0xff]
        %v1459 = vld [vmem:[%s193 + $0x2648] sm:$0xff]
        %v1460 = vld [vmem:[%s193 + $0x2650] sm:$0xff]
        %v1461 = vld [vmem:[%s193 + $0x2658] sm:$0xff]
        %v1462 = vld [vmem:[%s193 + $0x2660] sm:$0xff]
        %v1463 = vld [vmem:[%s193 + $0x2668] sm:$0xff]
        %v1464 = vld [vmem:[%s193 + $0x2670] sm:$0xff]
        %v1465 = vld [vmem:[%s193 + $0x2678] sm:$0xff]
        %v1466 = vld [vmem:[%s193 + $0x2680] sm:$0xff]
        %v1467 = vld [vmem:[%s193 + $0x2688] sm:$0xff]
        %v1468 = vld [vmem:[%s193 + $0x2690] sm:$0xff]
        %v1469 = vld [vmem:[%s193 + $0x2698] sm:$0xff]
        %v1470 = vld [vmem:[%s193 + $0x26a0] sm:$0xff]
        %v1471 = vld [vmem:[%s193 + $0x26a8] sm:$0xff]
        %v1472 = vld [vmem:[%s193 + $0x26b0] sm:$0xff]
        %v1473 = vld [vmem:[%s193 + $0x26b8] sm:$0xff]
        %v1474 = vld [vmem:[%s193 + $0x26c0] sm:$0xff]
        %v1475 = vld [vmem:[%s193 + $0x26c8] sm:$0xff]
        %v1476 = vld [vmem:[%s193 + $0x26d0] sm:$0xff]
        %v1477 = vld [vmem:[%s193 + $0x26d8] sm:$0xff]
        %v1478 = vld [vmem:[%s193 + $0x26e0] sm:$0xff]
        %v1479 = vld [vmem:[%s193 + $0x26e8] sm:$0xff]
        %v1480 = vld [vmem:[%s193 + $0x26f0] sm:$0xff]
        %v1481 = vld [vmem:[%s193 + $0x26f8] sm:$0xff]
        %v1482 = vld [vmem:[%s193 + $0x2700] sm:$0xff]
        %v1483 = vld [vmem:[%s193 + $0x2708] sm:$0xff]
        %v1484 = vld [vmem:[%s193 + $0x2710] sm:$0xff]
        %v1485 = vld [vmem:[%s193 + $0x2718] sm:$0xff]
        %v1486 = vld [vmem:[%s193 + $0x2720] sm:$0xff]
        %v1487 = vld [vmem:[%s193 + $0x2728] sm:$0xff]
        %v1488 = vld [vmem:[%s193 + $0x2730] sm:$0xff]
        %v1489 = vld [vmem:[%s193 + $0x2738] sm:$0xff]
        %v1490 = vld [vmem:[%s193 + $0x2740] sm:$0xff]
        %v1491 = vld [vmem:[%s193 + $0x2748] sm:$0xff]
        %v1492 = vld [vmem:[%s193 + $0x2750] sm:$0xff]
        %v1493 = vld [vmem:[%s193 + $0x2758] sm:$0xff]
        %v1494 = vld [vmem:[%s193 + $0x2760] sm:$0xff]
        %v1495 = vld [vmem:[%s193 + $0x2768] sm:$0xff]
        %v1496 = vld [vmem:[%s193 + $0x2770] sm:$0xff]
        %v1497 = vld [vmem:[%s193 + $0x2778] sm:$0xff]
        %v1498 = vld [vmem:[%s193 + $0x2780] sm:$0xff]
        %v1499 = vld [vmem:[%s193 + $0x2788] sm:$0xff]
        %v1500 = vld [vmem:[%s193 + $0x2790] sm:$0xff]
        %v1501 = vld [vmem:[%s193 + $0x2798] sm:$0xff]
        %v1502 = vld [vmem:[%s193 + $0x27a0] sm:$0xff]
        %v1503 = vld [vmem:[%s193 + $0x27a8] sm:$0xff]
        %v1504 = vld [vmem:[%s193 + $0x27b0] sm:$0xff]
        %v1505 = vld [vmem:[%s193 + $0x27b8] sm:$0xff]
        %v1506 = vld [vmem:[%s193 + $0x27c0] sm:$0xff]
        %v1507 = vld [vmem:[%s193 + $0x27c8] sm:$0xff]
        %v1508 = vld [vmem:[%s193 + $0x27d0] sm:$0xff]
        %v1509 = vld [vmem:[%s193 + $0x27d8] sm:$0xff]
        %v1510 = vld [vmem:[%s193 + $0x27e0] sm:$0xff]
        %v1511 = vld [vmem:[%s193 + $0x27e8] sm:$0xff]
        %v1512 = vld [vmem:[%s193 + $0x27f0] sm:$0xff]
        %v1513 = vld [vmem:[%s193 + $0x27f8] sm:$0xff]
        %v1514 = vld [vmem:[%s193 + $0x2800] sm:$0xff]
        %v1515 = vld [vmem:[%s193 + $0x2808] sm:$0xff]
        %v1516 = vld [vmem:[%s193 + $0x2810] sm:$0xff]
        %v1517 = vld [vmem:[%s193 + $0x2818] sm:$0xff]
        %v1518 = vld [vmem:[%s193 + $0x2820] sm:$0xff]
        %v1519 = vld [vmem:[%s193 + $0x2828] sm:$0xff]
        %v1520 = vld [vmem:[%s193 + $0x2830] sm:$0xff]
        %v1521 = vld [vmem:[%s193 + $0x2838] sm:$0xff]
        %v1522 = vld [vmem:[%s193 + $0x2840] sm:$0xff]
        %v1523 = vld [vmem:[%s193 + $0x2848] sm:$0xff]
        %v1524 = vld [vmem:[%s193 + $0x2850] sm:$0xff]
        %v1525 = vld [vmem:[%s193 + $0x2858] sm:$0xff]
        %v1526 = vld [vmem:[%s193 + $0x2860] sm:$0xff]
        %v1527 = vld [vmem:[%s193 + $0x2868] sm:$0xff]
        %v1528 = vld [vmem:[%s193 + $0x2870] sm:$0xff]
        %v1529 = vld [vmem:[%s193 + $0x2878] sm:$0xff]
        %v1530 = vld [vmem:[%s193 + $0x2880] sm:$0xff]
        %v1531 = vld [vmem:[%s193 + $0x2888] sm:$0xff]
        %v1532 = vld [vmem:[%s193 + $0x2890] sm:$0xff]
        %v1533 = vld [vmem:[%s193 + $0x2898] sm:$0xff]
        %v1534 = vld [vmem:[%s193 + $0x28a0] sm:$0xff]
        %v1535 = vld [vmem:[%s193 + $0x28a8] sm:$0xff]
        %v1536 = vld [vmem:[%s193 + $0x28b0] sm:$0xff]
        %v1537 = vld [vmem:[%s193 + $0x28b8] sm:$0xff]
        %v1538 = vld [vmem:[%s193 + $0x28c0] sm:$0xff]
        %v1539 = vld [vmem:[%s193 + $0x28c8] sm:$0xff]
        %v1540 = vld [vmem:[%s193 + $0x28d0] sm:$0xff]
        %v1541 = vld [vmem:[%s193 + $0x28d8] sm:$0xff]
        %v1542 = vld [vmem:[%s193 + $0x28e0] sm:$0xff]
        %v1543 = vld [vmem:[%s193 + $0x28e8] sm:$0xff]
        %v1544 = vld [vmem:[%s193 + $0x28f0] sm:$0xff]
        %v1545 = vld [vmem:[%s193 + $0x28f8] sm:$0xff]
        %v1546 = vld [vmem:[%s193 + $0x2900] sm:$0xff]
        %v1547 = vld [vmem:[%s193 + $0x2908] sm:$0xff]
        %v1548 = vld [vmem:[%s193 + $0x2910] sm:$0xff]
        %v1549 = vld [vmem:[%s193 + $0x2918] sm:$0xff]
        %v1550 = vld [vmem:[%s193 + $0x2920] sm:$0xff]
        %v1551 = vld [vmem:[%s193 + $0x2928] sm:$0xff]
        %v1552 = vld [vmem:[%s193 + $0x2930] sm:$0xff]
        %v1553 = vld [vmem:[%s193 + $0x2938] sm:$0xff]
        %v1554 = vld [vmem:[%s193 + $0x2940] sm:$0xff]
        %v1555 = vld [vmem:[%s193 + $0x2948] sm:$0xff]
        %v1556 = vld [vmem:[%s193 + $0x2950] sm:$0xff]
        %v1557 = vld [vmem:[%s193 + $0x2958] sm:$0xff]
        %v1558 = vld [vmem:[%s193 + $0x2960] sm:$0xff]
        %v1559 = vld [vmem:[%s193 + $0x2968] sm:$0xff]
        %v1560 = vld [vmem:[%s193 + $0x2970] sm:$0xff]
        %v1561 = vld [vmem:[%s193 + $0x2978] sm:$0xff]
        %v1562 = vld [vmem:[%s193 + $0x2980] sm:$0xff]
        %v1563 = vld [vmem:[%s193 + $0x2988] sm:$0xff]
        %v1564 = vld [vmem:[%s193 + $0x2990] sm:$0xff]
        %v1565 = vld [vmem:[%s193 + $0x2998] sm:$0xff]
        %v1566 = vld [vmem:[%s193 + $0x29a0] sm:$0xff]
        %v1567 = vld [vmem:[%s193 + $0x29a8] sm:$0xff]
        %v1568 = vld [vmem:[%s193 + $0x29b0] sm:$0xff]
        %v1569 = vld [vmem:[%s193 + $0x29b8] sm:$0xff]
        %v1570 = vld [vmem:[%s193 + $0x29c0] sm:$0xff]
        %v1571 = vld [vmem:[%s193 + $0x29c8] sm:$0xff]
        %v1572 = vld [vmem:[%s193 + $0x29d0] sm:$0xff]
        %v1573 = vld [vmem:[%s193 + $0x29d8] sm:$0xff]
        %v1574 = vld [vmem:[%s193 + $0x29e0] sm:$0xff]
        %v1575 = vld [vmem:[%s193 + $0x29e8] sm:$0xff]
        %v1576 = vld [vmem:[%s193 + $0x29f0] sm:$0xff]
        %v1577 = vld [vmem:[%s193 + $0x29f8] sm:$0xff]
        %v1578 = vld [vmem:[%s193 + $0x2a00] sm:$0xff]
        %v1579 = vld [vmem:[%s193 + $0x2a08] sm:$0xff]
        %v1580 = vld [vmem:[%s193 + $0x2a10] sm:$0xff]
        %v1581 = vld [vmem:[%s193 + $0x2a18] sm:$0xff]
        %v1582 = vld [vmem:[%s193 + $0x2a20] sm:$0xff]
        %v1583 = vld [vmem:[%s193 + $0x2a28] sm:$0xff]
        %v1584 = vld [vmem:[%s193 + $0x2a30] sm:$0xff]
        %v1585 = vld [vmem:[%s193 + $0x2a38] sm:$0xff]
        %v1586 = vld [vmem:[%s193 + $0x2a40] sm:$0xff]
        %v1587 = vld [vmem:[%s193 + $0x2a48] sm:$0xff]
        %v1588 = vld [vmem:[%s193 + $0x2a50] sm:$0xff]
        %v1589 = vld [vmem:[%s193 + $0x2a58] sm:$0xff]
        %v1590 = vld [vmem:[%s193 + $0x2a60] sm:$0xff]
        %v1591 = vld [vmem:[%s193 + $0x2a68] sm:$0xff]
        %v1592 = vld [vmem:[%s193 + $0x2a70] sm:$0xff]
        %v1593 = vld [vmem:[%s193 + $0x2a78] sm:$0xff]
        %v1594 = vld [vmem:[%s193 + $0x2a80] sm:$0xff]
        %v1595 = vld [vmem:[%s193 + $0x2a88] sm:$0xff]
        %v1596 = vld [vmem:[%s193 + $0x2a90] sm:$0xff]
        %v1597 = vld [vmem:[%s193 + $0x2a98] sm:$0xff]
        %v1598 = vld [vmem:[%s193 + $0x2aa0] sm:$0xff]
        %v1599 = vld [vmem:[%s193 + $0x2aa8] sm:$0xff]
        %v1600 = vld [vmem:[%s193 + $0x2ab0] sm:$0xff]
        %v1601 = vld [vmem:[%s193 + $0x2ab8] sm:$0xff]
        %v1602 = vld [vmem:[%s193 + $0x2ac0] sm:$0xff]
        %v1603 = vld [vmem:[%s193 + $0x2ac8] sm:$0xff]
        %v1604 = vld [vmem:[%s193 + $0x2ad0] sm:$0xff]
        %v1605 = vld [vmem:[%s193 + $0x2ad8] sm:$0xff]
        %v1606 = vld [vmem:[%s193 + $0x2ae0] sm:$0xff]
        %v1607 = vld [vmem:[%s193 + $0x2ae8] sm:$0xff]
        %v1608 = vld [vmem:[%s193 + $0x2af0] sm:$0xff]
        %v1609 = vld [vmem:[%s193 + $0x2af8] sm:$0xff]
        %v1610 = vld [vmem:[%s193 + $0x2b00] sm:$0xff]
        %v1611 = vld [vmem:[%s193 + $0x2b08] sm:$0xff]
        %v1612 = vld [vmem:[%s193 + $0x2b10] sm:$0xff]
        %v1613 = vld [vmem:[%s193 + $0x2b18] sm:$0xff]
        %v1614 = vld [vmem:[%s193 + $0x2b20] sm:$0xff]
        %v1615 = vld [vmem:[%s193 + $0x2b28] sm:$0xff]
        %v1616 = vld [vmem:[%s193 + $0x2b30] sm:$0xff]
        %v1617 = vld [vmem:[%s193 + $0x2b38] sm:$0xff]
        %v1618 = vld [vmem:[%s193 + $0x2b40] sm:$0xff]
        %v1619 = vld [vmem:[%s193 + $0x2b48] sm:$0xff]
        %v1620 = vld [vmem:[%s193 + $0x2b50] sm:$0xff]
        %v1621 = vld [vmem:[%s193 + $0x2b58] sm:$0xff]
        %v1622 = vld [vmem:[%s193 + $0x2b60] sm:$0xff]
        %v1623 = vld [vmem:[%s193 + $0x2b68] sm:$0xff]
        %v1624 = vld [vmem:[%s193 + $0x2b70] sm:$0xff]
        %v1625 = vld [vmem:[%s193 + $0x2b78] sm:$0xff]
        %v1626 = vld [vmem:[%s193 + $0x2b80] sm:$0xff]
        %v1627 = vld [vmem:[%s193 + $0x2b88] sm:$0xff]
        %v1628 = vld [vmem:[%s193 + $0x2b90] sm:$0xff]
        %v1629 = vld [vmem:[%s193 + $0x2b98] sm:$0xff]
        %v1630 = vld [vmem:[%s193 + $0x2ba0] sm:$0xff]
        %v1631 = vld [vmem:[%s193 + $0x2ba8] sm:$0xff]
        %v1632 = vld [vmem:[%s193 + $0x2bb0] sm:$0xff]
        %v1633 = vld [vmem:[%s193 + $0x2bb8] sm:$0xff]
        %v1634 = vld [vmem:[%s193 + $0x2bc0] sm:$0xff]
        %v1635 = vld [vmem:[%s193 + $0x2bc8] sm:$0xff]
        %v1636 = vld [vmem:[%s193 + $0x2bd0] sm:$0xff]
        %v1637 = vld [vmem:[%s193 + $0x2bd8] sm:$0xff]
        %v1638 = vld [vmem:[%s193 + $0x2be0] sm:$0xff]
        %v1639 = vld [vmem:[%s193 + $0x2be8] sm:$0xff]
        %v1640 = vld [vmem:[%s193 + $0x2bf0] sm:$0xff]
        %v1641 = vld [vmem:[%s193 + $0x2bf8] sm:$0xff]
        %v1642 = vld [vmem:[%s193 + $0x2c00] sm:$0xff]
        %v1643 = vld [vmem:[%s193 + $0x2c08] sm:$0xff]
        %v1644 = vld [vmem:[%s193 + $0x2c10] sm:$0xff]
        %v1645 = vld [vmem:[%s193 + $0x2c18] sm:$0xff]
        %v1646 = vld [vmem:[%s193 + $0x2c20] sm:$0xff]
        %v1647 = vld [vmem:[%s193 + $0x2c28] sm:$0xff]
        %v1648 = vld [vmem:[%s193 + $0x2c30] sm:$0xff]
        %v1649 = vld [vmem:[%s193 + $0x2c38] sm:$0xff]
        %v1650 = vld [vmem:[%s193 + $0x2c40] sm:$0xff]
        %v1651 = vld [vmem:[%s193 + $0x2c48] sm:$0xff]
        %v1652 = vld [vmem:[%s193 + $0x2c50] sm:$0xff]
        %v1653 = vld [vmem:[%s193 + $0x2c58] sm:$0xff]
        %v1654 = vld [vmem:[%s193 + $0x2c60] sm:$0xff]
        %v1655 = vld [vmem:[%s193 + $0x2c68] sm:$0xff]
        %v1656 = vld [vmem:[%s193 + $0x2c70] sm:$0xff]
        %v1657 = vld [vmem:[%s193 + $0x2c78] sm:$0xff]
        %v1658 = vld [vmem:[%s193 + $0x2c80] sm:$0xff]
        %v1659 = vld [vmem:[%s193 + $0x2c88] sm:$0xff]
        %v1660 = vld [vmem:[%s193 + $0x2c90] sm:$0xff]
        %v1661 = vld [vmem:[%s193 + $0x2c98] sm:$0xff]
        %v1662 = vld [vmem:[%s193 + $0x2ca0] sm:$0xff]
        %v1663 = vld [vmem:[%s193 + $0x2ca8] sm:$0xff]
        %v1664 = vld [vmem:[%s193 + $0x2cb0] sm:$0xff]
        %v1665 = vld [vmem:[%s193 + $0x2cb8] sm:$0xff]
        %v1666 = vld [vmem:[%s193 + $0x2cc0] sm:$0xff]
        %v1667 = vld [vmem:[%s193 + $0x2cc8] sm:$0xff]
        %v1668 = vld [vmem:[%s193 + $0x2cd0] sm:$0xff]
        %v1669 = vld [vmem:[%s193 + $0x2cd8] sm:$0xff]
        %v1670 = vld [vmem:[%s193 + $0x2ce0] sm:$0xff]
        %v1671 = vld [vmem:[%s193 + $0x2ce8] sm:$0xff]
        %v1672 = vld [vmem:[%s193 + $0x2cf0] sm:$0xff]
        %v1673 = vld [vmem:[%s193 + $0x2cf8] sm:$0xff]
        %v1674 = vld [vmem:[%s193 + $0x2d00] sm:$0xff]
        %v1675 = vld [vmem:[%s193 + $0x2d08] sm:$0xff]
        %v1676 = vld [vmem:[%s193 + $0x2d10] sm:$0xff]
        %v1677 = vld [vmem:[%s193 + $0x2d18] sm:$0xff]
        %v1678 = vld [vmem:[%s193 + $0x2d20] sm:$0xff]
        %v1679 = vld [vmem:[%s193 + $0x2d28] sm:$0xff]
        %v1680 = vld [vmem:[%s193 + $0x2d30] sm:$0xff]
        %v1681 = vld [vmem:[%s193 + $0x2d38] sm:$0xff]
        %v1682 = vld [vmem:[%s193 + $0x2d40] sm:$0xff]
        %v1683 = vld [vmem:[%s193 + $0x2d48] sm:$0xff]
        %v1684 = vld [vmem:[%s193 + $0x2d50] sm:$0xff]
        %v1685 = vld [vmem:[%s193 + $0x2d58] sm:$0xff]
        %v1686 = vld [vmem:[%s193 + $0x2d60] sm:$0xff]
        %v1687 = vld [vmem:[%s193 + $0x2d68] sm:$0xff]
        %v1688 = vld [vmem:[%s193 + $0x2d70] sm:$0xff]
        %v1689 = vld [vmem:[%s193 + $0x2d78] sm:$0xff]
        %v1690 = vld [vmem:[%s193 + $0x2d80] sm:$0xff]
        %v1691 = vld [vmem:[%s193 + $0x2d88] sm:$0xff]
        %v1692 = vld [vmem:[%s193 + $0x2d90] sm:$0xff]
        %v1693 = vld [vmem:[%s193 + $0x2d98] sm:$0xff]
        %v1694 = vld [vmem:[%s193 + $0x2da0] sm:$0xff]
        %v1695 = vld [vmem:[%s193 + $0x2da8] sm:$0xff]
        %v1696 = vld [vmem:[%s193 + $0x2db0] sm:$0xff]
        %v1697 = vld [vmem:[%s193 + $0x2db8] sm:$0xff]
        %v1698 = vld [vmem:[%s193 + $0x2dc0] sm:$0xff]
        %v1699 = vld [vmem:[%s193 + $0x2dc8] sm:$0xff]
        %v1700 = vld [vmem:[%s193 + $0x2dd0] sm:$0xff]
        %v1701 = vld [vmem:[%s193 + $0x2dd8] sm:$0xff]
        %v1702 = vld [vmem:[%s193 + $0x2de0] sm:$0xff]
        %v1703 = vld [vmem:[%s193 + $0x2de8] sm:$0xff]
        %v1704 = vld [vmem:[%s193 + $0x2df0] sm:$0xff]
        %v1705 = vld [vmem:[%s193 + $0x2df8] sm:$0xff]
        %v1706 = vld [vmem:[%s193 + $0x2e00] sm:$0xff]
        %v1707 = vld [vmem:[%s193 + $0x2e08] sm:$0xff]
        %v1708 = vld [vmem:[%s193 + $0x2e10] sm:$0xff]
        %v1709 = vld [vmem:[%s193 + $0x2e18] sm:$0xff]
        %v1710 = vld [vmem:[%s193 + $0x2e20] sm:$0xff]
        %v1711 = vld [vmem:[%s193 + $0x2e28] sm:$0xff]
        %v1712 = vld [vmem:[%s193 + $0x2e30] sm:$0xff]
        %v1713 = vld [vmem:[%s193 + $0x2e38] sm:$0xff]
        %v1714 = vld [vmem:[%s193 + $0x2e40] sm:$0xff]
        %v1715 = vld [vmem:[%s193 + $0x2e48] sm:$0xff]
        %v1716 = vld [vmem:[%s193 + $0x2e50] sm:$0xff]
        %v1717 = vld [vmem:[%s193 + $0x2e58] sm:$0xff]
        %v1718 = vld [vmem:[%s193 + $0x2e60] sm:$0xff]
        %v1719 = vld [vmem:[%s193 + $0x2e68] sm:$0xff]
        %v1720 = vld [vmem:[%s193 + $0x2e70] sm:$0xff]
        %v1721 = vld [vmem:[%s193 + $0x2e78] sm:$0xff]
        %v1722 = vld [vmem:[%s193 + $0x2e80] sm:$0xff]
        %v1723 = vld [vmem:[%s193 + $0x2e88] sm:$0xff]
        %v1724 = vld [vmem:[%s193 + $0x2e90] sm:$0xff]
        %v1725 = vld [vmem:[%s193 + $0x2e98] sm:$0xff]
        %v1726 = vld [vmem:[%s193 + $0x2ea0] sm:$0xff]
        %v1727 = vld [vmem:[%s193 + $0x2ea8] sm:$0xff]
        %v1728 = vld [vmem:[%s193 + $0x2eb0] sm:$0xff]
        %v1729 = vld [vmem:[%s193 + $0x2eb8] sm:$0xff]
        %v1730 = vld [vmem:[%s193 + $0x2ec0] sm:$0xff]
        %v1731 = vld [vmem:[%s193 + $0x2ec8] sm:$0xff]
        %v1732 = vld [vmem:[%s193 + $0x2ed0] sm:$0xff]
        %v1733 = vld [vmem:[%s193 + $0x2ed8] sm:$0xff]
        %v1734 = vld [vmem:[%s193 + $0x2ee0] sm:$0xff]
        %v1735 = vld [vmem:[%s193 + $0x2ee8] sm:$0xff]
        %v1736 = vld [vmem:[%s193 + $0x2ef0] sm:$0xff]
        %v1737 = vld [vmem:[%s193 + $0x2ef8] sm:$0xff]
        %v1738 = vld [vmem:[%s193 + $0x2f00] sm:$0xff]
        %v1739 = vld [vmem:[%s193 + $0x2f08] sm:$0xff]
        %v1740 = vld [vmem:[%s193 + $0x2f10] sm:$0xff]
        %v1741 = vld [vmem:[%s193 + $0x2f18] sm:$0xff]
        %v1742 = vld [vmem:[%s193 + $0x2f20] sm:$0xff]
        %v1743 = vld [vmem:[%s193 + $0x2f28] sm:$0xff]
        %v1744 = vld [vmem:[%s193 + $0x2f30] sm:$0xff]
        %v1745 = vld [vmem:[%s193 + $0x2f38] sm:$0xff]
        %v1746 = vld [vmem:[%s193 + $0x2f40] sm:$0xff]
        %v1747 = vld [vmem:[%s193 + $0x2f48] sm:$0xff]
        %v1748 = vld [vmem:[%s193 + $0x2f50] sm:$0xff]
        %v1749 = vld [vmem:[%s193 + $0x2f58] sm:$0xff]
        %v1750 = vld [vmem:[%s193 + $0x2f60] sm:$0xff]
        %v1751 = vld [vmem:[%s193 + $0x2f68] sm:$0xff]
        %v1752 = vld [vmem:[%s193 + $0x2f70] sm:$0xff]
        %v1753 = vld [vmem:[%s193 + $0x2f78] sm:$0xff]
        %v1754 = vld [vmem:[%s193 + $0x2f80] sm:$0xff]
        %v1755 = vld [vmem:[%s193 + $0x2f88] sm:$0xff]
        %v1756 = vld [vmem:[%s193 + $0x2f90] sm:$0xff]
        %v1757 = vld [vmem:[%s193 + $0x2f98] sm:$0xff]
        %v1758 = vld [vmem:[%s193 + $0x2fa0] sm:$0xff]
        %v1759 = vld [vmem:[%s193 + $0x2fa8] sm:$0xff]
        %v1760 = vld [vmem:[%s193 + $0x2fb0] sm:$0xff]
        %v1761 = vld [vmem:[%s193 + $0x2fb8] sm:$0xff]
        %v1762 = vld [vmem:[%s193 + $0x2fc0] sm:$0xff]
        %v1763 = vld [vmem:[%s193 + $0x2fc8] sm:$0xff]
        %v1764 = vld [vmem:[%s193 + $0x2fd0] sm:$0xff]
        %v1765 = vld [vmem:[%s193 + $0x2fd8] sm:$0xff]
        %v1766 = vld [vmem:[%s193 + $0x2fe0] sm:$0xff]
        %v1767 = vld [vmem:[%s193 + $0x2fe8] sm:$0xff]
        %v1768 = vld [vmem:[%s193 + $0x2ff0] sm:$0xff]
        %v1769 = vld [vmem:[%s193 + $0x2ff8] sm:$0xff]
        %v1770 = vld [vmem:[%s2] sm:$0x3]
        %1772 = vset.pattern.permute.xlu0 0
        %1773 = vperm.xlu0 %1772, %v1770
        %v1774 = vpop.permute.xlu0 %1773
        %v1788 = vcombine.high %v222, %v222
        %v1790 = vunpack.c.l.s4 1983009808
        %v1791 = vunpack.c.0.s8 %v1790
        %v1792 = vlaneseq
        %v1793 = vshrl.u32 %v1792, 7
        %v1794 = vsub.s32 %v1791, %v1793
        %v1795 = vrot.slane %v222, %v1794
        %v1797 = vunpack.c.l.s4 1983009808
        %v1798 = vunpack.c.0.s8 %v1797
        %v1799 = vlaneseq
        %v1800 = vshrl.u32 %v1799, 7
        %v1801 = vsub.s32 %v1798, %v1800
        %v1802 = vrot.slane %v1788, %v1801
        %v1803 = vcombine.high %v1795, %v1795
        %v1804 = vcombine.high %v1802, %v1802
        %v1805 = vcombine.high %v223, %v223
        %v1807 = vunpack.c.l.s4 1983009808
        %v1808 = vunpack.c.0.s8 %v1807
        %v1809 = vlaneseq
        %v1810 = vshrl.u32 %v1809, 7
        %v1811 = vsub.s32 %v1808, %v1810
        %v1812 = vrot.slane %v223, %v1811
        %v1814 = vunpack.c.l.s4 1983009808
        %v1815 = vunpack.c.0.s8 %v1814
        %v1816 = vlaneseq
        %v1817 = vshrl.u32 %v1816, 7
        %v1818 = vsub.s32 %v1815, %v1817
        %v1819 = vrot.slane %v1805, %v1818
        %v1820 = vcombine.high %v1812, %v1812
        %v1821 = vcombine.high %v1819, %v1819
        %v1822 = vcombine.high %v224, %v224
        %v1824 = vunpack.c.l.s4 1983009808
        %v1825 = vunpack.c.0.s8 %v1824
        %v1826 = vlaneseq
        %v1827 = vshrl.u32 %v1826, 7
        %v1828 = vsub.s32 %v1825, %v1827
        %v1829 = vrot.slane %v224, %v1828
        %v1831 = vunpack.c.l.s4 1983009808
        %v1832 = vunpack.c.0.s8 %v1831
        %v1833 = vlaneseq
        %v1834 = vshrl.u32 %v1833, 7
        %v1835 = vsub.s32 %v1832, %v1834
        %v1836 = vrot.slane %v1822, %v1835
        %v1837 = vcombine.high %v1829, %v1829
        %v1838 = vcombine.high %v1836, %v1836
        %v1839 = vcombine.high %v225, %v225
        %v1841 = vunpack.c.l.s4 1983009808
        %v1842 = vunpack.c.0.s8 %v1841
        %v1843 = vlaneseq
        %v1844 = vshrl.u32 %v1843, 7
        %v1845 = vsub.s32 %v1842, %v1844
        %v1846 = vrot.slane %v225, %v1845
        %v1848 = vunpack.c.l.s4 1983009808
        %v1849 = vunpack.c.0.s8 %v1848
        %v1850 = vlaneseq
        %v1851 = vshrl.u32 %v1850, 7
        %v1852 = vsub.s32 %v1849, %v1851
        %v1853 = vrot.slane %v1839, %v1852
        %v1854 = vcombine.high %v1846, %v1846
        %v1855 = vcombine.high %v1853, %v1853
        %v1856 = vcombine.high %v226, %v226
        %v1858 = vunpack.c.l.s4 1983009808
        %v1859 = vunpack.c.0.s8 %v1858
        %v1860 = vlaneseq
        %v1861 = vshrl.u32 %v1860, 7
        %v1862 = vsub.s32 %v1859, %v1861
        %v1863 = vrot.slane %v226, %v1862
        %v1865 = vunpack.c.l.s4 1983009808
        %v1866 = vunpack.c.0.s8 %v1865
        %v1867 = vlaneseq
        %v1868 = vshrl.u32 %v1867, 7
        %v1869 = vsub.s32 %v1866, %v1868
        %v1870 = vrot.slane %v1856, %v1869
        %v1871 = vcombine.high %v1863, %v1863
        %v1872 = vcombine.high %v1870, %v1870
        %v1873 = vcombine.high %v227, %v227
        %v1875 = vunpack.c.l.s4 1983009808
        %v1876 = vunpack.c.0.s8 %v1875
        %v1877 = vlaneseq
        %v1878 = vshrl.u32 %v1877, 7
        %v1879 = vsub.s32 %v1876, %v1878
        %v1880 = vrot.slane %v227, %v1879
        %v1882 = vunpack.c.l.s4 1983009808
        %v1883 = vunpack.c.0.s8 %v1882
        %v1884 = vlaneseq
        %v1885 = vshrl.u32 %v1884, 7
        %v1886 = vsub.s32 %v1883, %v1885
        %v1887 = vrot.slane %v1873, %v1886
        %v1888 = vcombine.high %v1880, %v1880
        %v1889 = vcombine.high %v1887, %v1887
        %v1890 = vcombine.high %v228, %v228
        %v1892 = vunpack.c.l.s4 1983009808
        %v1893 = vunpack.c.0.s8 %v1892
        %v1894 = vlaneseq
        %v1895 = vshrl.u32 %v1894, 7
        %v1896 = vsub.s32 %v1893, %v1895
        %v1897 = vrot.slane %v228, %v1896
        %v1899 = vunpack.c.l.s4 1983009808
        %v1900 = vunpack.c.0.s8 %v1899
        %v1901 = vlaneseq
        %v1902 = vshrl.u32 %v1901, 7
        %v1903 = vsub.s32 %v1900, %v1902
        %v1904 = vrot.slane %v1890, %v1903
        %v1905 = vcombine.high %v1897, %v1897
        %v1906 = vcombine.high %v1904, %v1904
        %v1907 = vcombine.high %v229, %v229
        %v1909 = vunpack.c.l.s4 1983009808
        %v1910 = vunpack.c.0.s8 %v1909
        %v1911 = vlaneseq
        %v1912 = vshrl.u32 %v1911, 7
        %v1913 = vsub.s32 %v1910, %v1912
        %v1914 = vrot.slane %v229, %v1913
        %v1916 = vunpack.c.l.s4 1983009808
        %v1917 = vunpack.c.0.s8 %v1916
        %v1918 = vlaneseq
        %v1919 = vshrl.u32 %v1918, 7
        %v1920 = vsub.s32 %v1917, %v1919
        %v1921 = vrot.slane %v1907, %v1920
        %v1922 = vcombine.high %v1914, %v1914
        %v1923 = vcombine.high %v1921, %v1921
        %v1924 = vcombine.high %v230, %v230
        %v1926 = vunpack.c.l.s4 1983009808
        %v1927 = vunpack.c.0.s8 %v1926
        %v1928 = vlaneseq
        %v1929 = vshrl.u32 %v1928, 7
        %v1930 = vsub.s32 %v1927, %v1929
        %v1931 = vrot.slane %v230, %v1930
        %v1933 = vunpack.c.l.s4 1983009808
        %v1934 = vunpack.c.0.s8 %v1933
        %v1935 = vlaneseq
        %v1936 = vshrl.u32 %v1935, 7
        %v1937 = vsub.s32 %v1934, %v1936
        %v1938 = vrot.slane %v1924, %v1937
        %v1939 = vcombine.high %v1931, %v1931
        %v1940 = vcombine.high %v1938, %v1938
        %v1941 = vcombine.high %v231, %v231
        %v1943 = vunpack.c.l.s4 1983009808
        %v1944 = vunpack.c.0.s8 %v1943
        %v1945 = vlaneseq
        %v1946 = vshrl.u32 %v1945, 7
        %v1947 = vsub.s32 %v1944, %v1946
        %v1948 = vrot.slane %v231, %v1947
        %v1950 = vunpack.c.l.s4 1983009808
        %v1951 = vunpack.c.0.s8 %v1950
        %v1952 = vlaneseq
        %v1953 = vshrl.u32 %v1952, 7
        %v1954 = vsub.s32 %v1951, %v1953
        %v1955 = vrot.slane %v1941, %v1954
        %v1956 = vcombine.high %v1948, %v1948
        %v1957 = vcombine.high %v1955, %v1955
        %v1958 = vcombine.high %v232, %v232
        %v1960 = vunpack.c.l.s4 1983009808
        %v1961 = vunpack.c.0.s8 %v1960
        %v1962 = vlaneseq
        %v1963 = vshrl.u32 %v1962, 7
        %v1964 = vsub.s32 %v1961, %v1963
        %v1965 = vrot.slane %v232, %v1964
        %v1967 = vunpack.c.l.s4 1983009808
        %v1968 = vunpack.c.0.s8 %v1967
        %v1969 = vlaneseq
        %v1970 = vshrl.u32 %v1969, 7
        %v1971 = vsub.s32 %v1968, %v1970
        %v1972 = vrot.slane %v1958, %v1971
        %v1973 = vcombine.high %v1965, %v1965
        %v1974 = vcombine.high %v1972, %v1972
        %v1975 = vcombine.high %v233, %v233
        %v1977 = vunpack.c.l.s4 1983009808
        %v1978 = vunpack.c.0.s8 %v1977
        %v1979 = vlaneseq
        %v1980 = vshrl.u32 %v1979, 7
        %v1981 = vsub.s32 %v1978, %v1980
        %v1982 = vrot.slane %v233, %v1981
        %v1984 = vunpack.c.l.s4 1983009808
        %v1985 = vunpack.c.0.s8 %v1984
        %v1986 = vlaneseq
        %v1987 = vshrl.u32 %v1986, 7
        %v1988 = vsub.s32 %v1985, %v1987
        %v1989 = vrot.slane %v1975, %v1988
        %v1990 = vcombine.high %v1982, %v1982
        %v1991 = vcombine.high %v1989, %v1989
        %2040 = vmatprep.subr.mxu0 %v235
        %2041 = vmatpush1.msra.mxu0 %v234
        %2042 = vmatprep.subr.mxu0 %v237
        %2043 = vmatpush1.msra.mxu0 %v236
        %2044 = vmatprep.subr.mxu0 %v239
        %2045 = vmatpush1.msra.mxu0 %v238
        %2046 = vmatprep.subr.mxu0 %v241
        %2047 = vmatpush1.msra.mxu0 %v240
        %2048 = vmatprep.subr.mxu0 %v243
        %2049 = vmatpush1.msra.mxu0 %v242
        %2050 = vmatprep.subr.mxu0 %v245
        %2051 = vmatpush1.msra.mxu0 %v244
        %2052 = vmatprep.subr.mxu0 %v247
        %2053 = vmatpush1.msra.mxu0 %v246
        %2054 = vmatprep.subr.mxu0 %v249
        %2055 = vmatpush1.msra.mxu0 %v248
        %2056 = vmatprep.subr.mxu0 %v251
        %2057 = vmatpush1.msra.mxu0 %v250
        %2058 = vmatprep.subr.mxu0 %v253
        %2059 = vmatpush1.msra.mxu0 %v252
        %2060 = vmatprep.subr.mxu0 %v255
        %2061 = vmatpush1.msra.mxu0 %v254
        %2062 = vmatprep.subr.mxu0 %v257
        %2063 = vmatpush1.msra.mxu0 %v256
        %2064 = vmatprep.subr.mxu0 %v259
        %2065 = vmatpush1.msra.mxu0 %v258
        %2066 = vmatprep.subr.mxu0 %v261
        %2067 = vmatpush1.msra.mxu0 %v260
        %2068 = vmatprep.subr.mxu0 %v263
        %2069 = vmatpush1.msra.mxu0 %v262
        %2070 = vmatprep.subr.mxu0 %v265
        %2071 = vmatpush1.msra.mxu0 %v264
        %2072 = vmatprep.subr.mxu0 %v267
        %2073 = vmatpush1.msra.mxu0 %v266
        %2074 = vmatprep.subr.mxu0 %v269
        %2075 = vmatpush1.msra.mxu0 %v268
        %2076 = vmatprep.subr.mxu0 %v271
        %2077 = vmatpush1.msra.mxu0 %v270
        %2078 = vmatprep.subr.mxu0 %v273
        %2079 = vmatpush1.msra.mxu0 %v272
        %2080 = vmatprep.subr.mxu0 %v275
        %2081 = vmatpush1.msra.mxu0 %v274
        %2082 = vmatprep.subr.mxu0 %v277
        %2083 = vmatpush1.msra.mxu0 %v276
        %2084 = vmatprep.subr.mxu0 %v279
        %2085 = vmatpush1.msra.mxu0 %v278
        %2086 = vmatprep.subr.mxu0 %v281
        %2087 = vmatpush1.msra.mxu0 %v280
        %2088 = vmatprep.subr.mxu0 %v283
        %2089 = vmatpush1.msra.mxu0 %v282
        %2090 = vmatprep.subr.mxu0 %v285
        %2091 = vmatpush1.msra.mxu0 %v284
        %2092 = vmatprep.subr.mxu0 %v287
        %2093 = vmatpush1.msra.mxu0 %v286
        %2094 = vmatprep.subr.mxu0 %v289
        %2095 = vmatpush1.msra.mxu0 %v288
        %2096 = vmatprep.subr.mxu0 %v291
        %2097 = vmatpush1.msra.mxu0 %v290
        %2098 = vmatprep.subr.mxu0 %v293
        %2099 = vmatpush1.msra.mxu0 %v292
        %2100 = vmatprep.subr.mxu0 %v295
        %2101 = vmatpush1.msra.mxu0 %v294
        %2102 = vmatprep.subr.mxu0 %v297
        %2103 = vmatpush1.msra.mxu0 %v296
        %2104 = vmatprep.mubr.f32.mxu0 %v1803
        %2105 = vmatmul.mubr.f32.gmra.mrb[0].mxu0 %v1795
        %v2106 = vpop.f32.mrb[0].mxu0
        %v2107 = vadd.f32 %v1774, %v2106
        %v2108 = vpop.f32.mrb[0].mxu0
        %v2109 = vadd.f32 %v1774, %v2108
        %2110 = vdwg.mxu0
        %2111 = vmatprep.subr.mxu0 %v299
        %2112 = vmatpush1.msra.mxu0 %v298
        %2113 = vmatprep.subr.mxu0 %v301
        %2114 = vmatpush1.msra.mxu0 %v300
        %2115 = vmatprep.subr.mxu0 %v303
        %2116 = vmatpush1.msra.mxu0 %v302
        %2117 = vmatprep.subr.mxu0 %v305
        %2118 = vmatpush1.msra.mxu0 %v304
        %2119 = vmatprep.subr.mxu0 %v307
        %2120 = vmatpush1.msra.mxu0 %v306
        %2121 = vmatprep.subr.mxu0 %v309
        %2122 = vmatpush1.msra.mxu0 %v308
        %2123 = vmatprep.subr.mxu0 %v311
        %2124 = vmatpush1.msra.mxu0 %v310
        %2125 = vmatprep.subr.mxu0 %v313
        %2126 = vmatpush1.msra.mxu0 %v312
        %2127 = vmatprep.subr.mxu0 %v315
        %2128 = vmatpush1.msra.mxu0 %v314
        %2129 = vmatprep.subr.mxu0 %v317
        %2130 = vmatpush1.msra.mxu0 %v316
        %2131 = vmatprep.subr.mxu0 %v319
        %2132 = vmatpush1.msra.mxu0 %v318
        %2133 = vmatprep.subr.mxu0 %v321
        %2134 = vmatpush1.msra.mxu0 %v320
        %2135 = vmatprep.subr.mxu0 %v323
        %2136 = vmatpush1.msra.mxu0 %v322
        %2137 = vmatprep.subr.mxu0 %v325
        %2138 = vmatpush1.msra.mxu0 %v324
        %2139 = vmatprep.subr.mxu0 %v327
        %2140 = vmatpush1.msra.mxu0 %v326
        %2141 = vmatprep.subr.mxu0 %v329
        %2142 = vmatpush1.msra.mxu0 %v328
        %2143 = vmatprep.subr.mxu0 %v331
        %2144 = vmatpush1.msra.mxu0 %v330
        %2145 = vmatprep.subr.mxu0 %v333
        %2146 = vmatpush1.msra.mxu0 %v332
        %2147 = vmatprep.subr.mxu0 %v335
        %2148 = vmatpush1.msra.mxu0 %v334
        %2149 = vmatprep.subr.mxu0 %v337
        %2150 = vmatpush1.msra.mxu0 %v336
        %2151 = vmatprep.subr.mxu0 %v339
        %2152 = vmatpush1.msra.mxu0 %v338
        %2153 = vmatprep.subr.mxu0 %v341
        %2154 = vmatpush1.msra.mxu0 %v340
        %2155 = vmatprep.subr.mxu0 %v343
        %2156 = vmatpush1.msra.mxu0 %v342
        %2157 = vmatprep.subr.mxu0 %v345
        %2158 = vmatpush1.msra.mxu0 %v344
        %2159 = vmatprep.subr.mxu0 %v347
        %2160 = vmatpush1.msra.mxu0 %v346
        %2161 = vmatprep.subr.mxu0 %v349
        %2162 = vmatpush1.msra.mxu0 %v348
        %2163 = vmatprep.subr.mxu0 %v351
        %2164 = vmatpush1.msra.mxu0 %v350
        %2165 = vmatprep.subr.mxu0 %v353
        %2166 = vmatpush1.msra.mxu0 %v352
        %2167 = vmatprep.subr.mxu0 %v355
        %2168 = vmatpush1.msra.mxu0 %v354
        %2169 = vmatprep.subr.mxu0 %v357
        %2170 = vmatpush1.msra.mxu0 %v356
        %2171 = vmatprep.subr.mxu0 %v359
        %2172 = vmatpush1.msra.mxu0 %v358
        %2173 = vmatprep.subr.mxu0 %v361
        %2174 = vmatpush1.msra.mxu0 %v360
        %2175 = vmatprep.mubr.f32.mxu0 %v1804
        %2176 = vmatmul.mubr.f32.gmra.mrb[0].mxu0 %v1802
        %v2177 = vpop.f32.mrb[0].mxu0
        %v2178 = vadd.f32 %v2107, %v2177
        %v2179 = vpop.f32.mrb[0].mxu0
        %v2180 = vadd.f32 %v2109, %v2179
        %2181 = vdwg.mxu0
        %2182 = vmatprep.subr.mxu0 %v363
        %2183 = vmatpush1.msra.mxu0 %v362
        %2184 = vmatprep.subr.mxu0 %v365
        %2185 = vmatpush1.msra.mxu0 %v364
        %2186 = vmatprep.subr.mxu0 %v367
        %2187 = vmatpush1.msra.mxu0 %v366
        %2188 = vmatprep.subr.mxu0 %v369
        %2189 = vmatpush1.msra.mxu0 %v368
        %2190 = vmatprep.subr.mxu0 %v371
        %2191 = vmatpush1.msra.mxu0 %v370
        %2192 = vmatprep.subr.mxu0 %v373
        %2193 = vmatpush1.msra.mxu0 %v372
        %2194 = vmatprep.subr.mxu0 %v375
        %2195 = vmatpush1.msra.mxu0 %v374
        %2196 = vmatprep.subr.mxu0 %v377
        %2197 = vmatpush1.msra.mxu0 %v376
        %2198 = vmatprep.subr.mxu0 %v379
        %2199 = vmatpush1.msra.mxu0 %v378
        %2200 = vmatprep.subr.mxu0 %v381
        %2201 = vmatpush1.msra.mxu0 %v380
        %2202 = vmatprep.subr.mxu0 %v383
        %2203 = vmatpush1.msra.mxu0 %v382
        %2204 = vmatprep.subr.mxu0 %v385
        %2205 = vmatpush1.msra.mxu0 %v384
        %2206 = vmatprep.subr.mxu0 %v387
        %2207 = vmatpush1.msra.mxu0 %v386
        %2208 = vmatprep.subr.mxu0 %v389
        %2209 = vmatpush1.msra.mxu0 %v388
        %2210 = vmatprep.subr.mxu0 %v391
        %2211 = vmatpush1.msra.mxu0 %v390
        %2212 = vmatprep.subr.mxu0 %v393
        %2213 = vmatpush1.msra.mxu0 %v392
        %2214 = vmatprep.subr.mxu0 %v395
        %2215 = vmatpush1.msra.mxu0 %v394
        %2216 = vmatprep.subr.mxu0 %v397
        %2217 = vmatpush1.msra.mxu0 %v396
        %2218 = vmatprep.subr.mxu0 %v399
        %2219 = vmatpush1.msra.mxu0 %v398
        %2220 = vmatprep.subr.mxu0 %v401
        %2221 = vmatpush1.msra.mxu0 %v400
        %2222 = vmatprep.subr.mxu0 %v403
        %2223 = vmatpush1.msra.mxu0 %v402
        %2224 = vmatprep.subr.mxu0 %v405
        %2225 = vmatpush1.msra.mxu0 %v404
        %2226 = vmatprep.subr.mxu0 %v407
        %2227 = vmatpush1.msra.mxu0 %v406
        %2228 = vmatprep.subr.mxu0 %v409
        %2229 = vmatpush1.msra.mxu0 %v408
        %2230 = vmatprep.subr.mxu0 %v411
        %2231 = vmatpush1.msra.mxu0 %v410
        %2232 = vmatprep.subr.mxu0 %v413
        %2233 = vmatpush1.msra.mxu0 %v412
        %2234 = vmatprep.subr.mxu0 %v415
        %2235 = vmatpush1.msra.mxu0 %v414
        %2236 = vmatprep.subr.mxu0 %v417
        %2237 = vmatpush1.msra.mxu0 %v416
        %2238 = vmatprep.subr.mxu0 %v419
        %2239 = vmatpush1.msra.mxu0 %v418
        %2240 = vmatprep.subr.mxu0 %v421
        %2241 = vmatpush1.msra.mxu0 %v420
        %2242 = vmatprep.subr.mxu0 %v423
        %2243 = vmatpush1.msra.mxu0 %v422
        %2244 = vmatprep.subr.mxu0 %v425
        %2245 = vmatpush1.msra.mxu0 %v424
        %2246 = vmatprep.mubr.f32.mxu0 %v1820
        %2247 = vmatmul.mubr.f32.gmra.mrb[0].mxu0 %v1812
        %v2248 = vpop.f32.mrb[0].mxu0
        %v2249 = vadd.f32 %v2178, %v2248
        %v2250 = vpop.f32.mrb[0].mxu0
        %v2251 = vadd.f32 %v2180, %v2250
        %2252 = vdwg.mxu0
        %2253 = vmatprep.subr.mxu0 %v427
        %2254 = vmatpush1.msra.mxu0 %v426
        %2255 = vmatprep.subr.mxu0 %v429
        %2256 = vmatpush1.msra.mxu0 %v428
        %2257 = vmatprep.subr.mxu0 %v431
        %2258 = vmatpush1.msra.mxu0 %v430
        %2259 = vmatprep.subr.mxu0 %v433
        %2260 = vmatpush1.msra.mxu0 %v432
        %2261 = vmatprep.subr.mxu0 %v435
        %2262 = vmatpush1.msra.mxu0 %v434
        %2263 = vmatprep.subr.mxu0 %v437
        %2264 = vmatpush1.msra.mxu0 %v436
        %2265 = vmatprep.subr.mxu0 %v439
        %2266 = vmatpush1.msra.mxu0 %v438
        %2267 = vmatprep.subr.mxu0 %v441
        %2268 = vmatpush1.msra.mxu0 %v440
        %2269 = vmatprep.subr.mxu0 %v443
        %2270 = vmatpush1.msra.mxu0 %v442
        %2271 = vmatprep.subr.mxu0 %v445
        %2272 = vmatpush1.msra.mxu0 %v444
        %2273 = vmatprep.subr.mxu0 %v447
        %2274 = vmatpush1.msra.mxu0 %v446
        %2275 = vmatprep.subr.mxu0 %v449
        %2276 = vmatpush1.msra.mxu0 %v448
        %2277 = vmatprep.subr.mxu0 %v451
        %2278 = vmatpush1.msra.mxu0 %v450
        %2279 = vmatprep.subr.mxu0 %v453
        %2280 = vmatpush1.msra.mxu0 %v452
        %2281 = vmatprep.subr.mxu0 %v455
        %2282 = vmatpush1.msra.mxu0 %v454
        %2283 = vmatprep.subr.mxu0 %v457
        %2284 = vmatpush1.msra.mxu0 %v456
        %2285 = vmatprep.subr.mxu0 %v459
        %2286 = vmatpush1.msra.mxu0 %v458
        %2287 = vmatprep.subr.mxu0 %v461
        %2288 = vmatpush1.msra.mxu0 %v460
        %2289 = vmatprep.subr.mxu0 %v463
        %2290 = vmatpush1.msra.mxu0 %v462
        %2291 = vmatprep.subr.mxu0 %v465
        %2292 = vmatpush1.msra.mxu0 %v464
        %2293 = vmatprep.subr.mxu0 %v467
        %2294 = vmatpush1.msra.mxu0 %v466
        %2295 = vmatprep.subr.mxu0 %v469
        %2296 = vmatpush1.msra.mxu0 %v468
        %2297 = vmatprep.subr.mxu0 %v471
        %2298 = vmatpush1.msra.mxu0 %v470
        %2299 = vmatprep.subr.mxu0 %v473
        %2300 = vmatpush1.msra.mxu0 %v472
        %2301 = vmatprep.subr.mxu0 %v475
        %2302 = vmatpush1.msra.mxu0 %v474
        %2303 = vmatprep.subr.mxu0 %v477
        %2304 = vmatpush1.msra.mxu0 %v476
        %2305 = vmatprep.subr.mxu0 %v479
        %2306 = vmatpush1.msra.mxu0 %v478
        %2307 = vmatprep.subr.mxu0 %v481
        %2308 = vmatpush1.msra.mxu0 %v480
        %2309 = vmatprep.subr.mxu0 %v483
        %2310 = vmatpush1.msra.mxu0 %v482
        %2311 = vmatprep.subr.mxu0 %v485
        %2312 = vmatpush1.msra.mxu0 %v484
        %2313 = vmatprep.subr.mxu0 %v487
        %2314 = vmatpush1.msra.mxu0 %v486
        %2315 = vmatprep.subr.mxu0 %v489
        %2316 = vmatpush1.msra.mxu0 %v488
        %2317 = vmatprep.mubr.f32.mxu0 %v1821
        %2318 = vmatmul.mubr.f32.gmra.mrb[0].mxu0 %v1819
        %v2319 = vpop.f32.mrb[0].mxu0
        %v2320 = vadd.f32 %v2249, %v2319
        %v2321 = vpop.f32.mrb[0].mxu0
        %v2322 = vadd.f32 %v2251, %v2321
        %2323 = vdwg.mxu0
        %2324 = vmatprep.subr.mxu0 %v491
        %2325 = vmatpush1.msra.mxu0 %v490
        %2326 = vmatprep.subr.mxu0 %v493
        %2327 = vmatpush1.msra.mxu0 %v492
        %2328 = vmatprep.subr.mxu0 %v495
        %2329 = vmatpush1.msra.mxu0 %v494
        %2330 = vmatprep.subr.mxu0 %v497
        %2331 = vmatpush1.msra.mxu0 %v496
        %2332 = vmatprep.subr.mxu0 %v499
        %2333 = vmatpush1.msra.mxu0 %v498
        %2334 = vmatprep.subr.mxu0 %v501
        %2335 = vmatpush1.msra.mxu0 %v500
        %2336 = vmatprep.subr.mxu0 %v503
        %2337 = vmatpush1.msra.mxu0 %v502
        %2338 = vmatprep.subr.mxu0 %v505
        %2339 = vmatpush1.msra.mxu0 %v504
        %2340 = vmatprep.subr.mxu0 %v507
        %2341 = vmatpush1.msra.mxu0 %v506
        %2342 = vmatprep.subr.mxu0 %v509
        %2343 = vmatpush1.msra.mxu0 %v508
        %2344 = vmatprep.subr.mxu0 %v511
        %2345 = vmatpush1.msra.mxu0 %v510
        %2346 = vmatprep.subr.mxu0 %v513
        %2347 = vmatpush1.msra.mxu0 %v512
        %2348 = vmatprep.subr.mxu0 %v515
        %2349 = vmatpush1.msra.mxu0 %v514
        %2350 = vmatprep.subr.mxu0 %v517
        %2351 = vmatpush1.msra.mxu0 %v516
        %2352 = vmatprep.subr.mxu0 %v519
        %2353 = vmatpush1.msra.mxu0 %v518
        %2354 = vmatprep.subr.mxu0 %v521
        %2355 = vmatpush1.msra.mxu0 %v520
        %2356 = vmatprep.subr.mxu0 %v523
        %2357 = vmatpush1.msra.mxu0 %v522
        %2358 = vmatprep.subr.mxu0 %v525
        %2359 = vmatpush1.msra.mxu0 %v524
        %2360 = vmatprep.subr.mxu0 %v527
        %2361 = vmatpush1.msra.mxu0 %v526
        %2362 = vmatprep.subr.mxu0 %v529
        %2363 = vmatpush1.msra.mxu0 %v528
        %2364 = vmatprep.subr.mxu0 %v531
        %2365 = vmatpush1.msra.mxu0 %v530
        %2366 = vmatprep.subr.mxu0 %v533
        %2367 = vmatpush1.msra.mxu0 %v532
        %2368 = vmatprep.subr.mxu0 %v535
        %2369 = vmatpush1.msra.mxu0 %v534
        %2370 = vmatprep.subr.mxu0 %v537
        %2371 = vmatpush1.msra.mxu0 %v536
        %2372 = vmatprep.subr.mxu0 %v539
        %2373 = vmatpush1.msra.mxu0 %v538
        %2374 = vmatprep.subr.mxu0 %v541
        %2375 = vmatpush1.msra.mxu0 %v540
        %2376 = vmatprep.subr.mxu0 %v543
        %2377 = vmatpush1.msra.mxu0 %v542
        %2378 = vmatprep.subr.mxu0 %v545
        %2379 = vmatpush1.msra.mxu0 %v544
        %2380 = vmatprep.subr.mxu0 %v547
        %2381 = vmatpush1.msra.mxu0 %v546
        %2382 = vmatprep.subr.mxu0 %v549
        %2383 = vmatpush1.msra.mxu0 %v548
        %2384 = vmatprep.subr.mxu0 %v551
        %2385 = vmatpush1.msra.mxu0 %v550
        %2386 = vmatprep.subr.mxu0 %v553
        %2387 = vmatpush1.msra.mxu0 %v552
        %2388 = vmatprep.mubr.f32.mxu0 %v1837
        %2389 = vmatmul.mubr.f32.gmra.mrb[0].mxu0 %v1829
        %v2390 = vpop.f32.mrb[0].mxu0
        %v2391 = vadd.f32 %v2320, %v2390
        %v2392 = vpop.f32.mrb[0].mxu0
        %v2393 = vadd.f32 %v2322, %v2392
        %2394 = vdwg.mxu0
        %2395 = vmatprep.subr.mxu0 %v555
        %2396 = vmatpush1.msra.mxu0 %v554
        %2397 = vmatprep.subr.mxu0 %v557
        %2398 = vmatpush1.msra.mxu0 %v556
        %2399 = vmatprep.subr.mxu0 %v559
        %2400 = vmatpush1.msra.mxu0 %v558
        %2401 = vmatprep.subr.mxu0 %v561
        %2402 = vmatpush1.msra.mxu0 %v560
        %2403 = vmatprep.subr.mxu0 %v563
        %2404 = vmatpush1.msra.mxu0 %v562
        %2405 = vmatprep.subr.mxu0 %v565
        %2406 = vmatpush1.msra.mxu0 %v564
        %2407 = vmatprep.subr.mxu0 %v567
        %2408 = vmatpush1.msra.mxu0 %v566
        %2409 = vmatprep.subr.mxu0 %v569
        %2410 = vmatpush1.msra.mxu0 %v568
        %2411 = vmatprep.subr.mxu0 %v571
        %2412 = vmatpush1.msra.mxu0 %v570
        %2413 = vmatprep.subr.mxu0 %v573
        %2414 = vmatpush1.msra.mxu0 %v572
        %2415 = vmatprep.subr.mxu0 %v575
        %2416 = vmatpush1.msra.mxu0 %v574
        %2417 = vmatprep.subr.mxu0 %v577
        %2418 = vmatpush1.msra.mxu0 %v576
        %2419 = vmatprep.subr.mxu0 %v579
        %2420 = vmatpush1.msra.mxu0 %v578
        %2421 = vmatprep.subr.mxu0 %v581
        %2422 = vmatpush1.msra.mxu0 %v580
        %2423 = vmatprep.subr.mxu0 %v583
        %2424 = vmatpush1.msra.mxu0 %v582
        %2425 = vmatprep.subr.mxu0 %v585
        %2426 = vmatpush1.msra.mxu0 %v584
        %2427 = vmatprep.subr.mxu0 %v587
        %2428 = vmatpush1.msra.mxu0 %v586
        %2429 = vmatprep.subr.mxu0 %v589
        %2430 = vmatpush1.msra.mxu0 %v588
        %2431 = vmatprep.subr.mxu0 %v591
        %2432 = vmatpush1.msra.mxu0 %v590
        %2433 = vmatprep.subr.mxu0 %v593
        %2434 = vmatpush1.msra.mxu0 %v592
        %2435 = vmatprep.subr.mxu0 %v595
        %2436 = vmatpush1.msra.mxu0 %v594
        %2437 = vmatprep.subr.mxu0 %v597
        %2438 = vmatpush1.msra.mxu0 %v596
        %2439 = vmatprep.subr.mxu0 %v599
        %2440 = vmatpush1.msra.mxu0 %v598
        %2441 = vmatprep.subr.mxu0 %v601
        %2442 = vmatpush1.msra.mxu0 %v600
        %2443 = vmatprep.subr.mxu0 %v603
        %2444 = vmatpush1.msra.mxu0 %v602
        %2445 = vmatprep.subr.mxu0 %v605
        %2446 = vmatpush1.msra.mxu0 %v604
        %2447 = vmatprep.subr.mxu0 %v607
        %2448 = vmatpush1.msra.mxu0 %v606
        %2449 = vmatprep.subr.mxu0 %v609
        %2450 = vmatpush1.msra.mxu0 %v608
        %2451 = vmatprep.subr.mxu0 %v611
        %2452 = vmatpush1.msra.mxu0 %v610
        %2453 = vmatprep.subr.mxu0 %v613
        %2454 = vmatpush1.msra.mxu0 %v612
        %2455 = vmatprep.subr.mxu0 %v615
        %2456 = vmatpush1.msra.mxu0 %v614
        %2457 = vmatprep.subr.mxu0 %v617
        %2458 = vmatpush1.msra.mxu0 %v616
        %2459 = vmatprep.mubr.f32.mxu0 %v1838
        %2460 = vmatmul.mubr.f32.gmra.mrb[0].mxu0 %v1836
        %v2461 = vpop.f32.mrb[0].mxu0
        %v2462 = vadd.f32 %v2391, %v2461
        %v2463 = vpop.f32.mrb[0].mxu0
        %v2464 = vadd.f32 %v2393, %v2463
        %2465 = vdwg.mxu0
        %2466 = vmatprep.subr.mxu0 %v619
        %2467 = vmatpush1.msra.mxu0 %v618
        %2468 = vmatprep.subr.mxu0 %v621
        %2469 = vmatpush1.msra.mxu0 %v620
        %2470 = vmatprep.subr.mxu0 %v623
        %2471 = vmatpush1.msra.mxu0 %v622
        %2472 = vmatprep.subr.mxu0 %v625
        %2473 = vmatpush1.msra.mxu0 %v624
        %2474 = vmatprep.subr.mxu0 %v627
        %2475 = vmatpush1.msra.mxu0 %v626
        %2476 = vmatprep.subr.mxu0 %v629
        %2477 = vmatpush1.msra.mxu0 %v628
        %2478 = vmatprep.subr.mxu0 %v631
        %2479 = vmatpush1.msra.mxu0 %v630
        %2480 = vmatprep.subr.mxu0 %v633
        %2481 = vmatpush1.msra.mxu0 %v632
        %2482 = vmatprep.subr.mxu0 %v635
        %2483 = vmatpush1.msra.mxu0 %v634
        %2484 = vmatprep.subr.mxu0 %v637
        %2485 = vmatpush1.msra.mxu0 %v636
        %2486 = vmatprep.subr.mxu0 %v639
        %2487 = vmatpush1.msra.mxu0 %v638
        %2488 = vmatprep.subr.mxu0 %v641
        %2489 = vmatpush1.msra.mxu0 %v640
        %2490 = vmatprep.subr.mxu0 %v643
        %2491 = vmatpush1.msra.mxu0 %v642
        %2492 = vmatprep.subr.mxu0 %v645
        %2493 = vmatpush1.msra.mxu0 %v644
        %2494 = vmatprep.subr.mxu0 %v647
        %2495 = vmatpush1.msra.mxu0 %v646
        %2496 = vmatprep.subr.mxu0 %v649
        %2497 = vmatpush1.msra.mxu0 %v648
        %2498 = vmatprep.subr.mxu0 %v651
        %2499 = vmatpush1.msra.mxu0 %v650
        %2500 = vmatprep.subr.mxu0 %v653
        %2501 = vmatpush1.msra.mxu0 %v652
        %2502 = vmatprep.subr.mxu0 %v655
        %2503 = vmatpush1.msra.mxu0 %v654
        %2504 = vmatprep.subr.mxu0 %v657
        %2505 = vmatpush1.msra.mxu0 %v656
        %2506 = vmatprep.subr.mxu0 %v659
        %2507 = vmatpush1.msra.mxu0 %v658
        %2508 = vmatprep.subr.mxu0 %v661
        %2509 = vmatpush1.msra.mxu0 %v660
        %2510 = vmatprep.subr.mxu0 %v663
        %2511 = vmatpush1.msra.mxu0 %v662
        %2512 = vmatprep.subr.mxu0 %v665
        %2513 = vmatpush1.msra.mxu0 %v664
        %2514 = vmatprep.subr.mxu0 %v667
        %2515 = vmatpush1.msra.mxu0 %v666
        %2516 = vmatprep.subr.mxu0 %v669
        %2517 = vmatpush1.msra.mxu0 %v668
        %2518 = vmatprep.subr.mxu0 %v671
        %2519 = vmatpush1.msra.mxu0 %v670
        %2520 = vmatprep.subr.mxu0 %v673
        %2521 = vmatpush1.msra.mxu0 %v672
        %2522 = vmatprep.subr.mxu0 %v675
        %2523 = vmatpush1.msra.mxu0 %v674
        %2524 = vmatprep.subr.mxu0 %v677
        %2525 = vmatpush1.msra.mxu0 %v676
        %2526 = vmatprep.subr.mxu0 %v679
        %2527 = vmatpush1.msra.mxu0 %v678
        %2528 = vmatprep.subr.mxu0 %v681
        %2529 = vmatpush1.msra.mxu0 %v680
        %2530 = vmatprep.mubr.f32.mxu0 %v1854
        %2531 = vmatmul.mubr.f32.gmra.mrb[0].mxu0 %v1846
        %v2532 = vpop.f32.mrb[0].mxu0
        %v2533 = vadd.f32 %v2462, %v2532
        %v2534 = vpop.f32.mrb[0].mxu0
        %v2535 = vadd.f32 %v2464, %v2534
        %2536 = vdwg.mxu0
        %2537 = vmatprep.subr.mxu0 %v683
        %2538 = vmatpush1.msra.mxu0 %v682
        %2539 = vmatprep.subr.mxu0 %v685
        %2540 = vmatpush1.msra.mxu0 %v684
        %2541 = vmatprep.subr.mxu0 %v687
        %2542 = vmatpush1.msra.mxu0 %v686
        %2543 = vmatprep.subr.mxu0 %v689
        %2544 = vmatpush1.msra.mxu0 %v688
        %2545 = vmatprep.subr.mxu0 %v691
        %2546 = vmatpush1.msra.mxu0 %v690
        %2547 = vmatprep.subr.mxu0 %v693
        %2548 = vmatpush1.msra.mxu0 %v692
        %2549 = vmatprep.subr.mxu0 %v695
        %2550 = vmatpush1.msra.mxu0 %v694
        %2551 = vmatprep.subr.mxu0 %v697
        %2552 = vmatpush1.msra.mxu0 %v696
        %2553 = vmatprep.subr.mxu0 %v699
        %2554 = vmatpush1.msra.mxu0 %v698
        %2555 = vmatprep.subr.mxu0 %v701
        %2556 = vmatpush1.msra.mxu0 %v700
        %2557 = vmatprep.subr.mxu0 %v703
        %2558 = vmatpush1.msra.mxu0 %v702
        %2559 = vmatprep.subr.mxu0 %v705
        %2560 = vmatpush1.msra.mxu0 %v704
        %2561 = vmatprep.subr.mxu0 %v707
        %2562 = vmatpush1.msra.mxu0 %v706
        %2563 = vmatprep.subr.mxu0 %v709
        %2564 = vmatpush1.msra.mxu0 %v708
        %2565 = vmatprep.subr.mxu0 %v711
        %2566 = vmatpush1.msra.mxu0 %v710
        %2567 = vmatprep.subr.mxu0 %v713
        %2568 = vmatpush1.msra.mxu0 %v712
        %2569 = vmatprep.subr.mxu0 %v715
        %2570 = vmatpush1.msra.mxu0 %v714
        %2571 = vmatprep.subr.mxu0 %v717
        %2572 = vmatpush1.msra.mxu0 %v716
        %2573 = vmatprep.subr.mxu0 %v719
        %2574 = vmatpush1.msra.mxu0 %v718
        %2575 = vmatprep.subr.mxu0 %v721
        %2576 = vmatpush1.msra.mxu0 %v720
        %2577 = vmatprep.subr.mxu0 %v723
        %2578 = vmatpush1.msra.mxu0 %v722
        %2579 = vmatprep.subr.mxu0 %v725
        %2580 = vmatpush1.msra.mxu0 %v724
        %2581 = vmatprep.subr.mxu0 %v727
        %2582 = vmatpush1.msra.mxu0 %v726
        %2583 = vmatprep.subr.mxu0 %v729
        %2584 = vmatpush1.msra.mxu0 %v728
        %2585 = vmatprep.subr.mxu0 %v731
        %2586 = vmatpush1.msra.mxu0 %v730
        %2587 = vmatprep.subr.mxu0 %v733
        %2588 = vmatpush1.msra.mxu0 %v732
        %2589 = vmatprep.subr.mxu0 %v735
        %2590 = vmatpush1.msra.mxu0 %v734
        %2591 = vmatprep.subr.mxu0 %v737
        %2592 = vmatpush1.msra.mxu0 %v736
        %2593 = vmatprep.subr.mxu0 %v739
        %2594 = vmatpush1.msra.mxu0 %v738
        %2595 = vmatprep.subr.mxu0 %v741
        %2596 = vmatpush1.msra.mxu0 %v740
        %2597 = vmatprep.subr.mxu0 %v743
        %2598 = vmatpush1.msra.mxu0 %v742
        %2599 = vmatprep.subr.mxu0 %v745
        %2600 = vmatpush1.msra.mxu0 %v744
        %2601 = vmatprep.mubr.f32.mxu0 %v1855
        %2602 = vmatmul.mubr.f32.gmra.mrb[0].mxu0 %v1853
        %v2603 = vpop.f32.mrb[0].mxu0
        %v2604 = vadd.f32 %v2533, %v2603
        %v2605 = vpop.f32.mrb[0].mxu0
        %v2606 = vadd.f32 %v2535, %v2605
        %2607 = vdwg.mxu0
        %2608 = vmatprep.subr.mxu0 %v747
        %2609 = vmatpush1.msra.mxu0 %v746
        %2610 = vmatprep.subr.mxu0 %v749
        %2611 = vmatpush1.msra.mxu0 %v748
        %2612 = vmatprep.subr.mxu0 %v751
        %2613 = vmatpush1.msra.mxu0 %v750
        %2614 = vmatprep.subr.mxu0 %v753
        %2615 = vmatpush1.msra.mxu0 %v752
        %2616 = vmatprep.subr.mxu0 %v755
        %2617 = vmatpush1.msra.mxu0 %v754
        %2618 = vmatprep.subr.mxu0 %v757
        %2619 = vmatpush1.msra.mxu0 %v756
        %2620 = vmatprep.subr.mxu0 %v759
        %2621 = vmatpush1.msra.mxu0 %v758
        %2622 = vmatprep.subr.mxu0 %v761
        %2623 = vmatpush1.msra.mxu0 %v760
        %2624 = vmatprep.subr.mxu0 %v763
        %2625 = vmatpush1.msra.mxu0 %v762
        %2626 = vmatprep.subr.mxu0 %v765
        %2627 = vmatpush1.msra.mxu0 %v764
        %2628 = vmatprep.subr.mxu0 %v767
        %2629 = vmatpush1.msra.mxu0 %v766
        %2630 = vmatprep.subr.mxu0 %v769
        %2631 = vmatpush1.msra.mxu0 %v768
        %2632 = vmatprep.subr.mxu0 %v771
        %2633 = vmatpush1.msra.mxu0 %v770
        %2634 = vmatprep.subr.mxu0 %v773
        %2635 = vmatpush1.msra.mxu0 %v772
        %2636 = vmatprep.subr.mxu0 %v775
        %2637 = vmatpush1.msra.mxu0 %v774
        %2638 = vmatprep.subr.mxu0 %v777
        %2639 = vmatpush1.msra.mxu0 %v776
        %2640 = vmatprep.subr.mxu0 %v779
        %2641 = vmatpush1.msra.mxu0 %v778
        %2642 = vmatprep.subr.mxu0 %v781
        %2643 = vmatpush1.msra.mxu0 %v780
        %2644 = vmatprep.subr.mxu0 %v783
        %2645 = vmatpush1.msra.mxu0 %v782
        %2646 = vmatprep.subr.mxu0 %v785
        %2647 = vmatpush1.msra.mxu0 %v784
        %2648 = vmatprep.subr.mxu0 %v787
        %2649 = vmatpush1.msra.mxu0 %v786
        %2650 = vmatprep.subr.mxu0 %v789
        %2651 = vmatpush1.msra.mxu0 %v788
        %2652 = vmatprep.subr.mxu0 %v791
        %2653 = vmatpush1.msra.mxu0 %v790
        %2654 = vmatprep.subr.mxu0 %v793
        %2655 = vmatpush1.msra.mxu0 %v792
        %2656 = vmatprep.subr.mxu0 %v795
        %2657 = vmatpush1.msra.mxu0 %v794
        %2658 = vmatprep.subr.mxu0 %v797
        %2659 = vmatpush1.msra.mxu0 %v796
        %2660 = vmatprep.subr.mxu0 %v799
        %2661 = vmatpush1.msra.mxu0 %v798
        %2662 = vmatprep.subr.mxu0 %v801
        %2663 = vmatpush1.msra.mxu0 %v800
        %2664 = vmatprep.subr.mxu0 %v803
        %2665 = vmatpush1.msra.mxu0 %v802
        %2666 = vmatprep.subr.mxu0 %v805
        %2667 = vmatpush1.msra.mxu0 %v804
        %2668 = vmatprep.subr.mxu0 %v807
        %2669 = vmatpush1.msra.mxu0 %v806
        %2670 = vmatprep.subr.mxu0 %v809
        %2671 = vmatpush1.msra.mxu0 %v808
        %2672 = vmatprep.mubr.f32.mxu0 %v1871
        %2673 = vmatmul.mubr.f32.gmra.mrb[0].mxu0 %v1863
        %v2674 = vpop.f32.mrb[0].mxu0
        %v2675 = vadd.f32 %v2604, %v2674
        %v2676 = vpop.f32.mrb[0].mxu0
        %v2677 = vadd.f32 %v2606, %v2676
        %2678 = vdwg.mxu0
        %2679 = vmatprep.subr.mxu0 %v811
        %2680 = vmatpush1.msra.mxu0 %v810
        %2681 = vmatprep.subr.mxu0 %v813
        %2682 = vmatpush1.msra.mxu0 %v812
        %2683 = vmatprep.subr.mxu0 %v815
        %2684 = vmatpush1.msra.mxu0 %v814
        %2685 = vmatprep.subr.mxu0 %v817
        %2686 = vmatpush1.msra.mxu0 %v816
        %2687 = vmatprep.subr.mxu0 %v819
        %2688 = vmatpush1.msra.mxu0 %v818
        %2689 = vmatprep.subr.mxu0 %v821
        %2690 = vmatpush1.msra.mxu0 %v820
        %2691 = vmatprep.subr.mxu0 %v823
        %2692 = vmatpush1.msra.mxu0 %v822
        %2693 = vmatprep.subr.mxu0 %v825
        %2694 = vmatpush1.msra.mxu0 %v824
        %2695 = vmatprep.subr.mxu0 %v827
        %2696 = vmatpush1.msra.mxu0 %v826
        %2697 = vmatprep.subr.mxu0 %v829
        %2698 = vmatpush1.msra.mxu0 %v828
        %2699 = vmatprep.subr.mxu0 %v831
        %2700 = vmatpush1.msra.mxu0 %v830
        %2701 = vmatprep.subr.mxu0 %v833
        %2702 = vmatpush1.msra.mxu0 %v832
        %2703 = vmatprep.subr.mxu0 %v835
        %2704 = vmatpush1.msra.mxu0 %v834
        %2705 = vmatprep.subr.mxu0 %v837
        %2706 = vmatpush1.msra.mxu0 %v836
        %2707 = vmatprep.subr.mxu0 %v839
        %2708 = vmatpush1.msra.mxu0 %v838
        %2709 = vmatprep.subr.mxu0 %v841
        %2710 = vmatpush1.msra.mxu0 %v840
        %2711 = vmatprep.subr.mxu0 %v843
        %2712 = vmatpush1.msra.mxu0 %v842
        %2713 = vmatprep.subr.mxu0 %v845
        %2714 = vmatpush1.msra.mxu0 %v844
        %2715 = vmatprep.subr.mxu0 %v847
        %2716 = vmatpush1.msra.mxu0 %v846
        %2717 = vmatprep.subr.mxu0 %v849
        %2718 = vmatpush1.msra.mxu0 %v848
        %2719 = vmatprep.subr.mxu0 %v851
        %2720 = vmatpush1.msra.mxu0 %v850
        %2721 = vmatprep.subr.mxu0 %v853
        %2722 = vmatpush1.msra.mxu0 %v852
        %2723 = vmatprep.subr.mxu0 %v855
        %2724 = vmatpush1.msra.mxu0 %v854
        %2725 = vmatprep.subr.mxu0 %v857
        %2726 = vmatpush1.msra.mxu0 %v856
        %2727 = vmatprep.subr.mxu0 %v859
        %2728 = vmatpush1.msra.mxu0 %v858
        %2729 = vmatprep.subr.mxu0 %v861
        %2730 = vmatpush1.msra.mxu0 %v860
        %2731 = vmatprep.subr.mxu0 %v863
        %2732 = vmatpush1.msra.mxu0 %v862
        %2733 = vmatprep.subr.mxu0 %v865
        %2734 = vmatpush1.msra.mxu0 %v864
        %2735 = vmatprep.subr.mxu0 %v867
        %2736 = vmatpush1.msra.mxu0 %v866
        %2737 = vmatprep.subr.mxu0 %v869
        %2738 = vmatpush1.msra.mxu0 %v868
        %2739 = vmatprep.subr.mxu0 %v871
        %2740 = vmatpush1.msra.mxu0 %v870
        %2741 = vmatprep.subr.mxu0 %v873
        %2742 = vmatpush1.msra.mxu0 %v872
        %2743 = vmatprep.mubr.f32.mxu0 %v1872
        %2744 = vmatmul.mubr.f32.gmra.mrb[0].mxu0 %v1870
        %v2745 = vpop.f32.mrb[0].mxu0
        %v2746 = vadd.f32 %v2675, %v2745
        %v2747 = vpop.f32.mrb[0].mxu0
        %v2748 = vadd.f32 %v2677, %v2747
        %2749 = vdwg.mxu0
        %2750 = vmatprep.subr.mxu0 %v875
        %2751 = vmatpush1.msra.mxu0 %v874
        %2752 = vmatprep.subr.mxu0 %v877
        %2753 = vmatpush1.msra.mxu0 %v876
        %2754 = vmatprep.subr.mxu0 %v879
        %2755 = vmatpush1.msra.mxu0 %v878
        %2756 = vmatprep.subr.mxu0 %v881
        %2757 = vmatpush1.msra.mxu0 %v880
        %2758 = vmatprep.subr.mxu0 %v883
        %2759 = vmatpush1.msra.mxu0 %v882
        %2760 = vmatprep.subr.mxu0 %v885
        %2761 = vmatpush1.msra.mxu0 %v884
        %2762 = vmatprep.subr.mxu0 %v887
        %2763 = vmatpush1.msra.mxu0 %v886
        %2764 = vmatprep.subr.mxu0 %v889
        %2765 = vmatpush1.msra.mxu0 %v888
        %2766 = vmatprep.subr.mxu0 %v891
        %2767 = vmatpush1.msra.mxu0 %v890
        %2768 = vmatprep.subr.mxu0 %v893
        %2769 = vmatpush1.msra.mxu0 %v892
        %2770 = vmatprep.subr.mxu0 %v895
        %2771 = vmatpush1.msra.mxu0 %v894
        %2772 = vmatprep.subr.mxu0 %v897
        %2773 = vmatpush1.msra.mxu0 %v896
        %2774 = vmatprep.subr.mxu0 %v899
        %2775 = vmatpush1.msra.mxu0 %v898
        %2776 = vmatprep.subr.mxu0 %v901
        %2777 = vmatpush1.msra.mxu0 %v900
        %2778 = vmatprep.subr.mxu0 %v903
        %2779 = vmatpush1.msra.mxu0 %v902
        %2780 = vmatprep.subr.mxu0 %v905
        %2781 = vmatpush1.msra.mxu0 %v904
        %2782 = vmatprep.subr.mxu0 %v907
        %2783 = vmatpush1.msra.mxu0 %v906
        %2784 = vmatprep.subr.mxu0 %v909
        %2785 = vmatpush1.msra.mxu0 %v908
        %2786 = vmatprep.subr.mxu0 %v911
        %2787 = vmatpush1.msra.mxu0 %v910
        %2788 = vmatprep.subr.mxu0 %v913
        %2789 = vmatpush1.msra.mxu0 %v912
        %2790 = vmatprep.subr.mxu0 %v915
        %2791 = vmatpush1.msra.mxu0 %v914
        %2792 = vmatprep.subr.mxu0 %v917
        %2793 = vmatpush1.msra.mxu0 %v916
        %2794 = vmatprep.subr.mxu0 %v919
        %2795 = vmatpush1.msra.mxu0 %v918
        %2796 = vmatprep.subr.mxu0 %v921
        %2797 = vmatpush1.msra.mxu0 %v920
        %2798 = vmatprep.subr.mxu0 %v923
        %2799 = vmatpush1.msra.mxu0 %v922
        %2800 = vmatprep.subr.mxu0 %v925
        %2801 = vmatpush1.msra.mxu0 %v924
        %2802 = vmatprep.subr.mxu0 %v927
        %2803 = vmatpush1.msra.mxu0 %v926
        %2804 = vmatprep.subr.mxu0 %v929
        %2805 = vmatpush1.msra.mxu0 %v928
        %2806 = vmatprep.subr.mxu0 %v931
        %2807 = vmatpush1.msra.mxu0 %v930
        %2808 = vmatprep.subr.mxu0 %v933
        %2809 = vmatpush1.msra.mxu0 %v932
        %2810 = vmatprep.subr.mxu0 %v935
        %2811 = vmatpush1.msra.mxu0 %v934
        %2812 = vmatprep.subr.mxu0 %v937
        %2813 = vmatpush1.msra.mxu0 %v936
        %2814 = vmatprep.mubr.f32.mxu0 %v1888
        %2815 = vmatmul.mubr.f32.gmra.mrb[0].mxu0 %v1880
        %v2816 = vpop.f32.mrb[0].mxu0
        %v2817 = vadd.f32 %v2746, %v2816
        %v2818 = vpop.f32.mrb[0].mxu0
        %v2819 = vadd.f32 %v2748, %v2818
        %2820 = vdwg.mxu0
        %2821 = vmatprep.subr.mxu0 %v939
        %2822 = vmatpush1.msra.mxu0 %v938
        %2823 = vmatprep.subr.mxu0 %v941
        %2824 = vmatpush1.msra.mxu0 %v940
        %2825 = vmatprep.subr.mxu0 %v943
        %2826 = vmatpush1.msra.mxu0 %v942
        %2827 = vmatprep.subr.mxu0 %v945
        %2828 = vmatpush1.msra.mxu0 %v944
        %2829 = vmatprep.subr.mxu0 %v947
        %2830 = vmatpush1.msra.mxu0 %v946
        %2831 = vmatprep.subr.mxu0 %v949
        %2832 = vmatpush1.msra.mxu0 %v948
        %2833 = vmatprep.subr.mxu0 %v951
        %2834 = vmatpush1.msra.mxu0 %v950
        %2835 = vmatprep.subr.mxu0 %v953
        %2836 = vmatpush1.msra.mxu0 %v952
        %2837 = vmatprep.subr.mxu0 %v955
        %2838 = vmatpush1.msra.mxu0 %v954
        %2839 = vmatprep.subr.mxu0 %v957
        %2840 = vmatpush1.msra.mxu0 %v956
        %2841 = vmatprep.subr.mxu0 %v959
        %2842 = vmatpush1.msra.mxu0 %v958
        %2843 = vmatprep.subr.mxu0 %v961
        %2844 = vmatpush1.msra.mxu0 %v960
        %2845 = vmatprep.subr.mxu0 %v963
        %2846 = vmatpush1.msra.mxu0 %v962
        %2847 = vmatprep.subr.mxu0 %v965
        %2848 = vmatpush1.msra.mxu0 %v964
        %2849 = vmatprep.subr.mxu0 %v967
        %2850 = vmatpush1.msra.mxu0 %v966
        %2851 = vmatprep.subr.mxu0 %v969
        %2852 = vmatpush1.msra.mxu0 %v968
        %2853 = vmatprep.subr.mxu0 %v971
        %2854 = vmatpush1.msra.mxu0 %v970
        %2855 = vmatprep.subr.mxu0 %v973
        %2856 = vmatpush1.msra.mxu0 %v972
        %2857 = vmatprep.subr.mxu0 %v975
        %2858 = vmatpush1.msra.mxu0 %v974
        %2859 = vmatprep.subr.mxu0 %v977
        %2860 = vmatpush1.msra.mxu0 %v976
        %2861 = vmatprep.subr.mxu0 %v979
        %2862 = vmatpush1.msra.mxu0 %v978
        %2863 = vmatprep.subr.mxu0 %v981
        %2864 = vmatpush1.msra.mxu0 %v980
        %2865 = vmatprep.subr.mxu0 %v983
        %2866 = vmatpush1.msra.mxu0 %v982
        %2867 = vmatprep.subr.mxu0 %v985
        %2868 = vmatpush1.msra.mxu0 %v984
        %2869 = vmatprep.subr.mxu0 %v987
        %2870 = vmatpush1.msra.mxu0 %v986
        %2871 = vmatprep.subr.mxu0 %v989
        %2872 = vmatpush1.msra.mxu0 %v988
        %2873 = vmatprep.subr.mxu0 %v991
        %2874 = vmatpush1.msra.mxu0 %v990
        %2875 = vmatprep.subr.mxu0 %v993
        %2876 = vmatpush1.msra.mxu0 %v992
        %2877 = vmatprep.subr.mxu0 %v995
        %2878 = vmatpush1.msra.mxu0 %v994
        %2879 = vmatprep.subr.mxu0 %v997
        %2880 = vmatpush1.msra.mxu0 %v996
        %2881 = vmatprep.subr.mxu0 %v999
        %2882 = vmatpush1.msra.mxu0 %v998
        %2883 = vmatprep.subr.mxu0 %v1001
        %2884 = vmatpush1.msra.mxu0 %v1000
        %2885 = vmatprep.mubr.f32.mxu0 %v1889
        %2886 = vmatmul.mubr.f32.gmra.mrb[0].mxu0 %v1887
        %v2887 = vpop.f32.mrb[0].mxu0
        %v2888 = vadd.f32 %v2817, %v2887
        %v2889 = vpop.f32.mrb[0].mxu0
        %v2890 = vadd.f32 %v2819, %v2889
        %2891 = vdwg.mxu0
        %2892 = vmatprep.subr.mxu0 %v1003
        %2893 = vmatpush1.msra.mxu0 %v1002
        %2894 = vmatprep.subr.mxu0 %v1005
        %2895 = vmatpush1.msra.mxu0 %v1004
        %2896 = vmatprep.subr.mxu0 %v1007
        %2897 = vmatpush1.msra.mxu0 %v1006
        %2898 = vmatprep.subr.mxu0 %v1009
        %2899 = vmatpush1.msra.mxu0 %v1008
        %2900 = vmatprep.subr.mxu0 %v1011
        %2901 = vmatpush1.msra.mxu0 %v1010
        %2902 = vmatprep.subr.mxu0 %v1013
        %2903 = vmatpush1.msra.mxu0 %v1012
        %2904 = vmatprep.subr.mxu0 %v1015
        %2905 = vmatpush1.msra.mxu0 %v1014
        %2906 = vmatprep.subr.mxu0 %v1017
        %2907 = vmatpush1.msra.mxu0 %v1016
        %2908 = vmatprep.subr.mxu0 %v1019
        %2909 = vmatpush1.msra.mxu0 %v1018
        %2910 = vmatprep.subr.mxu0 %v1021
        %2911 = vmatpush1.msra.mxu0 %v1020
        %2912 = vmatprep.subr.mxu0 %v1023
        %2913 = vmatpush1.msra.mxu0 %v1022
        %2914 = vmatprep.subr.mxu0 %v1025
        %2915 = vmatpush1.msra.mxu0 %v1024
        %2916 = vmatprep.subr.mxu0 %v1027
        %2917 = vmatpush1.msra.mxu0 %v1026
        %2918 = vmatprep.subr.mxu0 %v1029
        %2919 = vmatpush1.msra.mxu0 %v1028
        %2920 = vmatprep.subr.mxu0 %v1031
        %2921 = vmatpush1.msra.mxu0 %v1030
        %2922 = vmatprep.subr.mxu0 %v1033
        %2923 = vmatpush1.msra.mxu0 %v1032
        %2924 = vmatprep.subr.mxu0 %v1035
        %2925 = vmatpush1.msra.mxu0 %v1034
        %2926 = vmatprep.subr.mxu0 %v1037
        %2927 = vmatpush1.msra.mxu0 %v1036
        %2928 = vmatprep.subr.mxu0 %v1039
        %2929 = vmatpush1.msra.mxu0 %v1038
        %2930 = vmatprep.subr.mxu0 %v1041
        %2931 = vmatpush1.msra.mxu0 %v1040
        %2932 = vmatprep.subr.mxu0 %v1043
        %2933 = vmatpush1.msra.mxu0 %v1042
        %2934 = vmatprep.subr.mxu0 %v1045
        %2935 = vmatpush1.msra.mxu0 %v1044
        %2936 = vmatprep.subr.mxu0 %v1047
        %2937 = vmatpush1.msra.mxu0 %v1046
        %2938 = vmatprep.subr.mxu0 %v1049
        %2939 = vmatpush1.msra.mxu0 %v1048
        %2940 = vmatprep.subr.mxu0 %v1051
        %2941 = vmatpush1.msra.mxu0 %v1050
        %2942 = vmatprep.subr.mxu0 %v1053
        %2943 = vmatpush1.msra.mxu0 %v1052
        %2944 = vmatprep.subr.mxu0 %v1055
        %2945 = vmatpush1.msra.mxu0 %v1054
        %2946 = vmatprep.subr.mxu0 %v1057
        %2947 = vmatpush1.msra.mxu0 %v1056
        %2948 = vmatprep.subr.mxu0 %v1059
        %2949 = vmatpush1.msra.mxu0 %v1058
        %2950 = vmatprep.subr.mxu0 %v1061
        %2951 = vmatpush1.msra.mxu0 %v1060
        %2952 = vmatprep.subr.mxu0 %v1063
        %2953 = vmatpush1.msra.mxu0 %v1062
        %2954 = vmatprep.subr.mxu0 %v1065
        %2955 = vmatpush1.msra.mxu0 %v1064
        %2956 = vmatprep.mubr.f32.mxu0 %v1905
        %2957 = vmatmul.mubr.f32.gmra.mrb[0].mxu0 %v1897
        %v2958 = vpop.f32.mrb[0].mxu0
        %v2959 = vadd.f32 %v2888, %v2958
        %v2960 = vpop.f32.mrb[0].mxu0
        %v2961 = vadd.f32 %v2890, %v2960
        %2962 = vdwg.mxu0
        %2963 = vmatprep.subr.mxu0 %v1067
        %2964 = vmatpush1.msra.mxu0 %v1066
        %2965 = vmatprep.subr.mxu0 %v1069
        %2966 = vmatpush1.msra.mxu0 %v1068
        %2967 = vmatprep.subr.mxu0 %v1071
        %2968 = vmatpush1.msra.mxu0 %v1070
        %2969 = vmatprep.subr.mxu0 %v1073
        %2970 = vmatpush1.msra.mxu0 %v1072
        %2971 = vmatprep.subr.mxu0 %v1075
        %2972 = vmatpush1.msra.mxu0 %v1074
        %2973 = vmatprep.subr.mxu0 %v1077
        %2974 = vmatpush1.msra.mxu0 %v1076
        %2975 = vmatprep.subr.mxu0 %v1079
        %2976 = vmatpush1.msra.mxu0 %v1078
        %2977 = vmatprep.subr.mxu0 %v1081
        %2978 = vmatpush1.msra.mxu0 %v1080
        %2979 = vmatprep.subr.mxu0 %v1083
        %2980 = vmatpush1.msra.mxu0 %v1082
        %2981 = vmatprep.subr.mxu0 %v1085
        %2982 = vmatpush1.msra.mxu0 %v1084
        %2983 = vmatprep.subr.mxu0 %v1087
        %2984 = vmatpush1.msra.mxu0 %v1086
        %2985 = vmatprep.subr.mxu0 %v1089
        %2986 = vmatpush1.msra.mxu0 %v1088
        %2987 = vmatprep.subr.mxu0 %v1091
        %2988 = vmatpush1.msra.mxu0 %v1090
        %2989 = vmatprep.subr.mxu0 %v1093
        %2990 = vmatpush1.msra.mxu0 %v1092
        %2991 = vmatprep.subr.mxu0 %v1095
        %2992 = vmatpush1.msra.mxu0 %v1094
        %2993 = vmatprep.subr.mxu0 %v1097
        %2994 = vmatpush1.msra.mxu0 %v1096
        %2995 = vmatprep.subr.mxu0 %v1099
        %2996 = vmatpush1.msra.mxu0 %v1098
        %2997 = vmatprep.subr.mxu0 %v1101
        %2998 = vmatpush1.msra.mxu0 %v1100
        %2999 = vmatprep.subr.mxu0 %v1103
        %3000 = vmatpush1.msra.mxu0 %v1102
        %3001 = vmatprep.subr.mxu0 %v1105
        %3002 = vmatpush1.msra.mxu0 %v1104
        %3003 = vmatprep.subr.mxu0 %v1107
        %3004 = vmatpush1.msra.mxu0 %v1106
        %3005 = vmatprep.subr.mxu0 %v1109
        %3006 = vmatpush1.msra.mxu0 %v1108
        %3007 = vmatprep.subr.mxu0 %v1111
        %3008 = vmatpush1.msra.mxu0 %v1110
        %3009 = vmatprep.subr.mxu0 %v1113
        %3010 = vmatpush1.msra.mxu0 %v1112
        %3011 = vmatprep.subr.mxu0 %v1115
        %3012 = vmatpush1.msra.mxu0 %v1114
        %3013 = vmatprep.subr.mxu0 %v1117
        %3014 = vmatpush1.msra.mxu0 %v1116
        %3015 = vmatprep.subr.mxu0 %v1119
        %3016 = vmatpush1.msra.mxu0 %v1118
        %3017 = vmatprep.subr.mxu0 %v1121
        %3018 = vmatpush1.msra.mxu0 %v1120
        %3019 = vmatprep.subr.mxu0 %v1123
        %3020 = vmatpush1.msra.mxu0 %v1122
        %3021 = vmatprep.subr.mxu0 %v1125
        %3022 = vmatpush1.msra.mxu0 %v1124
        %3023 = vmatprep.subr.mxu0 %v1127
        %3024 = vmatpush1.msra.mxu0 %v1126
        %3025 = vmatprep.subr.mxu0 %v1129
        %3026 = vmatpush1.msra.mxu0 %v1128
        %3027 = vmatprep.mubr.f32.mxu0 %v1906
        %3028 = vmatmul.mubr.f32.gmra.mrb[0].mxu0 %v1904
        %v3029 = vpop.f32.mrb[0].mxu0
        %v3030 = vadd.f32 %v2959, %v3029
        %v3031 = vpop.f32.mrb[0].mxu0
        %v3032 = vadd.f32 %v2961, %v3031
        %3033 = vdwg.mxu0
        %3034 = vmatprep.subr.mxu0 %v1131
        %3035 = vmatpush1.msra.mxu0 %v1130
        %3036 = vmatprep.subr.mxu0 %v1133
        %3037 = vmatpush1.msra.mxu0 %v1132
        %3038 = vmatprep.subr.mxu0 %v1135
        %3039 = vmatpush1.msra.mxu0 %v1134
        %3040 = vmatprep.subr.mxu0 %v1137
        %3041 = vmatpush1.msra.mxu0 %v1136
        %3042 = vmatprep.subr.mxu0 %v1139
        %3043 = vmatpush1.msra.mxu0 %v1138
        %3044 = vmatprep.subr.mxu0 %v1141
        %3045 = vmatpush1.msra.mxu0 %v1140
        %3046 = vmatprep.subr.mxu0 %v1143
        %3047 = vmatpush1.msra.mxu0 %v1142
        %3048 = vmatprep.subr.mxu0 %v1145
        %3049 = vmatpush1.msra.mxu0 %v1144
        %3050 = vmatprep.subr.mxu0 %v1147
        %3051 = vmatpush1.msra.mxu0 %v1146
        %3052 = vmatprep.subr.mxu0 %v1149
        %3053 = vmatpush1.msra.mxu0 %v1148
        %3054 = vmatprep.subr.mxu0 %v1151
        %3055 = vmatpush1.msra.mxu0 %v1150
        %3056 = vmatprep.subr.mxu0 %v1153
        %3057 = vmatpush1.msra.mxu0 %v1152
        %3058 = vmatprep.subr.mxu0 %v1155
        %3059 = vmatpush1.msra.mxu0 %v1154
        %3060 = vmatprep.subr.mxu0 %v1157
        %3061 = vmatpush1.msra.mxu0 %v1156
        %3062 = vmatprep.subr.mxu0 %v1159
        %3063 = vmatpush1.msra.mxu0 %v1158
        %3064 = vmatprep.subr.mxu0 %v1161
        %3065 = vmatpush1.msra.mxu0 %v1160
        %3066 = vmatprep.subr.mxu0 %v1163
        %3067 = vmatpush1.msra.mxu0 %v1162
        %3068 = vmatprep.subr.mxu0 %v1165
        %3069 = vmatpush1.msra.mxu0 %v1164
        %3070 = vmatprep.subr.mxu0 %v1167
        %3071 = vmatpush1.msra.mxu0 %v1166
        %3072 = vmatprep.subr.mxu0 %v1169
        %3073 = vmatpush1.msra.mxu0 %v1168
        %3074 = vmatprep.subr.mxu0 %v1171
        %3075 = vmatpush1.msra.mxu0 %v1170
        %3076 = vmatprep.subr.mxu0 %v1173
        %3077 = vmatpush1.msra.mxu0 %v1172
        %3078 = vmatprep.subr.mxu0 %v1175
        %3079 = vmatpush1.msra.mxu0 %v1174
        %3080 = vmatprep.subr.mxu0 %v1177
        %3081 = vmatpush1.msra.mxu0 %v1176
        %3082 = vmatprep.subr.mxu0 %v1179
        %3083 = vmatpush1.msra.mxu0 %v1178
        %3084 = vmatprep.subr.mxu0 %v1181
        %3085 = vmatpush1.msra.mxu0 %v1180
        %3086 = vmatprep.subr.mxu0 %v1183
        %3087 = vmatpush1.msra.mxu0 %v1182
        %3088 = vmatprep.subr.mxu0 %v1185
        %3089 = vmatpush1.msra.mxu0 %v1184
        %3090 = vmatprep.subr.mxu0 %v1187
        %3091 = vmatpush1.msra.mxu0 %v1186
        %3092 = vmatprep.subr.mxu0 %v1189
        %3093 = vmatpush1.msra.mxu0 %v1188
        %3094 = vmatprep.subr.mxu0 %v1191
        %3095 = vmatpush1.msra.mxu0 %v1190
        %3096 = vmatprep.subr.mxu0 %v1193
        %3097 = vmatpush1.msra.mxu0 %v1192
        %3098 = vmatprep.mubr.f32.mxu0 %v1922
        %3099 = vmatmul.mubr.f32.gmra.mrb[0].mxu0 %v1914
        %v3100 = vpop.f32.mrb[0].mxu0
        %v3101 = vadd.f32 %v3030, %v3100
        %v3102 = vpop.f32.mrb[0].mxu0
        %v3103 = vadd.f32 %v3032, %v3102
        %3104 = vdwg.mxu0
        %3105 = vmatprep.subr.mxu0 %v1195
        %3106 = vmatpush1.msra.mxu0 %v1194
        %3107 = vmatprep.subr.mxu0 %v1197
        %3108 = vmatpush1.msra.mxu0 %v1196
        %3109 = vmatprep.subr.mxu0 %v1199
        %3110 = vmatpush1.msra.mxu0 %v1198
        %3111 = vmatprep.subr.mxu0 %v1201
        %3112 = vmatpush1.msra.mxu0 %v1200
        %3113 = vmatprep.subr.mxu0 %v1203
        %3114 = vmatpush1.msra.mxu0 %v1202
        %3115 = vmatprep.subr.mxu0 %v1205
        %3116 = vmatpush1.msra.mxu0 %v1204
        %3117 = vmatprep.subr.mxu0 %v1207
        %3118 = vmatpush1.msra.mxu0 %v1206
        %3119 = vmatprep.subr.mxu0 %v1209
        %3120 = vmatpush1.msra.mxu0 %v1208
        %3121 = vmatprep.subr.mxu0 %v1211
        %3122 = vmatpush1.msra.mxu0 %v1210
        %3123 = vmatprep.subr.mxu0 %v1213
        %3124 = vmatpush1.msra.mxu0 %v1212
        %3125 = vmatprep.subr.mxu0 %v1215
        %3126 = vmatpush1.msra.mxu0 %v1214
        %3127 = vmatprep.subr.mxu0 %v1217
        %3128 = vmatpush1.msra.mxu0 %v1216
        %3129 = vmatprep.subr.mxu0 %v1219
        %3130 = vmatpush1.msra.mxu0 %v1218
        %3131 = vmatprep.subr.mxu0 %v1221
        %3132 = vmatpush1.msra.mxu0 %v1220
        %3133 = vmatprep.subr.mxu0 %v1223
        %3134 = vmatpush1.msra.mxu0 %v1222
        %3135 = vmatprep.subr.mxu0 %v1225
        %3136 = vmatpush1.msra.mxu0 %v1224
        %3137 = vmatprep.subr.mxu0 %v1227
        %3138 = vmatpush1.msra.mxu0 %v1226
        %3139 = vmatprep.subr.mxu0 %v1229
        %3140 = vmatpush1.msra.mxu0 %v1228
        %3141 = vmatprep.subr.mxu0 %v1231
        %3142 = vmatpush1.msra.mxu0 %v1230
        %3143 = vmatprep.subr.mxu0 %v1233
        %3144 = vmatpush1.msra.mxu0 %v1232
        %3145 = vmatprep.subr.mxu0 %v1235
        %3146 = vmatpush1.msra.mxu0 %v1234
        %3147 = vmatprep.subr.mxu0 %v1237
        %3148 = vmatpush1.msra.mxu0 %v1236
        %3149 = vmatprep.subr.mxu0 %v1239
        %3150 = vmatpush1.msra.mxu0 %v1238
        %3151 = vmatprep.subr.mxu0 %v1241
        %3152 = vmatpush1.msra.mxu0 %v1240
        %3153 = vmatprep.subr.mxu0 %v1243
        %3154 = vmatpush1.msra.mxu0 %v1242
        %3155 = vmatprep.subr.mxu0 %v1245
        %3156 = vmatpush1.msra.mxu0 %v1244
        %3157 = vmatprep.subr.mxu0 %v1247
        %3158 = vmatpush1.msra.mxu0 %v1246
        %3159 = vmatprep.subr.mxu0 %v1249
        %3160 = vmatpush1.msra.mxu0 %v1248
        %3161 = vmatprep.subr.mxu0 %v1251
        %3162 = vmatpush1.msra.mxu0 %v1250
        %3163 = vmatprep.subr.mxu0 %v1253
        %3164 = vmatpush1.msra.mxu0 %v1252
        %3165 = vmatprep.subr.mxu0 %v1255
        %3166 = vmatpush1.msra.mxu0 %v1254
        %3167 = vmatprep.subr.mxu0 %v1257
        %3168 = vmatpush1.msra.mxu0 %v1256
        %3169 = vmatprep.mubr.f32.mxu0 %v1923
        %3170 = vmatmul.mubr.f32.gmra.mrb[0].mxu0 %v1921
        %v3171 = vpop.f32.mrb[0].mxu0
        %v3172 = vadd.f32 %v3101, %v3171
        %v3173 = vpop.f32.mrb[0].mxu0
        %v3174 = vadd.f32 %v3103, %v3173
        %3175 = vdwg.mxu0
        %3176 = vmatprep.subr.mxu0 %v1259
        %3177 = vmatpush1.msra.mxu0 %v1258
        %3178 = vmatprep.subr.mxu0 %v1261
        %3179 = vmatpush1.msra.mxu0 %v1260
        %3180 = vmatprep.subr.mxu0 %v1263
        %3181 = vmatpush1.msra.mxu0 %v1262
        %3182 = vmatprep.subr.mxu0 %v1265
        %3183 = vmatpush1.msra.mxu0 %v1264
        %3184 = vmatprep.subr.mxu0 %v1267
        %3185 = vmatpush1.msra.mxu0 %v1266
        %3186 = vmatprep.subr.mxu0 %v1269
        %3187 = vmatpush1.msra.mxu0 %v1268
        %3188 = vmatprep.subr.mxu0 %v1271
        %3189 = vmatpush1.msra.mxu0 %v1270
        %3190 = vmatprep.subr.mxu0 %v1273
        %3191 = vmatpush1.msra.mxu0 %v1272
        %3192 = vmatprep.subr.mxu0 %v1275
        %3193 = vmatpush1.msra.mxu0 %v1274
        %3194 = vmatprep.subr.mxu0 %v1277
        %3195 = vmatpush1.msra.mxu0 %v1276
        %3196 = vmatprep.subr.mxu0 %v1279
        %3197 = vmatpush1.msra.mxu0 %v1278
        %3198 = vmatprep.subr.mxu0 %v1281
        %3199 = vmatpush1.msra.mxu0 %v1280
        %3200 = vmatprep.subr.mxu0 %v1283
        %3201 = vmatpush1.msra.mxu0 %v1282
        %3202 = vmatprep.subr.mxu0 %v1285
        %3203 = vmatpush1.msra.mxu0 %v1284
        %3204 = vmatprep.subr.mxu0 %v1287
        %3205 = vmatpush1.msra.mxu0 %v1286
        %3206 = vmatprep.subr.mxu0 %v1289
        %3207 = vmatpush1.msra.mxu0 %v1288
        %3208 = vmatprep.subr.mxu0 %v1291
        %3209 = vmatpush1.msra.mxu0 %v1290
        %3210 = vmatprep.subr.mxu0 %v1293
        %3211 = vmatpush1.msra.mxu0 %v1292
        %3212 = vmatprep.subr.mxu0 %v1295
        %3213 = vmatpush1.msra.mxu0 %v1294
        %3214 = vmatprep.subr.mxu0 %v1297
        %3215 = vmatpush1.msra.mxu0 %v1296
        %3216 = vmatprep.subr.mxu0 %v1299
        %3217 = vmatpush1.msra.mxu0 %v1298
        %3218 = vmatprep.subr.mxu0 %v1301
        %3219 = vmatpush1.msra.mxu0 %v1300
        %3220 = vmatprep.subr.mxu0 %v1303
        %3221 = vmatpush1.msra.mxu0 %v1302
        %3222 = vmatprep.subr.mxu0 %v1305
        %3223 = vmatpush1.msra.mxu0 %v1304
        %3224 = vmatprep.subr.mxu0 %v1307
        %3225 = vmatpush1.msra.mxu0 %v1306
        %3226 = vmatprep.subr.mxu0 %v1309
        %3227 = vmatpush1.msra.mxu0 %v1308
        %3228 = vmatprep.subr.mxu0 %v1311
        %3229 = vmatpush1.msra.mxu0 %v1310
        %3230 = vmatprep.subr.mxu0 %v1313
        %3231 = vmatpush1.msra.mxu0 %v1312
        %3232 = vmatprep.subr.mxu0 %v1315
        %3233 = vmatpush1.msra.mxu0 %v1314
        %3234 = vmatprep.subr.mxu0 %v1317
        %3235 = vmatpush1.msra.mxu0 %v1316
        %3236 = vmatprep.subr.mxu0 %v1319
        %3237 = vmatpush1.msra.mxu0 %v1318
        %3238 = vmatprep.subr.mxu0 %v1321
        %3239 = vmatpush1.msra.mxu0 %v1320
        %3240 = vmatprep.mubr.f32.mxu0 %v1939
        %3241 = vmatmul.mubr.f32.gmra.mrb[0].mxu0 %v1931
        %v3242 = vpop.f32.mrb[0].mxu0
        %v3243 = vadd.f32 %v3172, %v3242
        %v3244 = vpop.f32.mrb[0].mxu0
        %v3245 = vadd.f32 %v3174, %v3244
        %3246 = vdwg.mxu0
        %3247 = vmatprep.subr.mxu0 %v1323
        %3248 = vmatpush1.msra.mxu0 %v1322
        %3249 = vmatprep.subr.mxu0 %v1325
        %3250 = vmatpush1.msra.mxu0 %v1324
        %3251 = vmatprep.subr.mxu0 %v1327
        %3252 = vmatpush1.msra.mxu0 %v1326
        %3253 = vmatprep.subr.mxu0 %v1329
        %3254 = vmatpush1.msra.mxu0 %v1328
        %3255 = vmatprep.subr.mxu0 %v1331
        %3256 = vmatpush1.msra.mxu0 %v1330
        %3257 = vmatprep.subr.mxu0 %v1333
        %3258 = vmatpush1.msra.mxu0 %v1332
        %3259 = vmatprep.subr.mxu0 %v1335
        %3260 = vmatpush1.msra.mxu0 %v1334
        %3261 = vmatprep.subr.mxu0 %v1337
        %3262 = vmatpush1.msra.mxu0 %v1336
        %3263 = vmatprep.subr.mxu0 %v1339
        %3264 = vmatpush1.msra.mxu0 %v1338
        %3265 = vmatprep.subr.mxu0 %v1341
        %3266 = vmatpush1.msra.mxu0 %v1340
        %3267 = vmatprep.subr.mxu0 %v1343
        %3268 = vmatpush1.msra.mxu0 %v1342
        %3269 = vmatprep.subr.mxu0 %v1345
        %3270 = vmatpush1.msra.mxu0 %v1344
        %3271 = vmatprep.subr.mxu0 %v1347
        %3272 = vmatpush1.msra.mxu0 %v1346
        %3273 = vmatprep.subr.mxu0 %v1349
        %3274 = vmatpush1.msra.mxu0 %v1348
        %3275 = vmatprep.subr.mxu0 %v1351
        %3276 = vmatpush1.msra.mxu0 %v1350
        %3277 = vmatprep.subr.mxu0 %v1353
        %3278 = vmatpush1.msra.mxu0 %v1352
        %3279 = vmatprep.subr.mxu0 %v1355
        %3280 = vmatpush1.msra.mxu0 %v1354
        %3281 = vmatprep.subr.mxu0 %v1357
        %3282 = vmatpush1.msra.mxu0 %v1356
        %3283 = vmatprep.subr.mxu0 %v1359
        %3284 = vmatpush1.msra.mxu0 %v1358
        %3285 = vmatprep.subr.mxu0 %v1361
        %3286 = vmatpush1.msra.mxu0 %v1360
        %3287 = vmatprep.subr.mxu0 %v1363
        %3288 = vmatpush1.msra.mxu0 %v1362
        %3289 = vmatprep.subr.mxu0 %v1365
        %3290 = vmatpush1.msra.mxu0 %v1364
        %3291 = vmatprep.subr.mxu0 %v1367
        %3292 = vmatpush1.msra.mxu0 %v1366
        %3293 = vmatprep.subr.mxu0 %v1369
        %3294 = vmatpush1.msra.mxu0 %v1368
        %3295 = vmatprep.subr.mxu0 %v1371
        %3296 = vmatpush1.msra.mxu0 %v1370
        %3297 = vmatprep.subr.mxu0 %v1373
        %3298 = vmatpush1.msra.mxu0 %v1372
        %3299 = vmatprep.subr.mxu0 %v1375
        %3300 = vmatpush1.msra.mxu0 %v1374
        %3301 = vmatprep.subr.mxu0 %v1377
        %3302 = vmatpush1.msra.mxu0 %v1376
        %3303 = vmatprep.subr.mxu0 %v1379
        %3304 = vmatpush1.msra.mxu0 %v1378
        %3305 = vmatprep.subr.mxu0 %v1381
        %3306 = vmatpush1.msra.mxu0 %v1380
        %3307 = vmatprep.subr.mxu0 %v1383
        %3308 = vmatpush1.msra.mxu0 %v1382
        %3309 = vmatprep.subr.mxu0 %v1385
        %3310 = vmatpush1.msra.mxu0 %v1384
        %3311 = vmatprep.mubr.f32.mxu0 %v1940
        %3312 = vmatmul.mubr.f32.gmra.mrb[0].mxu0 %v1938
        %v3313 = vpop.f32.mrb[0].mxu0
        %v3314 = vadd.f32 %v3243, %v3313
        %v3315 = vpop.f32.mrb[0].mxu0
        %v3316 = vadd.f32 %v3245, %v3315
        %3317 = vdwg.mxu0
        %3318 = vmatprep.subr.mxu0 %v1387
        %3319 = vmatpush1.msra.mxu0 %v1386
        %3320 = vmatprep.subr.mxu0 %v1389
        %3321 = vmatpush1.msra.mxu0 %v1388
        %3322 = vmatprep.subr.mxu0 %v1391
        %3323 = vmatpush1.msra.mxu0 %v1390
        %3324 = vmatprep.subr.mxu0 %v1393
        %3325 = vmatpush1.msra.mxu0 %v1392
        %3326 = vmatprep.subr.mxu0 %v1395
        %3327 = vmatpush1.msra.mxu0 %v1394
        %3328 = vmatprep.subr.mxu0 %v1397
        %3329 = vmatpush1.msra.mxu0 %v1396
        %3330 = vmatprep.subr.mxu0 %v1399
        %3331 = vmatpush1.msra.mxu0 %v1398
        %3332 = vmatprep.subr.mxu0 %v1401
        %3333 = vmatpush1.msra.mxu0 %v1400
        %3334 = vmatprep.subr.mxu0 %v1403
        %3335 = vmatpush1.msra.mxu0 %v1402
        %3336 = vmatprep.subr.mxu0 %v1405
        %3337 = vmatpush1.msra.mxu0 %v1404
        %3338 = vmatprep.subr.mxu0 %v1407
        %3339 = vmatpush1.msra.mxu0 %v1406
        %3340 = vmatprep.subr.mxu0 %v1409
        %3341 = vmatpush1.msra.mxu0 %v1408
        %3342 = vmatprep.subr.mxu0 %v1411
        %3343 = vmatpush1.msra.mxu0 %v1410
        %3344 = vmatprep.subr.mxu0 %v1413
        %3345 = vmatpush1.msra.mxu0 %v1412
        %3346 = vmatprep.subr.mxu0 %v1415
        %3347 = vmatpush1.msra.mxu0 %v1414
        %3348 = vmatprep.subr.mxu0 %v1417
        %3349 = vmatpush1.msra.mxu0 %v1416
        %3350 = vmatprep.subr.mxu0 %v1419
        %3351 = vmatpush1.msra.mxu0 %v1418
        %3352 = vmatprep.subr.mxu0 %v1421
        %3353 = vmatpush1.msra.mxu0 %v1420
        %3354 = vmatprep.subr.mxu0 %v1423
        %3355 = vmatpush1.msra.mxu0 %v1422
        %3356 = vmatprep.subr.mxu0 %v1425
        %3357 = vmatpush1.msra.mxu0 %v1424
        %3358 = vmatprep.subr.mxu0 %v1427
        %3359 = vmatpush1.msra.mxu0 %v1426
        %3360 = vmatprep.subr.mxu0 %v1429
        %3361 = vmatpush1.msra.mxu0 %v1428
        %3362 = vmatprep.subr.mxu0 %v1431
        %3363 = vmatpush1.msra.mxu0 %v1430
        %3364 = vmatprep.subr.mxu0 %v1433
        %3365 = vmatpush1.msra.mxu0 %v1432
        %3366 = vmatprep.subr.mxu0 %v1435
        %3367 = vmatpush1.msra.mxu0 %v1434
        %3368 = vmatprep.subr.mxu0 %v1437
        %3369 = vmatpush1.msra.mxu0 %v1436
        %3370 = vmatprep.subr.mxu0 %v1439
        %3371 = vmatpush1.msra.mxu0 %v1438
        %3372 = vmatprep.subr.mxu0 %v1441
        %3373 = vmatpush1.msra.mxu0 %v1440
        %3374 = vmatprep.subr.mxu0 %v1443
        %3375 = vmatpush1.msra.mxu0 %v1442
        %3376 = vmatprep.subr.mxu0 %v1445
        %3377 = vmatpush1.msra.mxu0 %v1444
        %3378 = vmatprep.subr.mxu0 %v1447
        %3379 = vmatpush1.msra.mxu0 %v1446
        %3380 = vmatprep.subr.mxu0 %v1449
        %3381 = vmatpush1.msra.mxu0 %v1448
        %3382 = vmatprep.mubr.f32.mxu0 %v1956
        %3383 = vmatmul.mubr.f32.gmra.mrb[0].mxu0 %v1948
        %v3384 = vpop.f32.mrb[0].mxu0
        %v3385 = vadd.f32 %v3314, %v3384
        %v3386 = vpop.f32.mrb[0].mxu0
        %v3387 = vadd.f32 %v3316, %v3386
        %3388 = vdwg.mxu0
        %3389 = vmatprep.subr.mxu0 %v1451
        %3390 = vmatpush1.msra.mxu0 %v1450
        %3391 = vmatprep.subr.mxu0 %v1453
        %3392 = vmatpush1.msra.mxu0 %v1452
        %3393 = vmatprep.subr.mxu0 %v1455
        %3394 = vmatpush1.msra.mxu0 %v1454
        %3395 = vmatprep.subr.mxu0 %v1457
        %3396 = vmatpush1.msra.mxu0 %v1456
        %3397 = vmatprep.subr.mxu0 %v1459
        %3398 = vmatpush1.msra.mxu0 %v1458
        %3399 = vmatprep.subr.mxu0 %v1461
        %3400 = vmatpush1.msra.mxu0 %v1460
        %3401 = vmatprep.subr.mxu0 %v1463
        %3402 = vmatpush1.msra.mxu0 %v1462
        %3403 = vmatprep.subr.mxu0 %v1465
        %3404 = vmatpush1.msra.mxu0 %v1464
        %3405 = vmatprep.subr.mxu0 %v1467
        %3406 = vmatpush1.msra.mxu0 %v1466
        %3407 = vmatprep.subr.mxu0 %v1469
        %3408 = vmatpush1.msra.mxu0 %v1468
        %3409 = vmatprep.subr.mxu0 %v1471
        %3410 = vmatpush1.msra.mxu0 %v1470
        %3411 = vmatprep.subr.mxu0 %v1473
        %3412 = vmatpush1.msra.mxu0 %v1472
        %3413 = vmatprep.subr.mxu0 %v1475
        %3414 = vmatpush1.msra.mxu0 %v1474
        %3415 = vmatprep.subr.mxu0 %v1477
        %3416 = vmatpush1.msra.mxu0 %v1476
        %3417 = vmatprep.subr.mxu0 %v1479
        %3418 = vmatpush1.msra.mxu0 %v1478
        %3419 = vmatprep.subr.mxu0 %v1481
        %3420 = vmatpush1.msra.mxu0 %v1480
        %3421 = vmatprep.subr.mxu0 %v1483
        %3422 = vmatpush1.msra.mxu0 %v1482
        %3423 = vmatprep.subr.mxu0 %v1485
        %3424 = vmatpush1.msra.mxu0 %v1484
        %3425 = vmatprep.subr.mxu0 %v1487
        %3426 = vmatpush1.msra.mxu0 %v1486
        %3427 = vmatprep.subr.mxu0 %v1489
        %3428 = vmatpush1.msra.mxu0 %v1488
        %3429 = vmatprep.subr.mxu0 %v1491
        %3430 = vmatpush1.msra.mxu0 %v1490
        %3431 = vmatprep.subr.mxu0 %v1493
        %3432 = vmatpush1.msra.mxu0 %v1492
        %3433 = vmatprep.subr.mxu0 %v1495
        %3434 = vmatpush1.msra.mxu0 %v1494
        %3435 = vmatprep.subr.mxu0 %v1497
        %3436 = vmatpush1.msra.mxu0 %v1496
        %3437 = vmatprep.subr.mxu0 %v1499
        %3438 = vmatpush1.msra.mxu0 %v1498
        %3439 = vmatprep.subr.mxu0 %v1501
        %3440 = vmatpush1.msra.mxu0 %v1500
        %3441 = vmatprep.subr.mxu0 %v1503
        %3442 = vmatpush1.msra.mxu0 %v1502
        %3443 = vmatprep.subr.mxu0 %v1505
        %3444 = vmatpush1.msra.mxu0 %v1504
        %3445 = vmatprep.subr.mxu0 %v1507
        %3446 = vmatpush1.msra.mxu0 %v1506
        %3447 = vmatprep.subr.mxu0 %v1509
        %3448 = vmatpush1.msra.mxu0 %v1508
        %3449 = vmatprep.subr.mxu0 %v1511
        %3450 = vmatpush1.msra.mxu0 %v1510
        %3451 = vmatprep.subr.mxu0 %v1513
        %3452 = vmatpush1.msra.mxu0 %v1512
        %3453 = vmatprep.mubr.f32.mxu0 %v1957
        %3454 = vmatmul.mubr.f32.gmra.mrb[0].mxu0 %v1955
        %v3455 = vpop.f32.mrb[0].mxu0
        %v3456 = vadd.f32 %v3385, %v3455
        %v3457 = vpop.f32.mrb[0].mxu0
        %v3458 = vadd.f32 %v3387, %v3457
        %3459 = vdwg.mxu0
        %3460 = vmatprep.subr.mxu0 %v1515
        %3461 = vmatpush1.msra.mxu0 %v1514
        %3462 = vmatprep.subr.mxu0 %v1517
        %3463 = vmatpush1.msra.mxu0 %v1516
        %3464 = vmatprep.subr.mxu0 %v1519
        %3465 = vmatpush1.msra.mxu0 %v1518
        %3466 = vmatprep.subr.mxu0 %v1521
        %3467 = vmatpush1.msra.mxu0 %v1520
        %3468 = vmatprep.subr.mxu0 %v1523
        %3469 = vmatpush1.msra.mxu0 %v1522
        %3470 = vmatprep.subr.mxu0 %v1525
        %3471 = vmatpush1.msra.mxu0 %v1524
        %3472 = vmatprep.subr.mxu0 %v1527
        %3473 = vmatpush1.msra.mxu0 %v1526
        %3474 = vmatprep.subr.mxu0 %v1529
        %3475 = vmatpush1.msra.mxu0 %v1528
        %3476 = vmatprep.subr.mxu0 %v1531
        %3477 = vmatpush1.msra.mxu0 %v1530
        %3478 = vmatprep.subr.mxu0 %v1533
        %3479 = vmatpush1.msra.mxu0 %v1532
        %3480 = vmatprep.subr.mxu0 %v1535
        %3481 = vmatpush1.msra.mxu0 %v1534
        %3482 = vmatprep.subr.mxu0 %v1537
        %3483 = vmatpush1.msra.mxu0 %v1536
        %3484 = vmatprep.subr.mxu0 %v1539
        %3485 = vmatpush1.msra.mxu0 %v1538
        %3486 = vmatprep.subr.mxu0 %v1541
        %3487 = vmatpush1.msra.mxu0 %v1540
        %3488 = vmatprep.subr.mxu0 %v1543
        %3489 = vmatpush1.msra.mxu0 %v1542
        %3490 = vmatprep.subr.mxu0 %v1545
        %3491 = vmatpush1.msra.mxu0 %v1544
        %3492 = vmatprep.subr.mxu0 %v1547
        %3493 = vmatpush1.msra.mxu0 %v1546
        %3494 = vmatprep.subr.mxu0 %v1549
        %3495 = vmatpush1.msra.mxu0 %v1548
        %3496 = vmatprep.subr.mxu0 %v1551
        %3497 = vmatpush1.msra.mxu0 %v1550
        %3498 = vmatprep.subr.mxu0 %v1553
        %3499 = vmatpush1.msra.mxu0 %v1552
        %3500 = vmatprep.subr.mxu0 %v1555
        %3501 = vmatpush1.msra.mxu0 %v1554
        %3502 = vmatprep.subr.mxu0 %v1557
        %3503 = vmatpush1.msra.mxu0 %v1556
        %3504 = vmatprep.subr.mxu0 %v1559
        %3505 = vmatpush1.msra.mxu0 %v1558
        %3506 = vmatprep.subr.mxu0 %v1561
        %3507 = vmatpush1.msra.mxu0 %v1560
        %3508 = vmatprep.subr.mxu0 %v1563
        %3509 = vmatpush1.msra.mxu0 %v1562
        %3510 = vmatprep.subr.mxu0 %v1565
        %3511 = vmatpush1.msra.mxu0 %v1564
        %3512 = vmatprep.subr.mxu0 %v1567
        %3513 = vmatpush1.msra.mxu0 %v1566
        %3514 = vmatprep.subr.mxu0 %v1569
        %3515 = vmatpush1.msra.mxu0 %v1568
        %3516 = vmatprep.subr.mxu0 %v1571
        %3517 = vmatpush1.msra.mxu0 %v1570
        %3518 = vmatprep.subr.mxu0 %v1573
        %3519 = vmatpush1.msra.mxu0 %v1572
        %3520 = vmatprep.subr.mxu0 %v1575
        %3521 = vmatpush1.msra.mxu0 %v1574
        %3522 = vmatprep.subr.mxu0 %v1577
        %3523 = vmatpush1.msra.mxu0 %v1576
        %3524 = vmatprep.mubr.f32.mxu0 %v1973
        %3525 = vmatmul.mubr.f32.gmra.mrb[0].mxu0 %v1965
        %v3526 = vpop.f32.mrb[0].mxu0
        %v3527 = vadd.f32 %v3456, %v3526
        %v3528 = vpop.f32.mrb[0].mxu0
        %v3529 = vadd.f32 %v3458, %v3528
        %3530 = vdwg.mxu0
        %3531 = vmatprep.subr.mxu0 %v1579
        %3532 = vmatpush1.msra.mxu0 %v1578
        %3533 = vmatprep.subr.mxu0 %v1581
        %3534 = vmatpush1.msra.mxu0 %v1580
        %3535 = vmatprep.subr.mxu0 %v1583
        %3536 = vmatpush1.msra.mxu0 %v1582
        %3537 = vmatprep.subr.mxu0 %v1585
        %3538 = vmatpush1.msra.mxu0 %v1584
        %3539 = vmatprep.subr.mxu0 %v1587
        %3540 = vmatpush1.msra.mxu0 %v1586
        %3541 = vmatprep.subr.mxu0 %v1589
        %3542 = vmatpush1.msra.mxu0 %v1588
        %3543 = vmatprep.subr.mxu0 %v1591
        %3544 = vmatpush1.msra.mxu0 %v1590
        %3545 = vmatprep.subr.mxu0 %v1593
        %3546 = vmatpush1.msra.mxu0 %v1592
        %3547 = vmatprep.subr.mxu0 %v1595
        %3548 = vmatpush1.msra.mxu0 %v1594
        %3549 = vmatprep.subr.mxu0 %v1597
        %3550 = vmatpush1.msra.mxu0 %v1596
        %3551 = vmatprep.subr.mxu0 %v1599
        %3552 = vmatpush1.msra.mxu0 %v1598
        %3553 = vmatprep.subr.mxu0 %v1601
        %3554 = vmatpush1.msra.mxu0 %v1600
        %3555 = vmatprep.subr.mxu0 %v1603
        %3556 = vmatpush1.msra.mxu0 %v1602
        %3557 = vmatprep.subr.mxu0 %v1605
        %3558 = vmatpush1.msra.mxu0 %v1604
        %3559 = vmatprep.subr.mxu0 %v1607
        %3560 = vmatpush1.msra.mxu0 %v1606
        %3561 = vmatprep.subr.mxu0 %v1609
        %3562 = vmatpush1.msra.mxu0 %v1608
        %3563 = vmatprep.subr.mxu0 %v1611
        %3564 = vmatpush1.msra.mxu0 %v1610
        %3565 = vmatprep.subr.mxu0 %v1613
        %3566 = vmatpush1.msra.mxu0 %v1612
        %3567 = vmatprep.subr.mxu0 %v1615
        %3568 = vmatpush1.msra.mxu0 %v1614
        %3569 = vmatprep.subr.mxu0 %v1617
        %3570 = vmatpush1.msra.mxu0 %v1616
        %3571 = vmatprep.subr.mxu0 %v1619
        %3572 = vmatpush1.msra.mxu0 %v1618
        %3573 = vmatprep.subr.mxu0 %v1621
        %3574 = vmatpush1.msra.mxu0 %v1620
        %3575 = vmatprep.subr.mxu0 %v1623
        %3576 = vmatpush1.msra.mxu0 %v1622
        %3577 = vmatprep.subr.mxu0 %v1625
        %3578 = vmatpush1.msra.mxu0 %v1624
        %3579 = vmatprep.subr.mxu0 %v1627
        %3580 = vmatpush1.msra.mxu0 %v1626
        %3581 = vmatprep.subr.mxu0 %v1629
        %3582 = vmatpush1.msra.mxu0 %v1628
        %3583 = vmatprep.subr.mxu0 %v1631
        %3584 = vmatpush1.msra.mxu0 %v1630
        %3585 = vmatprep.subr.mxu0 %v1633
        %3586 = vmatpush1.msra.mxu0 %v1632
        %3587 = vmatprep.subr.mxu0 %v1635
        %3588 = vmatpush1.msra.mxu0 %v1634
        %3589 = vmatprep.subr.mxu0 %v1637
        %3590 = vmatpush1.msra.mxu0 %v1636
        %3591 = vmatprep.subr.mxu0 %v1639
        %3592 = vmatpush1.msra.mxu0 %v1638
        %3593 = vmatprep.subr.mxu0 %v1641
        %3594 = vmatpush1.msra.mxu0 %v1640
        %3595 = vmatprep.mubr.f32.mxu0 %v1974
        %3596 = vmatmul.mubr.f32.gmra.mrb[0].mxu0 %v1972
        %v3597 = vpop.f32.mrb[0].mxu0
        %v3598 = vadd.f32 %v3527, %v3597
        %v3599 = vpop.f32.mrb[0].mxu0
        %v3600 = vadd.f32 %v3529, %v3599
        %3601 = vdwg.mxu0
        %3602 = vmatprep.subr.mxu0 %v1643
        %3603 = vmatpush1.msra.mxu0 %v1642
        %3604 = vmatprep.subr.mxu0 %v1645
        %3605 = vmatpush1.msra.mxu0 %v1644
        %3606 = vmatprep.subr.mxu0 %v1647
        %3607 = vmatpush1.msra.mxu0 %v1646
        %3608 = vmatprep.subr.mxu0 %v1649
        %3609 = vmatpush1.msra.mxu0 %v1648
        %3610 = vmatprep.subr.mxu0 %v1651
        %3611 = vmatpush1.msra.mxu0 %v1650
        %3612 = vmatprep.subr.mxu0 %v1653
        %3613 = vmatpush1.msra.mxu0 %v1652
        %3614 = vmatprep.subr.mxu0 %v1655
        %3615 = vmatpush1.msra.mxu0 %v1654
        %3616 = vmatprep.subr.mxu0 %v1657
        %3617 = vmatpush1.msra.mxu0 %v1656
        %3618 = vmatprep.subr.mxu0 %v1659
        %3619 = vmatpush1.msra.mxu0 %v1658
        %3620 = vmatprep.subr.mxu0 %v1661
        %3621 = vmatpush1.msra.mxu0 %v1660
        %3622 = vmatprep.subr.mxu0 %v1663
        %3623 = vmatpush1.msra.mxu0 %v1662
        %3624 = vmatprep.subr.mxu0 %v1665
        %3625 = vmatpush1.msra.mxu0 %v1664
        %3626 = vmatprep.subr.mxu0 %v1667
        %3627 = vmatpush1.msra.mxu0 %v1666
        %3628 = vmatprep.subr.mxu0 %v1669
        %3629 = vmatpush1.msra.mxu0 %v1668
        %3630 = vmatprep.subr.mxu0 %v1671
        %3631 = vmatpush1.msra.mxu0 %v1670
        %3632 = vmatprep.subr.mxu0 %v1673
        %3633 = vmatpush1.msra.mxu0 %v1672
        %3634 = vmatprep.subr.mxu0 %v1675
        %3635 = vmatpush1.msra.mxu0 %v1674
        %3636 = vmatprep.subr.mxu0 %v1677
        %3637 = vmatpush1.msra.mxu0 %v1676
        %3638 = vmatprep.subr.mxu0 %v1679
        %3639 = vmatpush1.msra.mxu0 %v1678
        %3640 = vmatprep.subr.mxu0 %v1681
        %3641 = vmatpush1.msra.mxu0 %v1680
        %3642 = vmatprep.subr.mxu0 %v1683
        %3643 = vmatpush1.msra.mxu0 %v1682
        %3644 = vmatprep.subr.mxu0 %v1685
        %3645 = vmatpush1.msra.mxu0 %v1684
        %3646 = vmatprep.subr.mxu0 %v1687
        %3647 = vmatpush1.msra.mxu0 %v1686
        %3648 = vmatprep.subr.mxu0 %v1689
        %3649 = vmatpush1.msra.mxu0 %v1688
        %3650 = vmatprep.subr.mxu0 %v1691
        %3651 = vmatpush1.msra.mxu0 %v1690
        %3652 = vmatprep.subr.mxu0 %v1693
        %3653 = vmatpush1.msra.mxu0 %v1692
        %3654 = vmatprep.subr.mxu0 %v1695
        %3655 = vmatpush1.msra.mxu0 %v1694
        %3656 = vmatprep.subr.mxu0 %v1697
        %3657 = vmatpush1.msra.mxu0 %v1696
        %3658 = vmatprep.subr.mxu0 %v1699
        %3659 = vmatpush1.msra.mxu0 %v1698
        %3660 = vmatprep.subr.mxu0 %v1701
        %3661 = vmatpush1.msra.mxu0 %v1700
        %3662 = vmatprep.subr.mxu0 %v1703
        %3663 = vmatpush1.msra.mxu0 %v1702
        %3664 = vmatprep.subr.mxu0 %v1705
        %3665 = vmatpush1.msra.mxu0 %v1704
        %3666 = vmatprep.mubr.f32.mxu0 %v1990
        %3667 = vmatmul.mubr.f32.gmra.mrb[0].mxu0 %v1982
        %v3668 = vpop.f32.mrb[0].mxu0
        %v3669 = vadd.f32 %v3598, %v3668
        %v3670 = vpop.f32.mrb[0].mxu0
        %v3671 = vadd.f32 %v3600, %v3670
        %3672 = vdwg.mxu0
        %3673 = vmatprep.subr.mxu0 %v1707
        %3674 = vmatpush1.msra.mxu0 %v1706
        %3675 = vmatprep.subr.mxu0 %v1709
        %3676 = vmatpush1.msra.mxu0 %v1708
        %3677 = vmatprep.subr.mxu0 %v1711
        %3678 = vmatpush1.msra.mxu0 %v1710
        %3679 = vmatprep.subr.mxu0 %v1713
        %3680 = vmatpush1.msra.mxu0 %v1712
        %3681 = vmatprep.subr.mxu0 %v1715
        %3682 = vmatpush1.msra.mxu0 %v1714
        %3683 = vmatprep.subr.mxu0 %v1717
        %3684 = vmatpush1.msra.mxu0 %v1716
        %3685 = vmatprep.subr.mxu0 %v1719
        %3686 = vmatpush1.msra.mxu0 %v1718
        %3687 = vmatprep.subr.mxu0 %v1721
        %3688 = vmatpush1.msra.mxu0 %v1720
        %3689 = vmatprep.subr.mxu0 %v1723
        %3690 = vmatpush1.msra.mxu0 %v1722
        %3691 = vmatprep.subr.mxu0 %v1725
        %3692 = vmatpush1.msra.mxu0 %v1724
        %3693 = vmatprep.subr.mxu0 %v1727
        %3694 = vmatpush1.msra.mxu0 %v1726
        %3695 = vmatprep.subr.mxu0 %v1729
        %3696 = vmatpush1.msra.mxu0 %v1728
        %3697 = vmatprep.subr.mxu0 %v1731
        %3698 = vmatpush1.msra.mxu0 %v1730
        %3699 = vmatprep.subr.mxu0 %v1733
        %3700 = vmatpush1.msra.mxu0 %v1732
        %3701 = vmatprep.subr.mxu0 %v1735
        %3702 = vmatpush1.msra.mxu0 %v1734
        %3703 = vmatprep.subr.mxu0 %v1737
        %3704 = vmatpush1.msra.mxu0 %v1736
        %3705 = vmatprep.subr.mxu0 %v1739
        %3706 = vmatpush1.msra.mxu0 %v1738
        %3707 = vmatprep.subr.mxu0 %v1741
        %3708 = vmatpush1.msra.mxu0 %v1740
        %3709 = vmatprep.subr.mxu0 %v1743
        %3710 = vmatpush1.msra.mxu0 %v1742
        %3711 = vmatprep.subr.mxu0 %v1745
        %3712 = vmatpush1.msra.mxu0 %v1744
        %3713 = vmatprep.subr.mxu0 %v1747
        %3714 = vmatpush1.msra.mxu0 %v1746
        %3715 = vmatprep.subr.mxu0 %v1749
        %3716 = vmatpush1.msra.mxu0 %v1748
        %3717 = vmatprep.subr.mxu0 %v1751
        %3718 = vmatpush1.msra.mxu0 %v1750
        %3719 = vmatprep.subr.mxu0 %v1753
        %3720 = vmatpush1.msra.mxu0 %v1752
        %3721 = vmatprep.subr.mxu0 %v1755
        %3722 = vmatpush1.msra.mxu0 %v1754
        %3723 = vmatprep.subr.mxu0 %v1757
        %3724 = vmatpush1.msra.mxu0 %v1756
        %3725 = vmatprep.subr.mxu0 %v1759
        %3726 = vmatpush1.msra.mxu0 %v1758
        %3727 = vmatprep.subr.mxu0 %v1761
        %3728 = vmatpush1.msra.mxu0 %v1760
        %3729 = vmatprep.subr.mxu0 %v1763
        %3730 = vmatpush1.msra.mxu0 %v1762
        %3731 = vmatprep.subr.mxu0 %v1765
        %3732 = vmatpush1.msra.mxu0 %v1764
        %3733 = vmatprep.subr.mxu0 %v1767
        %3734 = vmatpush1.msra.mxu0 %v1766
        %3735 = vmatprep.subr.mxu0 %v1769
        %3736 = vmatpush1.msra.mxu0 %v1768
        %3737 = vmatprep.mubr.f32.mxu0 %v1991
        %3738 = vmatmul.mubr.f32.gmra.mrb[0].mxu0 %v1989
        %v3739 = vpop.f32.mrb[0].mxu0
        %v3740 = vadd.f32 %v3669, %v3739
        %v3741 = vpop.f32.mrb[0].mxu0
        %v3742 = vadd.f32 %v3671, %v3741
        %3743 = vdwg.mxu0
        %v3746 = vcombine.low %v3740, %v3742
        %v3748 = vunpack.c.l.s4 1983009808
        %v3749 = vunpack.c.0.s8 %v3748
        %v3750 = vlaneseq
        %v3751 = vshrl.u32 %v3750, 7
        %v3752 = vsub.s32 %v3749, %v3751
        %v3753 = vrot.slane %v3746, %v3752
        %3755 = vst [vmem:[%s219] sm:$0xf] %v3753
        %s3756 = sand.u32 %s113, 1
        %s3757 = scalar_lea.sflag [#allocation4], %s3756
        %s3758 = sand.u32 %s113, 1
        %s3759 = smul.addr %s3758, 4
        %s3760 = scalar_lea.vmem [#allocation7], %s3759
        // Predicated region
        $region41: #{tpu_custom_call.1} parent=31 // pred_check
          %p3761 = pneg %p123
        $region42: #{tpu_custom_call.1} parent=31 // pred_check_branch
          %3763 = sbr.rel (%p3761) target = $region44
        $region43: #{tpu_custom_call.1} parent=31 // pred_region
          %s3764 = smul.u32 2, %s26
          %s3766 = ssub.s32 64, 64
          %3767 = vsyncadd %s3757, %s3766
          %s3768 = smul.addr %s25, 4
          %s3769 = sadd.s32 %s3764, %s3768
          %s3770 = smul.addr %s3769, 32
          %s3771 = scalar_lea.hbm %s3, %s3770
          %s3773 = sshll.u32 %s3760, 4
          %s3774 = int_to_ptr.vmem [resolvable:$true] %s3773
          %3776 = dma.vmem_to_hbm [thread:$0]  %s3774, 64, %s3771, %s3757
        $region44: #{tpu_custom_call.1} parent=31 // pred_fallthru
          _
      $region32: #{tpu_custom_call.1} parent=5 // pred_fallthru
        _
      %p3777 = scmp.le.s32.totalorder 2, %s16
      // Predicated region
      $region45: #{tpu_custom_call.1} parent=5 // pred_check
        %p3778 = pneg %p3777
      $region46: #{tpu_custom_call.1} parent=5 // pred_check_branch
        %3780 = sbr.rel (%p3778) target = $region48
      $region47: #{tpu_custom_call.1} parent=5 // pred_region
        %s3781 = ssub.s32 %s16, 2
        // Predicated region
        $region49: #{tpu_custom_call.1} parent=47 // pred_check
          %p3782 = pneg %p129
        $region50: #{tpu_custom_call.1} parent=47 // pred_check_branch
          %3784 = sbr.rel (%p3782) target = $region52
        $region51: #{tpu_custom_call.1} parent=47 // pred_region
          %s3785 = sand.u32 %s114, 1
          %s3786 = scalar_lea.sflag [#allocation4], %s3785
          %s3787 = sand.u32 %s114, 1
          %s3788 = smul.addr %s3787, 4
          %s3789 = scalar_lea.vmem [#allocation7], %s3788
          %3790 = dma.done %s3786, 64
        $region52: #{tpu_custom_call.1} parent=47 // pred_fallthru
          _
      $region48: #{tpu_custom_call.1} parent=5 // pred_fallthru
        _
    $region6: #{tpu_custom_call.1} parent=1 // loop_footer
      %s20 = sadd.s32 1, %s16
    $region7: #{tpu_custom_call.1} parent=1 // loop_footer_branch
      %15 = sbr.rel target = $region3
    $region8: #{tpu_custom_call.1} parent=1 // loop_exit
      _
    %3791 = vsyncpa [#allocation3], 1
    %s3792 = scalar_lea.sflag [#allocation3], 1
    %3793 = vsyncpa %s3792, 1
    %3794 = vsyncpa [#allocation6], 1
    %3795 = vsyncpa [#allocation4], 1
    %s3796 = scalar_lea.sflag [#allocation4], 1
    %3797 = vsyncpa %s3796, 1

</llo_original>
